<compile_context>
chip_gen: v7x
topology: tpu7x:2x2x1
jax: 0.10.0
libtpu: 0.0.40
codegen_flags: <defaults>
</compile_context>

<pallas_src>
import functools

import jax
import jax.numpy as jnp
from jax.experimental import pallas as pl
from jax.experimental.pallas import tpu as pltpu

KSIZE = 7
PAD = KSIZE // 2
NBINS = 3


def _sigmoid_kernel(v):
    # 1/(1+exp(-v)): exp on the EUP, divide as approximate reciprocal (EUP).
    return pl.reciprocal(1.0 + jnp.exp(-v), approx=True)


def _sigmoid_exact(v):
    return 1.0 / (1.0 + jnp.exp(-v))


# ----------------------------------------------------------------------------
# Glue: F.interpolate(..., mode='bilinear', align_corners=True) equivalent.
# TODO(synk): bilinear align_corners resize stays as plain-JAX glue (gather
# based resize has no clean single-kernel Pallas form).
# ----------------------------------------------------------------------------
def bilinear_resize_align_corners(img, out_h, out_w):
    _, _, h, w = img.shape
    img = img.astype(jnp.float32)
    if out_h > 1 and h > 1:
        ys = jnp.arange(out_h, dtype=jnp.float32) * ((h - 1) / (out_h - 1))
    else:
        ys = jnp.zeros((out_h,), jnp.float32)
    if out_w > 1 and w > 1:
        xs = jnp.arange(out_w, dtype=jnp.float32) * ((w - 1) / (out_w - 1))
    else:
        xs = jnp.zeros((out_w,), jnp.float32)
    y0 = jnp.floor(ys).astype(jnp.int32)
    x0 = jnp.floor(xs).astype(jnp.int32)
    y1 = jnp.minimum(y0 + 1, h - 1)
    x1 = jnp.minimum(x0 + 1, w - 1)
    wy = (ys - y0.astype(jnp.float32))[None, None, :, None]
    wx = (xs - x0.astype(jnp.float32))[None, None, None, :]
    r0 = img[:, :, y0, :]
    r1 = img[:, :, y1, :]
    v00 = r0[:, :, :, x0]
    v01 = r0[:, :, :, x1]
    v10 = r1[:, :, :, x0]
    v11 = r1[:, :, :, x1]
    top = v00 * (1.0 - wx) + v01 * wx
    bot = v10 * (1.0 - wx) + v11 * wx
    return top * (1.0 - wy) + bot * wy


# ----------------------------------------------------------------------------
# Pallas kernel: full SEB forward for one batch element, flat (C, H*W) layout.
# ----------------------------------------------------------------------------
def seb_kernel(W, x_ref, mask_ref, wsa_ref, colmask_ref, w1_ref, w2_ref,
               o_ref, pad_ref):
    C, HW = x_ref.shape
    MARGIN = PAD * (W + 1)                       # max |dh*W + dw|

    # Zero the flat conv scratch once per grid step.  Only the margins need to
    # stay zero; the interior [MARGIN, MARGIN+HW) is fully rewritten every bin.
    pad_ref[...] = jnp.zeros_like(pad_ref)

    x = x_ref[...].astype(jnp.float32)           # (C, HW), compute in f32
    o_ref[...] = x_ref[...]                      # residual "+ x"; accumulate in place

    for i in range(NBINS):
        m = mask_ref[i:i + 1, :].astype(jnp.float32)          # (1, HW) 0/1

        # ---- SpatialAttention: channel max -> 7x7 'same' conv -> sigmoid ----
        sm = jnp.max(x * m, axis=0, keepdims=True)            # (1, HW)
        pad_ref[:, MARGIN:MARGIN + HW] = sm

        conv = jnp.zeros((1, HW), jnp.float32)
        for kj in range(KSIZE):
            dw = kj - PAD
            col_acc = jnp.zeros((1, HW), jnp.float32)
            for ki in range(KSIZE):
                dh = ki - PAD
                start = MARGIN + dh * W + dw                  # static offset
                wv = wsa_ref[i * KSIZE * KSIZE + ki * KSIZE + kj]   # SMEM scalar
                col_acc = col_acc + wv * pad_ref[:, start:start + HW]
            # column-validity mask depends only on kj -> applied once per kj
            conv = conv + col_acc * colmask_ref[kj:kj + 1, :]
        sa = _sigmoid_kernel(conv)                            # (1, HW)

        y = x * (m * sa)                                      # (C, HW)

        # ---- ChannelAttention: global max pool -> fc1 -> relu -> fc2 -> sigmoid
        p = jnp.max(y, axis=1, keepdims=True)                 # (C, 1)
        h0 = jnp.maximum(
            jnp.sum(w1_ref[2 * i + 0] * p, axis=(0, 1), keepdims=True), 0.0)  # (1,1)
        h1 = jnp.maximum(
            jnp.sum(w1_ref[2 * i + 1] * p, axis=(0, 1), keepdims=True), 0.0)  # (1,1)
        logit = w2_ref[2 * i + 0] * h0 + w2_ref[2 * i + 1] * h1               # (C,1)
        ca = _sigmoid_kernel(logit)                            # (C, 1)

        # accumulate directly into the resident output block (f32 math)
        o_ref[...] = (o_ref[...].astype(jnp.float32) + y * ca).astype(o_ref.dtype)


# ----------------------------------------------------------------------------
# Wrapper
# ----------------------------------------------------------------------------
def seb_pallas(x, bins, wsa, fc1_w, fc2_w):
    """x: (B,C,H,W) f32/bf16; bins: (B,3,h,w); wsa: (3,7,7); fc1_w: (3,2,C); fc2_w: (3,C,2)."""
    B, C, H, W = x.shape
    HW = H * W
    MARGIN = PAD * (W + 1)

    # glue: bilinear(align_corners=True) + .bool() mask, same dtype as x
    binsr = bilinear_resize_align_corners(bins, H, W)
    mask = (binsr != 0).astype(x.dtype)                       # (B, 3, H, W)

    # lane-dense views (free reshapes in HBM)
    xf = x.reshape(B, C, HW)
    maskf = mask.reshape(B, NBINS, HW)

    # parameter packing
    wsa_flat = wsa.reshape(NBINS * KSIZE * KSIZE).astype(jnp.float32)          # (147,) SMEM
    w1k = fc1_w.reshape(NBINS * 2, C)[:, :, None].astype(jnp.float32)          # (6, C, 1)
    w2k = jnp.transpose(fc2_w, (0, 2, 1)).reshape(NBINS * 2, C)[
        :, :, None].astype(jnp.float32)                                        # (6, C, 1)

    # column-validity masks for the flat 7x7 conv (hoisted out of the kernel)
    wpos = jnp.arange(HW, dtype=jnp.int32) % W
    colmask = jnp.stack(
        [((wpos + (kj - PAD) >= 0) & (wpos + (kj - PAD) < W)) for kj in range(KSIZE)]
    ).astype(jnp.float32)                                                      # (7, HW)

    # explicit VMEM budget from the real buffer sizes (+ f32 temporaries)
    itemsize = jnp.dtype(x.dtype).itemsize
    est = (2 * 2 * C * HW * itemsize                # double-buffered x + out blocks
           + 2 * NBINS * HW * itemsize              # mask block
           + (HW + 2 * MARGIN) * 4                  # conv scratch
           + 2 * (KSIZE * HW + 2 * NBINS * 2 * C) * 4   # colmask + fc weights
           + 4 * C * HW * 4)                        # in-kernel f32 temporaries
    vmem_limit = int(min(max(int(est * 1.25), 32 * 1024 * 1024), 64 * 1024 * 1024))

    out = pl.pallas_call(
        functools.partial(seb_kernel, W),
        out_shape=jax.ShapeDtypeStruct((B, C, HW), x.dtype),
        grid=(B,),
        in_specs=[
            pl.BlockSpec((None, C, HW), lambda b: (b, 0, 0)),              # x (flat)
            pl.BlockSpec((None, NBINS, HW), lambda b: (b, 0, 0)),          # masks (flat)
            pl.BlockSpec(memory_space=pltpu.MemorySpace.SMEM),             # 7x7 weights
            pl.BlockSpec((KSIZE, HW), lambda b: (0, 0)),                   # column masks
            pl.BlockSpec((NBINS * 2, C, 1), lambda b: (0, 0, 0)),          # fc1 weights
            pl.BlockSpec((NBINS * 2, C, 1), lambda b: (0, 0, 0)),          # fc2 weights
        ],
        out_specs=pl.BlockSpec((None, C, HW), lambda b: (b, 0, 0)),
        scratch_shapes=[pltpu.VMEM((1, HW + 2 * MARGIN), jnp.float32)],
        compiler_params=pltpu.CompilerParams(
            dimension_semantics=("parallel",),
            vmem_limit_bytes=vmem_limit),
    )(xf, maskf, wsa_flat, colmask, w1k, w2k)

    return out.reshape(B, C, H, W)


# ----------------------------------------------------------------------------
# Pure-JAX reference (mirrors the PyTorch forward exactly) for validation.
# ----------------------------------------------------------------------------
def seb_reference(x, bins, wsa, fc1_w, fc2_w):
    B, C, H, W = x.shape
    x = x.astype(jnp.float32)
    binsr = bilinear_resize_align_corners(bins, H, W)
    mask = (binsr != 0).astype(jnp.float32)
    out = x
    for i in range(NBINS):
        xi = x * mask[:, i:i + 1]
        sm = jnp.max(xi, axis=1, keepdims=True)                    # (B,1,H,W)
        smp = jnp.pad(sm, ((0, 0), (0, 0), (PAD, PAD), (PAD, PAD)))
        conv = jnp.zeros_like(sm)
        for ki in range(KSIZE):
            for kj in range(KSIZE):
                conv = conv + wsa[i, ki, kj] * smp[:, :, ki:ki + H, kj:kj + W]
        sa = _sigmoid_exact(conv)
        y = xi * sa
        pool = jnp.max(y, axis=(2, 3))                             # (B,C)
        h = jnp.maximum(jnp.sum(pool[:, None, :] * fc1_w[i][None], axis=2), 0.0)  # (B,2)
        ca = _sigmoid_exact(jnp.sum(h[:, None, :] * fc2_w[i][None], axis=2))      # (B,C)
        out = out + y * ca[:, :, None, None]
    return out


if __name__ == "__main__":
    B, C, H, W = 2, 32, 16, 16          # small stand-in for dim=256
    key = jax.random.PRNGKey(0)
    kx, kb, kw0, kw1, kw2 = jax.random.split(key, 5)

    x = jax.random.normal(kx, (B, C, H, W), dtype=jnp.float32)
    bins = (jax.random.uniform(kb, (B, NBINS, 4, 4)) > 0.5).astype(jnp.float32)

    # deterministic synthetic parameters (one set per CBAM branch)
    wsa = jax.random.normal(kw0, (NBINS, KSIZE, KSIZE), dtype=jnp.float32) * 0.05  # conv1 (1,1,7,7)
    fc1_w = jax.random.normal(kw1, (NBINS, 2, C), dtype=jnp.float32) * 0.2         # fc1 (2,C,1,1)
    fc2_w = jax.random.normal(kw2, (NBINS, C, 2), dtype=jnp.float32) * 0.2         # fc2 (C,2,1,1)

    ref = jax.block_until_ready(seb_reference(x, bins, wsa, fc1_w, fc2_w))

    # f32 path (tolerance covers the approximate-reciprocal sigmoid)
    out = jax.block_until_ready(seb_pallas(x, bins, wsa, fc1_w, fc2_w))
    assert out.shape == (B, C, H, W)
    err = float(jnp.max(jnp.abs(out - ref)))
    assert err < 2e-2, f"f32 max abs err {err}"

    # bf16 I/O path (internal compute stays f32) — halves HBM traffic.
    out_bf = jax.block_until_ready(
        seb_pallas(x.astype(jnp.bfloat16), bins, wsa, fc1_w, fc2_w))
    assert out_bf.shape == (B, C, H, W) and out_bf.dtype == jnp.bfloat16
    out_bf32 = out_bf.astype(jnp.float32)
    err_bf = float(jnp.max(jnp.abs(out_bf32 - ref)))
    assert bool(jnp.all(jnp.isfinite(out_bf32))) and err_bf < 1.0, f"bf16 err {err_bf}"

    print("KERNEL_OK")
</pallas_src>

<mosaic_0001>
module attributes {stable_mosaic.version = 11 : i64} {
  func.func @seb_kernel(%arg0: i32, %arg1: memref<1x32x256xf32, #tpu.memory_space<vmem>>, %arg2: memref<1x3x256xf32, #tpu.memory_space<vmem>>, %arg3: memref<147xf32, #tpu.memory_space<smem>>, %arg4: memref<7x256xf32, #tpu.memory_space<vmem>>, %arg5: memref<6x32x1xf32, #tpu.memory_space<vmem>>, %arg6: memref<6x32x1xf32, #tpu.memory_space<vmem>>, %arg7: memref<1x32x256xf32, #tpu.memory_space<vmem>>, %arg8: memref<1x358xf32, #tpu.memory_space<vmem>>) attributes {dimension_semantics = [#tpu.dimension_semantics<parallel>], iteration_bounds = array<i64: 2>, scalar_prefetch = 0 : i64, scratch_operands = 1 : i64, tpu.core_type = #tpu.core_type<tc>, window_params = [{transform_indices = @transform_0, window_bounds = array<i64: 1, 32, 256>}, {transform_indices = @transform_1, window_bounds = array<i64: 1, 3, 256>}, {transform_indices = @transform_2, window_bounds = array<i64: 147>}, {pipeline_mode = #tpu.pipeline_mode<synchronous>, transform_indices = @transform_3, window_bounds = array<i64: 7, 256>}, {pipeline_mode = #tpu.pipeline_mode<synchronous>, transform_indices = @transform_4, window_bounds = array<i64: 6, 32, 1>}, {pipeline_mode = #tpu.pipeline_mode<synchronous>, transform_indices = @transform_5, window_bounds = array<i64: 6, 32, 1>}, {transform_indices = @transform_6, window_bounds = array<i64: 1, 32, 256>}]} {
    %cst = arith.constant 0.000000e+00 : f32
    %0 = vector.broadcast %cst : f32 to vector<1x358xf32>
    %c0 = arith.constant 0 : index
    %c0_0 = arith.constant 0 : index
    %1 = vector.load %arg8[%c0, %c0_0] : memref<1x358xf32, #tpu.memory_space<vmem>>, vector<1x358xf32>
    tpu.vector_store %arg8[%c0, %c0_0], %0 {strides = array<i32>} : memref<1x358xf32, #tpu.memory_space<vmem>>, vector<1x358xf32>,
    %c0_1 = arith.constant 0 : index
    %c0_2 = arith.constant 0 : index
    %c0_3 = arith.constant 0 : index
    %2 = vector.load %arg1[%c0_1, %c0_2, %c0_3] : memref<1x32x256xf32, #tpu.memory_space<vmem>>, vector<1x32x256xf32>
    %3 = vector.shape_cast %2 : vector<1x32x256xf32> to vector<32x256xf32>
    %c0_4 = arith.constant 0 : index
    %c0_5 = arith.constant 0 : index
    %c0_6 = arith.constant 0 : index
    %4 = vector.load %arg1[%c0_4, %c0_5, %c0_6] : memref<1x32x256xf32, #tpu.memory_space<vmem>>, vector<1x32x256xf32>
    %5 = vector.shape_cast %4 : vector<1x32x256xf32> to vector<32x256xf32>
    %c0_7 = arith.constant 0 : index
    %c0_8 = arith.constant 0 : index
    %c0_9 = arith.constant 0 : index
    %6 = vector.load %arg7[%c0_7, %c0_8, %c0_9] : memref<1x32x256xf32, #tpu.memory_space<vmem>>, vector<1x32x256xf32>
    %7 = vector.shape_cast %6 : vector<1x32x256xf32> to vector<32x256xf32>
    %8 = vector.shape_cast %5 : vector<32x256xf32> to vector<1x32x256xf32>
    tpu.vector_store %arg7[%c0_7, %c0_8, %c0_9], %8 {strides = array<i32>} : memref<1x32x256xf32, #tpu.memory_space<vmem>>, vector<1x32x256xf32>,
    %c0_10 = arith.constant 0 : index
    %c0_11 = arith.constant 0 : index
    %c0_12 = arith.constant 0 : index
    %9 = vector.load %arg2[%c0_10, %c0_11, %c0_12] : memref<1x3x256xf32, #tpu.memory_space<vmem>>, vector<1x1x256xf32>
    %10 = vector.shape_cast %9 : vector<1x1x256xf32> to vector<1x256xf32>
    %11 = vector.broadcast %10 : vector<1x256xf32> to vector<32x256xf32>
    %12 = arith.mulf %3, %11 : vector<32x256xf32>
    %cst_13 = arith.constant dense<0xFF800000> : vector<256xf32>
    %13 = vector.multi_reduction <maximumf>, %12, %cst_13 [0] : vector<32x256xf32> to vector<256xf32>
    %14 = vector.shape_cast %13 : vector<256xf32> to vector<1x256xf32>
    %c0_14 = arith.constant 0 : index
    %c51 = arith.constant 51 : index
    %15 = vector.load %arg8[%c0_14, %c51] : memref<1x358xf32, #tpu.memory_space<vmem>>, vector<1x256xf32>
    tpu.vector_store %arg8[%c0_14, %c51], %14 {strides = array<i32>} : memref<1x358xf32, #tpu.memory_space<vmem>>, vector<1x256xf32>,
    %cst_15 = arith.constant 0.000000e+00 : f32
    %16 = vector.broadcast %cst_15 : f32 to vector<1x256xf32>
    %cst_16 = arith.constant 0.000000e+00 : f32
    %17 = vector.broadcast %cst_16 : f32 to vector<1x256xf32>
    %c0_17 = arith.constant 0 : index
    %18 = memref.load %arg3[%c0_17] : memref<147xf32, #tpu.memory_space<smem>>
    %c0_18 = arith.constant 0 : index
    %c0_19 = arith.constant 0 : index
    %19 = vector.load %arg8[%c0_18, %c0_19] : memref<1x358xf32, #tpu.memory_space<vmem>>, vector<1x256xf32>
    %20 = vector.broadcast %18 : f32 to vector<1x256xf32>
    %21 = arith.mulf %20, %19 : vector<1x256xf32>
    %22 = arith.addf %17, %21 : vector<1x256xf32>
    %c7 = arith.constant 7 : index
    %23 = memref.load %arg3[%c7] : memref<147xf32, #tpu.memory_space<smem>>
    %c0_20 = arith.constant 0 : index
    %c16 = arith.constant 16 : index
    %24 = vector.load %arg8[%c0_20, %c16] : memref<1x358xf32, #tpu.memory_space<vmem>>, vector<1x256xf32>
    %25 = vector.broadcast %23 : f32 to vector<1x256xf32>
    %26 = arith.mulf %25, %24 : vector<1x256xf32>
    %27 = arith.addf %22, %26 : vector<1x256xf32>
    %c14 = arith.constant 14 : index
    %28 = memref.load %arg3[%c14] : memref<147xf32, #tpu.memory_space<smem>>
    %c0_21 = arith.constant 0 : index
    %c32 = arith.constant 32 : index
    %29 = vector.load %arg8[%c0_21, %c32] : memref<1x358xf32, #tpu.memory_space<vmem>>, vector<1x256xf32>
    %30 = vector.broadcast %28 : f32 to vector<1x256xf32>
    %31 = arith.mulf %30, %29 : vector<1x256xf32>
    %32 = arith.addf %27, %31 : vector<1x256xf32>
    %c21 = arith.constant 21 : index
    %33 = memref.load %arg3[%c21] : memref<147xf32, #tpu.memory_space<smem>>
    %c0_22 = arith.constant 0 : index
    %c48 = arith.constant 48 : index
    %34 = vector.load %arg8[%c0_22, %c48] : memref<1x358xf32, #tpu.memory_space<vmem>>, vector<1x256xf32>
    %35 = vector.broadcast %33 : f32 to vector<1x256xf32>
    %36 = arith.mulf %35, %34 : vector<1x256xf32>
    %37 = arith.addf %32, %36 : vector<1x256xf32>
    %c28 = arith.constant 28 : index
    %38 = memref.load %arg3[%c28] : memref<147xf32, #tpu.memory_space<smem>>
    %c0_23 = arith.constant 0 : index
    %c64 = arith.constant 64 : index
    %39 = vector.load %arg8[%c0_23, %c64] : memref<1x358xf32, #tpu.memory_space<vmem>>, vector<1x256xf32>
    %40 = vector.broadcast %38 : f32 to vector<1x256xf32>
    %41 = arith.mulf %40, %39 : vector<1x256xf32>
    %42 = arith.addf %37, %41 : vector<1x256xf32>
    %c35 = arith.constant 35 : index
    %43 = memref.load %arg3[%c35] : memref<147xf32, #tpu.memory_space<smem>>
    %c0_24 = arith.constant 0 : index
    %c80 = arith.constant 80 : index
    %44 = vector.load %arg8[%c0_24, %c80] : memref<1x358xf32, #tpu.memory_space<vmem>>, vector<1x256xf32>
    %45 = vector.broadcast %43 : f32 to vector<1x256xf32>
    %46 = arith.mulf %45, %44 : vector<1x256xf32>
    %47 = arith.addf %42, %46 : vector<1x256xf32>
    %c42 = arith.constant 42 : index
    %48 = memref.load %arg3[%c42] : memref<147xf32, #tpu.memory_space<smem>>
    %c0_25 = arith.constant 0 : index
    %c96 = arith.constant 96 : index
    %49 = vector.load %arg8[%c0_25, %c96] : memref<1x358xf32, #tpu.memory_space<vmem>>, vector<1x256xf32>
    %50 = vector.broadcast %48 : f32 to vector<1x256xf32>
    %51 = arith.mulf %50, %49 : vector<1x256xf32>
    %52 = arith.addf %47, %51 : vector<1x256xf32>
    %c0_26 = arith.constant 0 : index
    %c0_27 = arith.constant 0 : index
    %53 = vector.load %arg4[%c0_26, %c0_27] : memref<7x256xf32, #tpu.memory_space<vmem>>, vector<1x256xf32>
    %54 = arith.mulf %52, %53 : vector<1x256xf32>
    %55 = arith.addf %16, %54 : vector<1x256xf32>
    %cst_28 = arith.constant 0.000000e+00 : f32
    %56 = vector.broadcast %cst_28 : f32 to vector<1x256xf32>
    %c1 = arith.constant 1 : index
    %57 = memref.load %arg3[%c1] : memref<147xf32, #tpu.memory_space<smem>>
    %c0_29 = arith.constant 0 : index
    %c1_30 = arith.constant 1 : index
    %58 = vector.load %arg8[%c0_29, %c1_30] : memref<1x358xf32, #tpu.memory_space<vmem>>, vector<1x256xf32>
    %59 = vector.broadcast %57 : f32 to vector<1x256xf32>
    %60 = arith.mulf %59, %58 : vector<1x256xf32>
    %61 = arith.addf %56, %60 : vector<1x256xf32>
    %c8 = arith.constant 8 : index
    %62 = memref.load %arg3[%c8] : memref<147xf32, #tpu.memory_space<smem>>
    %c0_31 = arith.constant 0 : index
    %c17 = arith.constant 17 : index
    %63 = vector.load %arg8[%c0_31, %c17] : memref<1x358xf32, #tpu.memory_space<vmem>>, vector<1x256xf32>
    %64 = vector.broadcast %62 : f32 to vector<1x256xf32>
    %65 = arith.mulf %64, %63 : vector<1x256xf32>
    %66 = arith.addf %61, %65 : vector<1x256xf32>
    %c15 = arith.constant 15 : index
    %67 = memref.load %arg3[%c15] : memref<147xf32, #tpu.memory_space<smem>>
    %c0_32 = arith.constant 0 : index
    %c33 = arith.constant 33 : index
    %68 = vector.load %arg8[%c0_32, %c33] : memref<1x358xf32, #tpu.memory_space<vmem>>, vector<1x256xf32>
    %69 = vector.broadcast %67 : f32 to vector<1x256xf32>
    %70 = arith.mulf %69, %68 : vector<1x256xf32>
    %71 = arith.addf %66, %70 : vector<1x256xf32>
    %c22 = arith.constant 22 : index
    %72 = memref.load %arg3[%c22] : memref<147xf32, #tpu.memory_space<smem>>
    %c0_33 = arith.constant 0 : index
    %c49 = arith.constant 49 : index
    %73 = vector.load %arg8[%c0_33, %c49] : memref<1x358xf32, #tpu.memory_space<vmem>>, vector<1x256xf32>
    %74 = vector.broadcast %72 : f32 to vector<1x256xf32>
    %75 = arith.mulf %74, %73 : vector<1x256xf32>
    %76 = arith.addf %71, %75 : vector<1x256xf32>
    %c29 = arith.constant 29 : index
    %77 = memref.load %arg3[%c29] : memref<147xf32, #tpu.memory_space<smem>>
    %c0_34 = arith.constant 0 : index
    %c65 = arith.constant 65 : index
    %78 = vector.load %arg8[%c0_34, %c65] : memref<1x358xf32, #tpu.memory_space<vmem>>, vector<1x256xf32>
    %79 = vector.broadcast %77 : f32 to vector<1x256xf32>
    %80 = arith.mulf %79, %78 : vector<1x256xf32>
    %81 = arith.addf %76, %80 : vector<1x256xf32>
    %c36 = arith.constant 36 : index
    %82 = memref.load %arg3[%c36] : memref<147xf32, #tpu.memory_space<smem>>
    %c0_35 = arith.constant 0 : index
    %c81 = arith.constant 81 : index
    %83 = vector.load %arg8[%c0_35, %c81] : memref<1x358xf32, #tpu.memory_space<vmem>>, vector<1x256xf32>
    %84 = vector.broadcast %82 : f32 to vector<1x256xf32>
    %85 = arith.mulf %84, %83 : vector<1x256xf32>
    %86 = arith.addf %81, %85 : vector<1x256xf32>
    %c43 = arith.constant 43 : index
    %87 = memref.load %arg3[%c43] : memref<147xf32, #tpu.memory_space<smem>>
    %c0_36 = arith.constant 0 : index
    %c97 = arith.constant 97 : index
    %88 = vector.load %arg8[%c0_36, %c97] : memref<1x358xf32, #tpu.memory_space<vmem>>, vector<1x256xf32>
    %89 = vector.broadcast %87 : f32 to vector<1x256xf32>
    %90 = arith.mulf %89, %88 : vector<1x256xf32>
    %91 = arith.addf %86, %90 : vector<1x256xf32>
    %c1_37 = arith.constant 1 : index
    %c0_38 = arith.constant 0 : index
    %92 = vector.load %arg4[%c1_37, %c0_38] : memref<7x256xf32, #tpu.memory_space<vmem>>, vector<1x256xf32>
    %93 = arith.mulf %91, %92 : vector<1x256xf32>
    %94 = arith.addf %55, %93 : vector<1x256xf32>
    %cst_39 = arith.constant 0.000000e+00 : f32
    %95 = vector.broadcast %cst_39 : f32 to vector<1x256xf32>
    %c2 = arith.constant 2 : index
    %96 = memref.load %arg3[%c2] : memref<147xf32, #tpu.memory_space<smem>>
    %c0_40 = arith.constant 0 : index
    %c2_41 = arith.constant 2 : index
    %97 = vector.load %arg8[%c0_40, %c2_41] : memref<1x358xf32, #tpu.memory_space<vmem>>, vector<1x256xf32>
    %98 = vector.broadcast %96 : f32 to vector<1x256xf32>
    %99 = arith.mulf %98, %97 : vector<1x256xf32>
    %100 = arith.addf %95, %99 : vector<1x256xf32>
    %c9 = arith.constant 9 : index
    %101 = memref.load %arg3[%c9] : memref<147xf32, #tpu.memory_space<smem>>
    %c0_42 = arith.constant 0 : index
    %c18 = arith.constant 18 : index
    %102 = vector.load %arg8[%c0_42, %c18] : memref<1x358xf32, #tpu.memory_space<vmem>>, vector<1x256xf32>
    %103 = vector.broadcast %101 : f32 to vector<1x256xf32>
    %104 = arith.mulf %103, %102 : vector<1x256xf32>
    %105 = arith.addf %100, %104 : vector<1x256xf32>
    %c16_43 = arith.constant 16 : index
    %106 = memref.load %arg3[%c16_43] : memref<147xf32, #tpu.memory_space<smem>>
    %c0_44 = arith.constant 0 : index
    %c34 = arith.constant 34 : index
    %107 = vector.load %arg8[%c0_44, %c34] : memref<1x358xf32, #tpu.memory_space<vmem>>, vector<1x256xf32>
    %108 = vector.broadcast %106 : f32 to vector<1x256xf32>
    %109 = arith.mulf %108, %107 : vector<1x256xf32>
    %110 = arith.addf %105, %109 : vector<1x256xf32>
    %c23 = arith.constant 23 : index
    %111 = memref.load %arg3[%c23] : memref<147xf32, #tpu.memory_space<smem>>
    %c0_45 = arith.constant 0 : index
    %c50 = arith.constant 50 : index
    %112 = vector.load %arg8[%c0_45, %c50] : memref<1x358xf32, #tpu.memory_space<vmem>>, vector<1x256xf32>
    %113 = vector.broadcast %111 : f32 to vector<1x256xf32>
    %114 = arith.mulf %113, %112 : vector<1x256xf32>
    %115 = arith.addf %110, %114 : vector<1x256xf32>
    %c30 = arith.constant 30 : index
    %116 = memref.load %arg3[%c30] : memref<147xf32, #tpu.memory_space<smem>>
    %c0_46 = arith.constant 0 : index
    %c66 = arith.constant 66 : index
    %117 = vector.load %arg8[%c0_46, %c66] : memref<1x358xf32, #tpu.memory_space<vmem>>, vector<1x256xf32>
    %118 = vector.broadcast %116 : f32 to vector<1x256xf32>
    %119 = arith.mulf %118, %117 : vector<1x256xf32>
    %120 = arith.addf %115, %119 : vector<1x256xf32>
    %c37 = arith.constant 37 : index
    %121 = memref.load %arg3[%c37] : memref<147xf32, #tpu.memory_space<smem>>
    %c0_47 = arith.constant 0 : index
    %c82 = arith.constant 82 : index
    %122 = vector.load %arg8[%c0_47, %c82] : memref<1x358xf32, #tpu.memory_space<vmem>>, vector<1x256xf32>
    %123 = vector.broadcast %121 : f32 to vector<1x256xf32>
    %124 = arith.mulf %123, %122 : vector<1x256xf32>
    %125 = arith.addf %120, %124 : vector<1x256xf32>
    %c44 = arith.constant 44 : index
    %126 = memref.load %arg3[%c44] : memref<147xf32, #tpu.memory_space<smem>>
    %c0_48 = arith.constant 0 : index
    %c98 = arith.constant 98 : index
    %127 = vector.load %arg8[%c0_48, %c98] : memref<1x358xf32, #tpu.memory_space<vmem>>, vector<1x256xf32>
    %128 = vector.broadcast %126 : f32 to vector<1x256xf32>
    %129 = arith.mulf %128, %127 : vector<1x256xf32>
    %130 = arith.addf %125, %129 : vector<1x256xf32>
    %c2_49 = arith.constant 2 : index
    %c0_50 = arith.constant 0 : index
    %131 = vector.load %arg4[%c2_49, %c0_50] : memref<7x256xf32, #tpu.memory_space<vmem>>, vector<1x256xf32>
    %132 = arith.mulf %130, %131 : vector<1x256xf32>
    %133 = arith.addf %94, %132 : vector<1x256xf32>
    %cst_51 = arith.constant 0.000000e+00 : f32
    %134 = vector.broadcast %cst_51 : f32 to vector<1x256xf32>
    %c3 = arith.constant 3 : index
    %135 = memref.load %arg3[%c3] : memref<147xf32, #tpu.memory_space<smem>>
    %c0_52 = arith.constant 0 : index
    %c3_53 = arith.constant 3 : index
    %136 = vector.load %arg8[%c0_52, %c3_53] : memref<1x358xf32, #tpu.memory_space<vmem>>, vector<1x256xf32>
    %137 = vector.broadcast %135 : f32 to vector<1x256xf32>
    %138 = arith.mulf %137, %136 : vector<1x256xf32>
    %139 = arith.addf %134, %138 : vector<1x256xf32>
    %c10 = arith.constant 10 : index
    %140 = memref.load %arg3[%c10] : memref<147xf32, #tpu.memory_space<smem>>
    %c0_54 = arith.constant 0 : index
    %c19 = arith.constant 19 : index
    %141 = vector.load %arg8[%c0_54, %c19] : memref<1x358xf32, #tpu.memory_space<vmem>>, vector<1x256xf32>
    %142 = vector.broadcast %140 : f32 to vector<1x256xf32>
    %143 = arith.mulf %142, %141 : vector<1x256xf32>
    %144 = arith.addf %139, %143 : vector<1x256xf32>
    %c17_55 = arith.constant 17 : index
    %145 = memref.load %arg3[%c17_55] : memref<147xf32, #tpu.memory_space<smem>>
    %c0_56 = arith.constant 0 : index
    %c35_57 = arith.constant 35 : index
    %146 = vector.load %arg8[%c0_56, %c35_57] : memref<1x358xf32, #tpu.memory_space<vmem>>, vector<1x256xf32>
    %147 = vector.broadcast %145 : f32 to vector<1x256xf32>
    %148 = arith.mulf %147, %146 : vector<1x256xf32>
    %149 = arith.addf %144, %148 : vector<1x256xf32>
    %c24 = arith.constant 24 : index
    %150 = memref.load %arg3[%c24] : memref<147xf32, #tpu.memory_space<smem>>
    %c0_58 = arith.constant 0 : index
    %c51_59 = arith.constant 51 : index
    %151 = vector.load %arg8[%c0_58, %c51_59] : memref<1x358xf32, #tpu.memory_space<vmem>>, vector<1x256xf32>
    %152 = vector.broadcast %150 : f32 to vector<1x256xf32>
    %153 = arith.mulf %152, %151 : vector<1x256xf32>
    %154 = arith.addf %149, %153 : vector<1x256xf32>
    %c31 = arith.constant 31 : index
    %155 = memref.load %arg3[%c31] : memref<147xf32, #tpu.memory_space<smem>>
    %c0_60 = arith.constant 0 : index
    %c67 = arith.constant 67 : index
    %156 = vector.load %arg8[%c0_60, %c67] : memref<1x358xf32, #tpu.memory_space<vmem>>, vector<1x256xf32>
    %157 = vector.broadcast %155 : f32 to vector<1x256xf32>
    %158 = arith.mulf %157, %156 : vector<1x256xf32>
    %159 = arith.addf %154, %158 : vector<1x256xf32>
    %c38 = arith.constant 38 : index
    %160 = memref.load %arg3[%c38] : memref<147xf32, #tpu.memory_space<smem>>
    %c0_61 = arith.constant 0 : index
    %c83 = arith.constant 83 : index
    %161 = vector.load %arg8[%c0_61, %c83] : memref<1x358xf32, #tpu.memory_space<vmem>>, vector<1x256xf32>
    %162 = vector.broadcast %160 : f32 to vector<1x256xf32>
    %163 = arith.mulf %162, %161 : vector<1x256xf32>
    %164 = arith.addf %159, %163 : vector<1x256xf32>
    %c45 = arith.constant 45 : index
    %165 = memref.load %arg3[%c45] : memref<147xf32, #tpu.memory_space<smem>>
    %c0_62 = arith.constant 0 : index
    %c99 = arith.constant 99 : index
    %166 = vector.load %arg8[%c0_62, %c99] : memref<1x358xf32, #tpu.memory_space<vmem>>, vector<1x256xf32>
    %167 = vector.broadcast %165 : f32 to vector<1x256xf32>
    %168 = arith.mulf %167, %166 : vector<1x256xf32>
    %169 = arith.addf %164, %168 : vector<1x256xf32>
    %c3_63 = arith.constant 3 : index
    %c0_64 = arith.constant 0 : index
    %170 = vector.load %arg4[%c3_63, %c0_64] : memref<7x256xf32, #tpu.memory_space<vmem>>, vector<1x256xf32>
    %171 = arith.mulf %169, %170 : vector<1x256xf32>
    %172 = arith.addf %133, %171 : vector<1x256xf32>
    %cst_65 = arith.constant 0.000000e+00 : f32
    %173 = vector.broadcast %cst_65 : f32 to vector<1x256xf32>
    %c4 = arith.constant 4 : index
    %174 = memref.load %arg3[%c4] : memref<147xf32, #tpu.memory_space<smem>>
    %c0_66 = arith.constant 0 : index
    %c4_67 = arith.constant 4 : index
    %175 = vector.load %arg8[%c0_66, %c4_67] : memref<1x358xf32, #tpu.memory_space<vmem>>, vector<1x256xf32>
    %176 = vector.broadcast %174 : f32 to vector<1x256xf32>
    %177 = arith.mulf %176, %175 : vector<1x256xf32>
    %178 = arith.addf %173, %177 : vector<1x256xf32>
    %c11 = arith.constant 11 : index
    %179 = memref.load %arg3[%c11] : memref<147xf32, #tpu.memory_space<smem>>
    %c0_68 = arith.constant 0 : index
    %c20 = arith.constant 20 : index
    %180 = vector.load %arg8[%c0_68, %c20] : memref<1x358xf32, #tpu.memory_space<vmem>>, vector<1x256xf32>
    %181 = vector.broadcast %179 : f32 to vector<1x256xf32>
    %182 = arith.mulf %181, %180 : vector<1x256xf32>
    %183 = arith.addf %178, %182 : vector<1x256xf32>
    %c18_69 = arith.constant 18 : index
    %184 = memref.load %arg3[%c18_69] : memref<147xf32, #tpu.memory_space<smem>>
    %c0_70 = arith.constant 0 : index
    %c36_71 = arith.constant 36 : index
    %185 = vector.load %arg8[%c0_70, %c36_71] : memref<1x358xf32, #tpu.memory_space<vmem>>, vector<1x256xf32>
    %186 = vector.broadcast %184 : f32 to vector<1x256xf32>
    %187 = arith.mulf %186, %185 : vector<1x256xf32>
    %188 = arith.addf %183, %187 : vector<1x256xf32>
    %c25 = arith.constant 25 : index
    %189 = memref.load %arg3[%c25] : memref<147xf32, #tpu.memory_space<smem>>
    %c0_72 = arith.constant 0 : index
    %c52 = arith.constant 52 : index
    %190 = vector.load %arg8[%c0_72, %c52] : memref<1x358xf32, #tpu.memory_space<vmem>>, vector<1x256xf32>
    %191 = vector.broadcast %189 : f32 to vector<1x256xf32>
    %192 = arith.mulf %191, %190 : vector<1x256xf32>
    %193 = arith.addf %188, %192 : vector<1x256xf32>
    %c32_73 = arith.constant 32 : index
    %194 = memref.load %arg3[%c32_73] : memref<147xf32, #tpu.memory_space<smem>>
    %c0_74 = arith.constant 0 : index
    %c68 = arith.constant 68 : index
    %195 = vector.load %arg8[%c0_74, %c68] : memref<1x358xf32, #tpu.memory_space<vmem>>, vector<1x256xf32>
    %196 = vector.broadcast %194 : f32 to vector<1x256xf32>
    %197 = arith.mulf %196, %195 : vector<1x256xf32>
    %198 = arith.addf %193, %197 : vector<1x256xf32>
    %c39 = arith.constant 39 : index
    %199 = memref.load %arg3[%c39] : memref<147xf32, #tpu.memory_space<smem>>
    %c0_75 = arith.constant 0 : index
    %c84 = arith.constant 84 : index
    %200 = vector.load %arg8[%c0_75, %c84] : memref<1x358xf32, #tpu.memory_space<vmem>>, vector<1x256xf32>
    %201 = vector.broadcast %199 : f32 to vector<1x256xf32>
    %202 = arith.mulf %201, %200 : vector<1x256xf32>
    %203 = arith.addf %198, %202 : vector<1x256xf32>
    %c46 = arith.constant 46 : index
    %204 = memref.load %arg3[%c46] : memref<147xf32, #tpu.memory_space<smem>>
    %c0_76 = arith.constant 0 : index
    %c100 = arith.constant 100 : index
    %205 = vector.load %arg8[%c0_76, %c100] : memref<1x358xf32, #tpu.memory_space<vmem>>, vector<1x256xf32>
    %206 = vector.broadcast %204 : f32 to vector<1x256xf32>
    %207 = arith.mulf %206, %205 : vector<1x256xf32>
    %208 = arith.addf %203, %207 : vector<1x256xf32>
    %c4_77 = arith.constant 4 : index
    %c0_78 = arith.constant 0 : index
    %209 = vector.load %arg4[%c4_77, %c0_78] : memref<7x256xf32, #tpu.memory_space<vmem>>, vector<1x256xf32>
    %210 = arith.mulf %208, %209 : vector<1x256xf32>
    %211 = arith.addf %172, %210 : vector<1x256xf32>
    %cst_79 = arith.constant 0.000000e+00 : f32
    %212 = vector.broadcast %cst_79 : f32 to vector<1x256xf32>
    %c5 = arith.constant 5 : index
    %213 = memref.load %arg3[%c5] : memref<147xf32, #tpu.memory_space<smem>>
    %c0_80 = arith.constant 0 : index
    %c5_81 = arith.constant 5 : index
    %214 = vector.load %arg8[%c0_80, %c5_81] : memref<1x358xf32, #tpu.memory_space<vmem>>, vector<1x256xf32>
    %215 = vector.broadcast %213 : f32 to vector<1x256xf32>
    %216 = arith.mulf %215, %214 : vector<1x256xf32>
    %217 = arith.addf %212, %216 : vector<1x256xf32>
    %c12 = arith.constant 12 : index
    %218 = memref.load %arg3[%c12] : memref<147xf32, #tpu.memory_space<smem>>
    %c0_82 = arith.constant 0 : index
    %c21_83 = arith.constant 21 : index
    %219 = vector.load %arg8[%c0_82, %c21_83] : memref<1x358xf32, #tpu.memory_space<vmem>>, vector<1x256xf32>
    %220 = vector.broadcast %218 : f32 to vector<1x256xf32>
    %221 = arith.mulf %220, %219 : vector<1x256xf32>
    %222 = arith.addf %217, %221 : vector<1x256xf32>
    %c19_84 = arith.constant 19 : index
    %223 = memref.load %arg3[%c19_84] : memref<147xf32, #tpu.memory_space<smem>>
    %c0_85 = arith.constant 0 : index
    %c37_86 = arith.constant 37 : index
    %224 = vector.load %arg8[%c0_85, %c37_86] : memref<1x358xf32, #tpu.memory_space<vmem>>, vector<1x256xf32>
    %225 = vector.broadcast %223 : f32 to vector<1x256xf32>
    %226 = arith.mulf %225, %224 : vector<1x256xf32>
    %227 = arith.addf %222, %226 : vector<1x256xf32>
    %c26 = arith.constant 26 : index
    %228 = memref.load %arg3[%c26] : memref<147xf32, #tpu.memory_space<smem>>
    %c0_87 = arith.constant 0 : index
    %c53 = arith.constant 53 : index
    %229 = vector.load %arg8[%c0_87, %c53] : memref<1x358xf32, #tpu.memory_space<vmem>>, vector<1x256xf32>
    %230 = vector.broadcast %228 : f32 to vector<1x256xf32>
    %231 = arith.mulf %230, %229 : vector<1x256xf32>
    %232 = arith.addf %227, %231 : vector<1x256xf32>
    %c33_88 = arith.constant 33 : index
    %233 = memref.load %arg3[%c33_88] : memref<147xf32, #tpu.memory_space<smem>>
    %c0_89 = arith.constant 0 : index
    %c69 = arith.constant 69 : index
    %234 = vector.load %arg8[%c0_89, %c69] : memref<1x358xf32, #tpu.memory_space<vmem>>, vector<1x256xf32>
    %235 = vector.broadcast %233 : f32 to vector<1x256xf32>
    %236 = arith.mulf %235, %234 : vector<1x256xf32>
    %237 = arith.addf %232, %236 : vector<1x256xf32>
    %c40 = arith.constant 40 : index
    %238 = memref.load %arg3[%c40] : memref<147xf32, #tpu.memory_space<smem>>
    %c0_90 = arith.constant 0 : index
    %c85 = arith.constant 85 : index
    %239 = vector.load %arg8[%c0_90, %c85] : memref<1x358xf32, #tpu.memory_space<vmem>>, vector<1x256xf32>
    %240 = vector.broadcast %238 : f32 to vector<1x256xf32>
    %241 = arith.mulf %240, %239 : vector<1x256xf32>
    %242 = arith.addf %237, %241 : vector<1x256xf32>
    %c47 = arith.constant 47 : index
    %243 = memref.load %arg3[%c47] : memref<147xf32, #tpu.memory_space<smem>>
    %c0_91 = arith.constant 0 : index
    %c101 = arith.constant 101 : index
    %244 = vector.load %arg8[%c0_91, %c101] : memref<1x358xf32, #tpu.memory_space<vmem>>, vector<1x256xf32>
    %245 = vector.broadcast %243 : f32 to vector<1x256xf32>
    %246 = arith.mulf %245, %244 : vector<1x256xf32>
    %247 = arith.addf %242, %246 : vector<1x256xf32>
    %c5_92 = arith.constant 5 : index
    %c0_93 = arith.constant 0 : index
    %248 = vector.load %arg4[%c5_92, %c0_93] : memref<7x256xf32, #tpu.memory_space<vmem>>, vector<1x256xf32>
    %249 = arith.mulf %247, %248 : vector<1x256xf32>
    %250 = arith.addf %211, %249 : vector<1x256xf32>
    %cst_94 = arith.constant 0.000000e+00 : f32
    %251 = vector.broadcast %cst_94 : f32 to vector<1x256xf32>
    %c6 = arith.constant 6 : index
    %252 = memref.load %arg3[%c6] : memref<147xf32, #tpu.memory_space<smem>>
    %c0_95 = arith.constant 0 : index
    %c6_96 = arith.constant 6 : index
    %253 = vector.load %arg8[%c0_95, %c6_96] : memref<1x358xf32, #tpu.memory_space<vmem>>, vector<1x256xf32>
    %254 = vector.broadcast %252 : f32 to vector<1x256xf32>
    %255 = arith.mulf %254, %253 : vector<1x256xf32>
    %256 = arith.addf %251, %255 : vector<1x256xf32>
    %c13 = arith.constant 13 : index
    %257 = memref.load %arg3[%c13] : memref<147xf32, #tpu.memory_space<smem>>
    %c0_97 = arith.constant 0 : index
    %c22_98 = arith.constant 22 : index
    %258 = vector.load %arg8[%c0_97, %c22_98] : memref<1x358xf32, #tpu.memory_space<vmem>>, vector<1x256xf32>
    %259 = vector.broadcast %257 : f32 to vector<1x256xf32>
    %260 = arith.mulf %259, %258 : vector<1x256xf32>
    %261 = arith.addf %256, %260 : vector<1x256xf32>
    %c20_99 = arith.constant 20 : index
    %262 = memref.load %arg3[%c20_99] : memref<147xf32, #tpu.memory_space<smem>>
    %c0_100 = arith.constant 0 : index
    %c38_101 = arith.constant 38 : index
    %263 = vector.load %arg8[%c0_100, %c38_101] : memref<1x358xf32, #tpu.memory_space<vmem>>, vector<1x256xf32>
    %264 = vector.broadcast %262 : f32 to vector<1x256xf32>
    %265 = arith.mulf %264, %263 : vector<1x256xf32>
    %266 = arith.addf %261, %265 : vector<1x256xf32>
    %c27 = arith.constant 27 : index
    %267 = memref.load %arg3[%c27] : memref<147xf32, #tpu.memory_space<smem>>
    %c0_102 = arith.constant 0 : index
    %c54 = arith.constant 54 : index
    %268 = vector.load %arg8[%c0_102, %c54] : memref<1x358xf32, #tpu.memory_space<vmem>>, vector<1x256xf32>
    %269 = vector.broadcast %267 : f32 to vector<1x256xf32>
    %270 = arith.mulf %269, %268 : vector<1x256xf32>
    %271 = arith.addf %266, %270 : vector<1x256xf32>
    %c34_103 = arith.constant 34 : index
    %272 = memref.load %arg3[%c34_103] : memref<147xf32, #tpu.memory_space<smem>>
    %c0_104 = arith.constant 0 : index
    %c70 = arith.constant 70 : index
    %273 = vector.load %arg8[%c0_104, %c70] : memref<1x358xf32, #tpu.memory_space<vmem>>, vector<1x256xf32>
    %274 = vector.broadcast %272 : f32 to vector<1x256xf32>
    %275 = arith.mulf %274, %273 : vector<1x256xf32>
    %276 = arith.addf %271, %275 : vector<1x256xf32>
    %c41 = arith.constant 41 : index
    %277 = memref.load %arg3[%c41] : memref<147xf32, #tpu.memory_space<smem>>
    %c0_105 = arith.constant 0 : index
    %c86 = arith.constant 86 : index
    %278 = vector.load %arg8[%c0_105, %c86] : memref<1x358xf32, #tpu.memory_space<vmem>>, vector<1x256xf32>
    %279 = vector.broadcast %277 : f32 to vector<1x256xf32>
    %280 = arith.mulf %279, %278 : vector<1x256xf32>
    %281 = arith.addf %276, %280 : vector<1x256xf32>
    %c48_106 = arith.constant 48 : index
    %282 = memref.load %arg3[%c48_106] : memref<147xf32, #tpu.memory_space<smem>>
    %c0_107 = arith.constant 0 : index
    %c102 = arith.constant 102 : index
    %283 = vector.load %arg8[%c0_107, %c102] : memref<1x358xf32, #tpu.memory_space<vmem>>, vector<1x256xf32>
    %284 = vector.broadcast %282 : f32 to vector<1x256xf32>
    %285 = arith.mulf %284, %283 : vector<1x256xf32>
    %286 = arith.addf %281, %285 : vector<1x256xf32>
    %c6_108 = arith.constant 6 : index
    %c0_109 = arith.constant 0 : index
    %287 = vector.load %arg4[%c6_108, %c0_109] : memref<7x256xf32, #tpu.memory_space<vmem>>, vector<1x256xf32>
    %288 = arith.mulf %286, %287 : vector<1x256xf32>
    %289 = arith.addf %250, %288 : vector<1x256xf32>
    %cst_110 = arith.constant 0.000000e+00 : f32
    %290 = vector.broadcast %cst_110 : f32 to vector<1x256xf32>
    %291 = arith.subf %290, %289 : vector<1x256xf32>
    %292 = math.exp %291 : vector<1x256xf32>
    %cst_111 = arith.constant 1.000000e+00 : f32
    %293 = vector.broadcast %cst_111 : f32 to vector<1x256xf32>
    %294 = arith.addf %293, %292 : vector<1x256xf32>
    %295 = tpu.reciprocal %294 {approx = true} : vector<1x256xf32> -> vector<1x256xf32>
    %296 = arith.mulf %10, %295 : vector<1x256xf32>
    %297 = vector.broadcast %296 : vector<1x256xf32> to vector<32x256xf32>
    %298 = arith.mulf %3, %297 : vector<32x256xf32>
    %cst_112 = arith.constant dense<0xFF800000> : vector<32xf32>
    %299 = vector.multi_reduction <maximumf>, %298, %cst_112 [1] : vector<32x256xf32> to vector<32xf32>
    %300 = vector.shape_cast %299 : vector<32xf32> to vector<32x1xf32>
    %c0_113 = arith.constant 0 : index
    %c0_114 = arith.constant 0 : index
    %c0_115 = arith.constant 0 : index
    %301 = vector.load %arg5[%c0_113, %c0_114, %c0_115] : memref<6x32x1xf32, #tpu.memory_space<vmem>>, vector<1x32x1xf32>
    %302 = vector.shape_cast %301 : vector<1x32x1xf32> to vector<32x1xf32>
    %303 = arith.mulf %302, %300 : vector<32x1xf32>
    %304 = vector.shape_cast %303 : vector<32x1xf32> to vector<1x32x1xf32>
    %cst_116 = arith.constant dense<0.000000e+00> : vector<1xf32>
    %305 = vector.multi_reduction <add>, %304, %cst_116 [1, 2] : vector<1x32x1xf32> to vector<1xf32>
    %306 = vector.shape_cast %305 : vector<1xf32> to vector<1x1x1xf32>
    %307 = vector.extract %306[0, 0, 0] : f32 from vector<1x1x1xf32>
    %308 = vector.broadcast %307 : f32 to vector<1x1xf32>
    %cst_117 = arith.constant 0.000000e+00 : f32
    %309 = vector.broadcast %cst_117 : f32 to vector<1x1xf32>
    %310 = arith.maximumf %308, %309 : vector<1x1xf32>
    %c1_118 = arith.constant 1 : index
    %c0_119 = arith.constant 0 : index
    %c0_120 = arith.constant 0 : index
    %311 = vector.load %arg5[%c1_118, %c0_119, %c0_120] : memref<6x32x1xf32, #tpu.memory_space<vmem>>, vector<1x32x1xf32>
    %312 = vector.shape_cast %311 : vector<1x32x1xf32> to vector<32x1xf32>
    %313 = arith.mulf %312, %300 : vector<32x1xf32>
    %314 = vector.shape_cast %313 : vector<32x1xf32> to vector<1x32x1xf32>
    %cst_121 = arith.constant dense<0.000000e+00> : vector<1xf32>
    %315 = vector.multi_reduction <add>, %314, %cst_121 [1, 2] : vector<1x32x1xf32> to vector<1xf32>
    %316 = vector.shape_cast %315 : vector<1xf32> to vector<1x1x1xf32>
    %317 = vector.extract %316[0, 0, 0] : f32 from vector<1x1x1xf32>
    %318 = vector.broadcast %317 : f32 to vector<1x1xf32>
    %cst_122 = arith.constant 0.000000e+00 : f32
    %319 = vector.broadcast %cst_122 : f32 to vector<1x1xf32>
    %320 = arith.maximumf %318, %319 : vector<1x1xf32>
    %c0_123 = arith.constant 0 : index
    %c0_124 = arith.constant 0 : index
    %c0_125 = arith.constant 0 : index
    %321 = vector.load %arg6[%c0_123, %c0_124, %c0_125] : memref<6x32x1xf32, #tpu.memory_space<vmem>>, vector<1x32x1xf32>
    %322 = vector.shape_cast %321 : vector<1x32x1xf32> to vector<32x1xf32>
    %323 = vector.broadcast %310 : vector<1x1xf32> to vector<32x1xf32>
    %324 = arith.mulf %322, %323 : vector<32x1xf32>
    %c1_126 = arith.constant 1 : index
    %c0_127 = arith.constant 0 : index
    %c0_128 = arith.constant 0 : index
    %325 = vector.load %arg6[%c1_126, %c0_127, %c0_128] : memref<6x32x1xf32, #tpu.memory_space<vmem>>, vector<1x32x1xf32>
    %326 = vector.shape_cast %325 : vector<1x32x1xf32> to vector<32x1xf32>
    %327 = vector.broadcast %320 : vector<1x1xf32> to vector<32x1xf32>
    %328 = arith.mulf %326, %327 : vector<32x1xf32>
    %329 = arith.addf %324, %328 : vector<32x1xf32>
    %cst_129 = arith.constant 0.000000e+00 : f32
    %330 = vector.broadcast %cst_129 : f32 to vector<32x1xf32>
    %331 = arith.subf %330, %329 : vector<32x1xf32>
    %332 = math.exp %331 : vector<32x1xf32>
    %cst_130 = arith.constant 1.000000e+00 : f32
    %333 = vector.broadcast %cst_130 : f32 to vector<32x1xf32>
    %334 = arith.addf %333, %332 : vector<32x1xf32>
    %335 = tpu.reciprocal %334 {approx = true} : vector<32x1xf32> -> vector<32x1xf32>
    %c0_131 = arith.constant 0 : index
    %c0_132 = arith.constant 0 : index
    %c0_133 = arith.constant 0 : index
    %336 = vector.load %arg7[%c0_131, %c0_132, %c0_133] : memref<1x32x256xf32, #tpu.memory_space<vmem>>, vector<1x32x256xf32>
    %337 = vector.shape_cast %336 : vector<1x32x256xf32> to vector<32x256xf32>
    %338 = vector.broadcast %335 : vector<32x1xf32> to vector<32x256xf32>
    %339 = arith.mulf %298, %338 : vector<32x256xf32>
    %340 = arith.addf %337, %339 : vector<32x256xf32>
    %c0_134 = arith.constant 0 : index
    %c0_135 = arith.constant 0 : index
    %c0_136 = arith.constant 0 : index
    %341 = vector.load %arg7[%c0_134, %c0_135, %c0_136] : memref<1x32x256xf32, #tpu.memory_space<vmem>>, vector<1x32x256xf32>
    %342 = vector.shape_cast %341 : vector<1x32x256xf32> to vector<32x256xf32>
    %343 = vector.shape_cast %340 : vector<32x256xf32> to vector<1x32x256xf32>
    tpu.vector_store %arg7[%c0_134, %c0_135, %c0_136], %343 {strides = array<i32>} : memref<1x32x256xf32, #tpu.memory_space<vmem>>, vector<1x32x256xf32>,
    %c0_137 = arith.constant 0 : index
    %c1_138 = arith.constant 1 : index
    %c0_139 = arith.constant 0 : index
    %344 = vector.load %arg2[%c0_137, %c1_138, %c0_139] : memref<1x3x256xf32, #tpu.memory_space<vmem>>, vector<1x1x256xf32>
    %345 = vector.shape_cast %344 : vector<1x1x256xf32> to vector<1x256xf32>
    %346 = vector.broadcast %345 : vector<1x256xf32> to vector<32x256xf32>
    %347 = arith.mulf %3, %346 : vector<32x256xf32>
    %cst_140 = arith.constant dense<0xFF800000> : vector<256xf32>
    %348 = vector.multi_reduction <maximumf>, %347, %cst_140 [0] : vector<32x256xf32> to vector<256xf32>
    %349 = vector.shape_cast %348 : vector<256xf32> to vector<1x256xf32>
    %c0_141 = arith.constant 0 : index
    %c51_142 = arith.constant 51 : index
    %350 = vector.load %arg8[%c0_141, %c51_142] : memref<1x358xf32, #tpu.memory_space<vmem>>, vector<1x256xf32>
    tpu.vector_store %arg8[%c0_141, %c51_142], %349 {strides = array<i32>} : memref<1x358xf32, #tpu.memory_space<vmem>>, vector<1x256xf32>,
    %cst_143 = arith.constant 0.000000e+00 : f32
    %351 = vector.broadcast %cst_143 : f32 to vector<1x256xf32>
    %cst_144 = arith.constant 0.000000e+00 : f32
    %352 = vector.broadcast %cst_144 : f32 to vector<1x256xf32>
    %c49_145 = arith.constant 49 : index
    %353 = memref.load %arg3[%c49_145] : memref<147xf32, #tpu.memory_space<smem>>
    %c0_146 = arith.constant 0 : index
    %c0_147 = arith.constant 0 : index
    %354 = vector.load %arg8[%c0_146, %c0_147] : memref<1x358xf32, #tpu.memory_space<vmem>>, vector<1x256xf32>
    %355 = vector.broadcast %353 : f32 to vector<1x256xf32>
    %356 = arith.mulf %355, %354 : vector<1x256xf32>
    %357 = arith.addf %352, %356 : vector<1x256xf32>
    %c56 = arith.constant 56 : index
    %358 = memref.load %arg3[%c56] : memref<147xf32, #tpu.memory_space<smem>>
    %c0_148 = arith.constant 0 : index
    %c16_149 = arith.constant 16 : index
    %359 = vector.load %arg8[%c0_148, %c16_149] : memref<1x358xf32, #tpu.memory_space<vmem>>, vector<1x256xf32>
    %360 = vector.broadcast %358 : f32 to vector<1x256xf32>
    %361 = arith.mulf %360, %359 : vector<1x256xf32>
    %362 = arith.addf %357, %361 : vector<1x256xf32>
    %c63 = arith.constant 63 : index
    %363 = memref.load %arg3[%c63] : memref<147xf32, #tpu.memory_space<smem>>
    %c0_150 = arith.constant 0 : index
    %c32_151 = arith.constant 32 : index
    %364 = vector.load %arg8[%c0_150, %c32_151] : memref<1x358xf32, #tpu.memory_space<vmem>>, vector<1x256xf32>
    %365 = vector.broadcast %363 : f32 to vector<1x256xf32>
    %366 = arith.mulf %365, %364 : vector<1x256xf32>
    %367 = arith.addf %362, %366 : vector<1x256xf32>
    %c70_152 = arith.constant 70 : index
    %368 = memref.load %arg3[%c70_152] : memref<147xf32, #tpu.memory_space<smem>>
    %c0_153 = arith.constant 0 : index
    %c48_154 = arith.constant 48 : index
    %369 = vector.load %arg8[%c0_153, %c48_154] : memref<1x358xf32, #tpu.memory_space<vmem>>, vector<1x256xf32>
    %370 = vector.broadcast %368 : f32 to vector<1x256xf32>
    %371 = arith.mulf %370, %369 : vector<1x256xf32>
    %372 = arith.addf %367, %371 : vector<1x256xf32>
    %c77 = arith.constant 77 : index
    %373 = memref.load %arg3[%c77] : memref<147xf32, #tpu.memory_space<smem>>
    %c0_155 = arith.constant 0 : index
    %c64_156 = arith.constant 64 : index
    %374 = vector.load %arg8[%c0_155, %c64_156] : memref<1x358xf32, #tpu.memory_space<vmem>>, vector<1x256xf32>
    %375 = vector.broadcast %373 : f32 to vector<1x256xf32>
    %376 = arith.mulf %375, %374 : vector<1x256xf32>
    %377 = arith.addf %372, %376 : vector<1x256xf32>
    %c84_157 = arith.constant 84 : index
    %378 = memref.load %arg3[%c84_157] : memref<147xf32, #tpu.memory_space<smem>>
    %c0_158 = arith.constant 0 : index
    %c80_159 = arith.constant 80 : index
    %379 = vector.load %arg8[%c0_158, %c80_159] : memref<1x358xf32, #tpu.memory_space<vmem>>, vector<1x256xf32>
    %380 = vector.broadcast %378 : f32 to vector<1x256xf32>
    %381 = arith.mulf %380, %379 : vector<1x256xf32>
    %382 = arith.addf %377, %381 : vector<1x256xf32>
    %c91 = arith.constant 91 : index
    %383 = memref.load %arg3[%c91] : memref<147xf32, #tpu.memory_space<smem>>
    %c0_160 = arith.constant 0 : index
    %c96_161 = arith.constant 96 : index
    %384 = vector.load %arg8[%c0_160, %c96_161] : memref<1x358xf32, #tpu.memory_space<vmem>>, vector<1x256xf32>
    %385 = vector.broadcast %383 : f32 to vector<1x256xf32>
    %386 = arith.mulf %385, %384 : vector<1x256xf32>
    %387 = arith.addf %382, %386 : vector<1x256xf32>
    %c0_162 = arith.constant 0 : index
    %c0_163 = arith.constant 0 : index
    %388 = vector.load %arg4[%c0_162, %c0_163] : memref<7x256xf32, #tpu.memory_space<vmem>>, vector<1x256xf32>
    %389 = arith.mulf %387, %388 : vector<1x256xf32>
    %390 = arith.addf %351, %389 : vector<1x256xf32>
    %cst_164 = arith.constant 0.000000e+00 : f32
    %391 = vector.broadcast %cst_164 : f32 to vector<1x256xf32>
    %c50_165 = arith.constant 50 : index
    %392 = memref.load %arg3[%c50_165] : memref<147xf32, #tpu.memory_space<smem>>
    %c0_166 = arith.constant 0 : index
    %c1_167 = arith.constant 1 : index
    %393 = vector.load %arg8[%c0_166, %c1_167] : memref<1x358xf32, #tpu.memory_space<vmem>>, vector<1x256xf32>
    %394 = vector.broadcast %392 : f32 to vector<1x256xf32>
    %395 = arith.mulf %394, %393 : vector<1x256xf32>
    %396 = arith.addf %391, %395 : vector<1x256xf32>
    %c57 = arith.constant 57 : index
    %397 = memref.load %arg3[%c57] : memref<147xf32, #tpu.memory_space<smem>>
    %c0_168 = arith.constant 0 : index
    %c17_169 = arith.constant 17 : index
    %398 = vector.load %arg8[%c0_168, %c17_169] : memref<1x358xf32, #tpu.memory_space<vmem>>, vector<1x256xf32>
    %399 = vector.broadcast %397 : f32 to vector<1x256xf32>
    %400 = arith.mulf %399, %398 : vector<1x256xf32>
    %401 = arith.addf %396, %400 : vector<1x256xf32>
    %c64_170 = arith.constant 64 : index
    %402 = memref.load %arg3[%c64_170] : memref<147xf32, #tpu.memory_space<smem>>
    %c0_171 = arith.constant 0 : index
    %c33_172 = arith.constant 33 : index
    %403 = vector.load %arg8[%c0_171, %c33_172] : memref<1x358xf32, #tpu.memory_space<vmem>>, vector<1x256xf32>
    %404 = vector.broadcast %402 : f32 to vector<1x256xf32>
    %405 = arith.mulf %404, %403 : vector<1x256xf32>
    %406 = arith.addf %401, %405 : vector<1x256xf32>
    %c71 = arith.constant 71 : index
    %407 = memref.load %arg3[%c71] : memref<147xf32, #tpu.memory_space<smem>>
    %c0_173 = arith.constant 0 : index
    %c49_174 = arith.constant 49 : index
    %408 = vector.load %arg8[%c0_173, %c49_174] : memref<1x358xf32, #tpu.memory_space<vmem>>, vector<1x256xf32>
    %409 = vector.broadcast %407 : f32 to vector<1x256xf32>
    %410 = arith.mulf %409, %408 : vector<1x256xf32>
    %411 = arith.addf %406, %410 : vector<1x256xf32>
    %c78 = arith.constant 78 : index
    %412 = memref.load %arg3[%c78] : memref<147xf32, #tpu.memory_space<smem>>
    %c0_175 = arith.constant 0 : index
    %c65_176 = arith.constant 65 : index
    %413 = vector.load %arg8[%c0_175, %c65_176] : memref<1x358xf32, #tpu.memory_space<vmem>>, vector<1x256xf32>
    %414 = vector.broadcast %412 : f32 to vector<1x256xf32>
    %415 = arith.mulf %414, %413 : vector<1x256xf32>
    %416 = arith.addf %411, %415 : vector<1x256xf32>
    %c85_177 = arith.constant 85 : index
    %417 = memref.load %arg3[%c85_177] : memref<147xf32, #tpu.memory_space<smem>>
    %c0_178 = arith.constant 0 : index
    %c81_179 = arith.constant 81 : index
    %418 = vector.load %arg8[%c0_178, %c81_179] : memref<1x358xf32, #tpu.memory_space<vmem>>, vector<1x256xf32>
    %419 = vector.broadcast %417 : f32 to vector<1x256xf32>
    %420 = arith.mulf %419, %418 : vector<1x256xf32>
    %421 = arith.addf %416, %420 : vector<1x256xf32>
    %c92 = arith.constant 92 : index
    %422 = memref.load %arg3[%c92] : memref<147xf32, #tpu.memory_space<smem>>
    %c0_180 = arith.constant 0 : index
    %c97_181 = arith.constant 97 : index
    %423 = vector.load %arg8[%c0_180, %c97_181] : memref<1x358xf32, #tpu.memory_space<vmem>>, vector<1x256xf32>
    %424 = vector.broadcast %422 : f32 to vector<1x256xf32>
    %425 = arith.mulf %424, %423 : vector<1x256xf32>
    %426 = arith.addf %421, %425 : vector<1x256xf32>
    %c1_182 = arith.constant 1 : index
    %c0_183 = arith.constant 0 : index
    %427 = vector.load %arg4[%c1_182, %c0_183] : memref<7x256xf32, #tpu.memory_space<vmem>>, vector<1x256xf32>
    %428 = arith.mulf %426, %427 : vector<1x256xf32>
    %429 = arith.addf %390, %428 : vector<1x256xf32>
    %cst_184 = arith.constant 0.000000e+00 : f32
    %430 = vector.broadcast %cst_184 : f32 to vector<1x256xf32>
    %c51_185 = arith.constant 51 : index
    %431 = memref.load %arg3[%c51_185] : memref<147xf32, #tpu.memory_space<smem>>
    %c0_186 = arith.constant 0 : index
    %c2_187 = arith.constant 2 : index
    %432 = vector.load %arg8[%c0_186, %c2_187] : memref<1x358xf32, #tpu.memory_space<vmem>>, vector<1x256xf32>
    %433 = vector.broadcast %431 : f32 to vector<1x256xf32>
    %434 = arith.mulf %433, %432 : vector<1x256xf32>
    %435 = arith.addf %430, %434 : vector<1x256xf32>
    %c58 = arith.constant 58 : index
    %436 = memref.load %arg3[%c58] : memref<147xf32, #tpu.memory_space<smem>>
    %c0_188 = arith.constant 0 : index
    %c18_189 = arith.constant 18 : index
    %437 = vector.load %arg8[%c0_188, %c18_189] : memref<1x358xf32, #tpu.memory_space<vmem>>, vector<1x256xf32>
    %438 = vector.broadcast %436 : f32 to vector<1x256xf32>
    %439 = arith.mulf %438, %437 : vector<1x256xf32>
    %440 = arith.addf %435, %439 : vector<1x256xf32>
    %c65_190 = arith.constant 65 : index
    %441 = memref.load %arg3[%c65_190] : memref<147xf32, #tpu.memory_space<smem>>
    %c0_191 = arith.constant 0 : index
    %c34_192 = arith.constant 34 : index
    %442 = vector.load %arg8[%c0_191, %c34_192] : memref<1x358xf32, #tpu.memory_space<vmem>>, vector<1x256xf32>
    %443 = vector.broadcast %441 : f32 to vector<1x256xf32>
    %444 = arith.mulf %443, %442 : vector<1x256xf32>
    %445 = arith.addf %440, %444 : vector<1x256xf32>
    %c72 = arith.constant 72 : index
    %446 = memref.load %arg3[%c72] : memref<147xf32, #tpu.memory_space<smem>>
    %c0_193 = arith.constant 0 : index
    %c50_194 = arith.constant 50 : index
    %447 = vector.load %arg8[%c0_193, %c50_194] : memref<1x358xf32, #tpu.memory_space<vmem>>, vector<1x256xf32>
    %448 = vector.broadcast %446 : f32 to vector<1x256xf32>
    %449 = arith.mulf %448, %447 : vector<1x256xf32>
    %450 = arith.addf %445, %449 : vector<1x256xf32>
    %c79 = arith.constant 79 : index
    %451 = memref.load %arg3[%c79] : memref<147xf32, #tpu.memory_space<smem>>
    %c0_195 = arith.constant 0 : index
    %c66_196 = arith.constant 66 : index
    %452 = vector.load %arg8[%c0_195, %c66_196] : memref<1x358xf32, #tpu.memory_space<vmem>>, vector<1x256xf32>
    %453 = vector.broadcast %451 : f32 to vector<1x256xf32>
    %454 = arith.mulf %453, %452 : vector<1x256xf32>
    %455 = arith.addf %450, %454 : vector<1x256xf32>
    %c86_197 = arith.constant 86 : index
    %456 = memref.load %arg3[%c86_197] : memref<147xf32, #tpu.memory_space<smem>>
    %c0_198 = arith.constant 0 : index
    %c82_199 = arith.constant 82 : index
    %457 = vector.load %arg8[%c0_198, %c82_199] : memref<1x358xf32, #tpu.memory_space<vmem>>, vector<1x256xf32>
    %458 = vector.broadcast %456 : f32 to vector<1x256xf32>
    %459 = arith.mulf %458, %457 : vector<1x256xf32>
    %460 = arith.addf %455, %459 : vector<1x256xf32>
    %c93 = arith.constant 93 : index
    %461 = memref.load %arg3[%c93] : memref<147xf32, #tpu.memory_space<smem>>
    %c0_200 = arith.constant 0 : index
    %c98_201 = arith.constant 98 : index
    %462 = vector.load %arg8[%c0_200, %c98_201] : memref<1x358xf32, #tpu.memory_space<vmem>>, vector<1x256xf32>
    %463 = vector.broadcast %461 : f32 to vector<1x256xf32>
    %464 = arith.mulf %463, %462 : vector<1x256xf32>
    %465 = arith.addf %460, %464 : vector<1x256xf32>
    %c2_202 = arith.constant 2 : index
    %c0_203 = arith.constant 0 : index
    %466 = vector.load %arg4[%c2_202, %c0_203] : memref<7x256xf32, #tpu.memory_space<vmem>>, vector<1x256xf32>
    %467 = arith.mulf %465, %466 : vector<1x256xf32>
    %468 = arith.addf %429, %467 : vector<1x256xf32>
    %cst_204 = arith.constant 0.000000e+00 : f32
    %469 = vector.broadcast %cst_204 : f32 to vector<1x256xf32>
    %c52_205 = arith.constant 52 : index
    %470 = memref.load %arg3[%c52_205] : memref<147xf32, #tpu.memory_space<smem>>
    %c0_206 = arith.constant 0 : index
    %c3_207 = arith.constant 3 : index
    %471 = vector.load %arg8[%c0_206, %c3_207] : memref<1x358xf32, #tpu.memory_space<vmem>>, vector<1x256xf32>
    %472 = vector.broadcast %470 : f32 to vector<1x256xf32>
    %473 = arith.mulf %472, %471 : vector<1x256xf32>
    %474 = arith.addf %469, %473 : vector<1x256xf32>
    %c59 = arith.constant 59 : index
    %475 = memref.load %arg3[%c59] : memref<147xf32, #tpu.memory_space<smem>>
    %c0_208 = arith.constant 0 : index
    %c19_209 = arith.constant 19 : index
    %476 = vector.load %arg8[%c0_208, %c19_209] : memref<1x358xf32, #tpu.memory_space<vmem>>, vector<1x256xf32>
    %477 = vector.broadcast %475 : f32 to vector<1x256xf32>
    %478 = arith.mulf %477, %476 : vector<1x256xf32>
    %479 = arith.addf %474, %478 : vector<1x256xf32>
    %c66_210 = arith.constant 66 : index
    %480 = memref.load %arg3[%c66_210] : memref<147xf32, #tpu.memory_space<smem>>
    %c0_211 = arith.constant 0 : index
    %c35_212 = arith.constant 35 : index
    %481 = vector.load %arg8[%c0_211, %c35_212] : memref<1x358xf32, #tpu.memory_space<vmem>>, vector<1x256xf32>
    %482 = vector.broadcast %480 : f32 to vector<1x256xf32>
    %483 = arith.mulf %482, %481 : vector<1x256xf32>
    %484 = arith.addf %479, %483 : vector<1x256xf32>
    %c73 = arith.constant 73 : index
    %485 = memref.load %arg3[%c73] : memref<147xf32, #tpu.memory_space<smem>>
    %c0_213 = arith.constant 0 : index
    %c51_214 = arith.constant 51 : index
    %486 = vector.load %arg8[%c0_213, %c51_214] : memref<1x358xf32, #tpu.memory_space<vmem>>, vector<1x256xf32>
    %487 = vector.broadcast %485 : f32 to vector<1x256xf32>
    %488 = arith.mulf %487, %486 : vector<1x256xf32>
    %489 = arith.addf %484, %488 : vector<1x256xf32>
    %c80_215 = arith.constant 80 : index
    %490 = memref.load %arg3[%c80_215] : memref<147xf32, #tpu.memory_space<smem>>
    %c0_216 = arith.constant 0 : index
    %c67_217 = arith.constant 67 : index
    %491 = vector.load %arg8[%c0_216, %c67_217] : memref<1x358xf32, #tpu.memory_space<vmem>>, vector<1x256xf32>
    %492 = vector.broadcast %490 : f32 to vector<1x256xf32>
    %493 = arith.mulf %492, %491 : vector<1x256xf32>
    %494 = arith.addf %489, %493 : vector<1x256xf32>
    %c87 = arith.constant 87 : index
    %495 = memref.load %arg3[%c87] : memref<147xf32, #tpu.memory_space<smem>>
    %c0_218 = arith.constant 0 : index
    %c83_219 = arith.constant 83 : index
    %496 = vector.load %arg8[%c0_218, %c83_219] : memref<1x358xf32, #tpu.memory_space<vmem>>, vector<1x256xf32>
    %497 = vector.broadcast %495 : f32 to vector<1x256xf32>
    %498 = arith.mulf %497, %496 : vector<1x256xf32>
    %499 = arith.addf %494, %498 : vector<1x256xf32>
    %c94 = arith.constant 94 : index
    %500 = memref.load %arg3[%c94] : memref<147xf32, #tpu.memory_space<smem>>
    %c0_220 = arith.constant 0 : index
    %c99_221 = arith.constant 99 : index
    %501 = vector.load %arg8[%c0_220, %c99_221] : memref<1x358xf32, #tpu.memory_space<vmem>>, vector<1x256xf32>
    %502 = vector.broadcast %500 : f32 to vector<1x256xf32>
    %503 = arith.mulf %502, %501 : vector<1x256xf32>
    %504 = arith.addf %499, %503 : vector<1x256xf32>
    %c3_222 = arith.constant 3 : index
    %c0_223 = arith.constant 0 : index
    %505 = vector.load %arg4[%c3_222, %c0_223] : memref<7x256xf32, #tpu.memory_space<vmem>>, vector<1x256xf32>
    %506 = arith.mulf %504, %505 : vector<1x256xf32>
    %507 = arith.addf %468, %506 : vector<1x256xf32>
    %cst_224 = arith.constant 0.000000e+00 : f32
    %508 = vector.broadcast %cst_224 : f32 to vector<1x256xf32>
    %c53_225 = arith.constant 53 : index
    %509 = memref.load %arg3[%c53_225] : memref<147xf32, #tpu.memory_space<smem>>
    %c0_226 = arith.constant 0 : index
    %c4_227 = arith.constant 4 : index
    %510 = vector.load %arg8[%c0_226, %c4_227] : memref<1x358xf32, #tpu.memory_space<vmem>>, vector<1x256xf32>
    %511 = vector.broadcast %509 : f32 to vector<1x256xf32>
    %512 = arith.mulf %511, %510 : vector<1x256xf32>
    %513 = arith.addf %508, %512 : vector<1x256xf32>
    %c60 = arith.constant 60 : index
    %514 = memref.load %arg3[%c60] : memref<147xf32, #tpu.memory_space<smem>>
    %c0_228 = arith.constant 0 : index
    %c20_229 = arith.constant 20 : index
    %515 = vector.load %arg8[%c0_228, %c20_229] : memref<1x358xf32, #tpu.memory_space<vmem>>, vector<1x256xf32>
    %516 = vector.broadcast %514 : f32 to vector<1x256xf32>
    %517 = arith.mulf %516, %515 : vector<1x256xf32>
    %518 = arith.addf %513, %517 : vector<1x256xf32>
    %c67_230 = arith.constant 67 : index
    %519 = memref.load %arg3[%c67_230] : memref<147xf32, #tpu.memory_space<smem>>
    %c0_231 = arith.constant 0 : index
    %c36_232 = arith.constant 36 : index
    %520 = vector.load %arg8[%c0_231, %c36_232] : memref<1x358xf32, #tpu.memory_space<vmem>>, vector<1x256xf32>
    %521 = vector.broadcast %519 : f32 to vector<1x256xf32>
    %522 = arith.mulf %521, %520 : vector<1x256xf32>
    %523 = arith.addf %518, %522 : vector<1x256xf32>
    %c74 = arith.constant 74 : index
    %524 = memref.load %arg3[%c74] : memref<147xf32, #tpu.memory_space<smem>>
    %c0_233 = arith.constant 0 : index
    %c52_234 = arith.constant 52 : index
    %525 = vector.load %arg8[%c0_233, %c52_234] : memref<1x358xf32, #tpu.memory_space<vmem>>, vector<1x256xf32>
    %526 = vector.broadcast %524 : f32 to vector<1x256xf32>
    %527 = arith.mulf %526, %525 : vector<1x256xf32>
    %528 = arith.addf %523, %527 : vector<1x256xf32>
    %c81_235 = arith.constant 81 : index
    %529 = memref.load %arg3[%c81_235] : memref<147xf32, #tpu.memory_space<smem>>
    %c0_236 = arith.constant 0 : index
    %c68_237 = arith.constant 68 : index
    %530 = vector.load %arg8[%c0_236, %c68_237] : memref<1x358xf32, #tpu.memory_space<vmem>>, vector<1x256xf32>
    %531 = vector.broadcast %529 : f32 to vector<1x256xf32>
    %532 = arith.mulf %531, %530 : vector<1x256xf32>
    %533 = arith.addf %528, %532 : vector<1x256xf32>
    %c88 = arith.constant 88 : index
    %534 = memref.load %arg3[%c88] : memref<147xf32, #tpu.memory_space<smem>>
    %c0_238 = arith.constant 0 : index
    %c84_239 = arith.constant 84 : index
    %535 = vector.load %arg8[%c0_238, %c84_239] : memref<1x358xf32, #tpu.memory_space<vmem>>, vector<1x256xf32>
    %536 = vector.broadcast %534 : f32 to vector<1x256xf32>
    %537 = arith.mulf %536, %535 : vector<1x256xf32>
    %538 = arith.addf %533, %537 : vector<1x256xf32>
    %c95 = arith.constant 95 : index
    %539 = memref.load %arg3[%c95] : memref<147xf32, #tpu.memory_space<smem>>
    %c0_240 = arith.constant 0 : index
    %c100_241 = arith.constant 100 : index
    %540 = vector.load %arg8[%c0_240, %c100_241] : memref<1x358xf32, #tpu.memory_space<vmem>>, vector<1x256xf32>
    %541 = vector.broadcast %539 : f32 to vector<1x256xf32>
    %542 = arith.mulf %541, %540 : vector<1x256xf32>
    %543 = arith.addf %538, %542 : vector<1x256xf32>
    %c4_242 = arith.constant 4 : index
    %c0_243 = arith.constant 0 : index
    %544 = vector.load %arg4[%c4_242, %c0_243] : memref<7x256xf32, #tpu.memory_space<vmem>>, vector<1x256xf32>
    %545 = arith.mulf %543, %544 : vector<1x256xf32>
    %546 = arith.addf %507, %545 : vector<1x256xf32>
    %cst_244 = arith.constant 0.000000e+00 : f32
    %547 = vector.broadcast %cst_244 : f32 to vector<1x256xf32>
    %c54_245 = arith.constant 54 : index
    %548 = memref.load %arg3[%c54_245] : memref<147xf32, #tpu.memory_space<smem>>
    %c0_246 = arith.constant 0 : index
    %c5_247 = arith.constant 5 : index
    %549 = vector.load %arg8[%c0_246, %c5_247] : memref<1x358xf32, #tpu.memory_space<vmem>>, vector<1x256xf32>
    %550 = vector.broadcast %548 : f32 to vector<1x256xf32>
    %551 = arith.mulf %550, %549 : vector<1x256xf32>
    %552 = arith.addf %547, %551 : vector<1x256xf32>
    %c61 = arith.constant 61 : index
    %553 = memref.load %arg3[%c61] : memref<147xf32, #tpu.memory_space<smem>>
    %c0_248 = arith.constant 0 : index
    %c21_249 = arith.constant 21 : index
    %554 = vector.load %arg8[%c0_248, %c21_249] : memref<1x358xf32, #tpu.memory_space<vmem>>, vector<1x256xf32>
    %555 = vector.broadcast %553 : f32 to vector<1x256xf32>
    %556 = arith.mulf %555, %554 : vector<1x256xf32>
    %557 = arith.addf %552, %556 : vector<1x256xf32>
    %c68_250 = arith.constant 68 : index
    %558 = memref.load %arg3[%c68_250] : memref<147xf32, #tpu.memory_space<smem>>
    %c0_251 = arith.constant 0 : index
    %c37_252 = arith.constant 37 : index
    %559 = vector.load %arg8[%c0_251, %c37_252] : memref<1x358xf32, #tpu.memory_space<vmem>>, vector<1x256xf32>
    %560 = vector.broadcast %558 : f32 to vector<1x256xf32>
    %561 = arith.mulf %560, %559 : vector<1x256xf32>
    %562 = arith.addf %557, %561 : vector<1x256xf32>
    %c75 = arith.constant 75 : index
    %563 = memref.load %arg3[%c75] : memref<147xf32, #tpu.memory_space<smem>>
    %c0_253 = arith.constant 0 : index
    %c53_254 = arith.constant 53 : index
    %564 = vector.load %arg8[%c0_253, %c53_254] : memref<1x358xf32, #tpu.memory_space<vmem>>, vector<1x256xf32>
    %565 = vector.broadcast %563 : f32 to vector<1x256xf32>
    %566 = arith.mulf %565, %564 : vector<1x256xf32>
    %567 = arith.addf %562, %566 : vector<1x256xf32>
    %c82_255 = arith.constant 82 : index
    %568 = memref.load %arg3[%c82_255] : memref<147xf32, #tpu.memory_space<smem>>
    %c0_256 = arith.constant 0 : index
    %c69_257 = arith.constant 69 : index
    %569 = vector.load %arg8[%c0_256, %c69_257] : memref<1x358xf32, #tpu.memory_space<vmem>>, vector<1x256xf32>
    %570 = vector.broadcast %568 : f32 to vector<1x256xf32>
    %571 = arith.mulf %570, %569 : vector<1x256xf32>
    %572 = arith.addf %567, %571 : vector<1x256xf32>
    %c89 = arith.constant 89 : index
    %573 = memref.load %arg3[%c89] : memref<147xf32, #tpu.memory_space<smem>>
    %c0_258 = arith.constant 0 : index
    %c85_259 = arith.constant 85 : index
    %574 = vector.load %arg8[%c0_258, %c85_259] : memref<1x358xf32, #tpu.memory_space<vmem>>, vector<1x256xf32>
    %575 = vector.broadcast %573 : f32 to vector<1x256xf32>
    %576 = arith.mulf %575, %574 : vector<1x256xf32>
    %577 = arith.addf %572, %576 : vector<1x256xf32>
    %c96_260 = arith.constant 96 : index
    %578 = memref.load %arg3[%c96_260] : memref<147xf32, #tpu.memory_space<smem>>
    %c0_261 = arith.constant 0 : index
    %c101_262 = arith.constant 101 : index
    %579 = vector.load %arg8[%c0_261, %c101_262] : memref<1x358xf32, #tpu.memory_space<vmem>>, vector<1x256xf32>
    %580 = vector.broadcast %578 : f32 to vector<1x256xf32>
    %581 = arith.mulf %580, %579 : vector<1x256xf32>
    %582 = arith.addf %577, %581 : vector<1x256xf32>
    %c5_263 = arith.constant 5 : index
    %c0_264 = arith.constant 0 : index
    %583 = vector.load %arg4[%c5_263, %c0_264] : memref<7x256xf32, #tpu.memory_space<vmem>>, vector<1x256xf32>
    %584 = arith.mulf %582, %583 : vector<1x256xf32>
    %585 = arith.addf %546, %584 : vector<1x256xf32>
    %cst_265 = arith.constant 0.000000e+00 : f32
    %586 = vector.broadcast %cst_265 : f32 to vector<1x256xf32>
    %c55 = arith.constant 55 : index
    %587 = memref.load %arg3[%c55] : memref<147xf32, #tpu.memory_space<smem>>
    %c0_266 = arith.constant 0 : index
    %c6_267 = arith.constant 6 : index
    %588 = vector.load %arg8[%c0_266, %c6_267] : memref<1x358xf32, #tpu.memory_space<vmem>>, vector<1x256xf32>
    %589 = vector.broadcast %587 : f32 to vector<1x256xf32>
    %590 = arith.mulf %589, %588 : vector<1x256xf32>
    %591 = arith.addf %586, %590 : vector<1x256xf32>
    %c62 = arith.constant 62 : index
    %592 = memref.load %arg3[%c62] : memref<147xf32, #tpu.memory_space<smem>>
    %c0_268 = arith.constant 0 : index
    %c22_269 = arith.constant 22 : index
    %593 = vector.load %arg8[%c0_268, %c22_269] : memref<1x358xf32, #tpu.memory_space<vmem>>, vector<1x256xf32>
    %594 = vector.broadcast %592 : f32 to vector<1x256xf32>
    %595 = arith.mulf %594, %593 : vector<1x256xf32>
    %596 = arith.addf %591, %595 : vector<1x256xf32>
    %c69_270 = arith.constant 69 : index
    %597 = memref.load %arg3[%c69_270] : memref<147xf32, #tpu.memory_space<smem>>
    %c0_271 = arith.constant 0 : index
    %c38_272 = arith.constant 38 : index
    %598 = vector.load %arg8[%c0_271, %c38_272] : memref<1x358xf32, #tpu.memory_space<vmem>>, vector<1x256xf32>
    %599 = vector.broadcast %597 : f32 to vector<1x256xf32>
    %600 = arith.mulf %599, %598 : vector<1x256xf32>
    %601 = arith.addf %596, %600 : vector<1x256xf32>
    %c76 = arith.constant 76 : index
    %602 = memref.load %arg3[%c76] : memref<147xf32, #tpu.memory_space<smem>>
    %c0_273 = arith.constant 0 : index
    %c54_274 = arith.constant 54 : index
    %603 = vector.load %arg8[%c0_273, %c54_274] : memref<1x358xf32, #tpu.memory_space<vmem>>, vector<1x256xf32>
    %604 = vector.broadcast %602 : f32 to vector<1x256xf32>
    %605 = arith.mulf %604, %603 : vector<1x256xf32>
    %606 = arith.addf %601, %605 : vector<1x256xf32>
    %c83_275 = arith.constant 83 : index
    %607 = memref.load %arg3[%c83_275] : memref<147xf32, #tpu.memory_space<smem>>
    %c0_276 = arith.constant 0 : index
    %c70_277 = arith.constant 70 : index
    %608 = vector.load %arg8[%c0_276, %c70_277] : memref<1x358xf32, #tpu.memory_space<vmem>>, vector<1x256xf32>
    %609 = vector.broadcast %607 : f32 to vector<1x256xf32>
    %610 = arith.mulf %609, %608 : vector<1x256xf32>
    %611 = arith.addf %606, %610 : vector<1x256xf32>
    %c90 = arith.constant 90 : index
    %612 = memref.load %arg3[%c90] : memref<147xf32, #tpu.memory_space<smem>>
    %c0_278 = arith.constant 0 : index
    %c86_279 = arith.constant 86 : index
    %613 = vector.load %arg8[%c0_278, %c86_279] : memref<1x358xf32, #tpu.memory_space<vmem>>, vector<1x256xf32>
    %614 = vector.broadcast %612 : f32 to vector<1x256xf32>
    %615 = arith.mulf %614, %613 : vector<1x256xf32>
    %616 = arith.addf %611, %615 : vector<1x256xf32>
    %c97_280 = arith.constant 97 : index
    %617 = memref.load %arg3[%c97_280] : memref<147xf32, #tpu.memory_space<smem>>
    %c0_281 = arith.constant 0 : index
    %c102_282 = arith.constant 102 : index
    %618 = vector.load %arg8[%c0_281, %c102_282] : memref<1x358xf32, #tpu.memory_space<vmem>>, vector<1x256xf32>
    %619 = vector.broadcast %617 : f32 to vector<1x256xf32>
    %620 = arith.mulf %619, %618 : vector<1x256xf32>
    %621 = arith.addf %616, %620 : vector<1x256xf32>
    %c6_283 = arith.constant 6 : index
    %c0_284 = arith.constant 0 : index
    %622 = vector.load %arg4[%c6_283, %c0_284] : memref<7x256xf32, #tpu.memory_space<vmem>>, vector<1x256xf32>
    %623 = arith.mulf %621, %622 : vector<1x256xf32>
    %624 = arith.addf %585, %623 : vector<1x256xf32>
    %cst_285 = arith.constant 0.000000e+00 : f32
    %625 = vector.broadcast %cst_285 : f32 to vector<1x256xf32>
    %626 = arith.subf %625, %624 : vector<1x256xf32>
    %627 = math.exp %626 : vector<1x256xf32>
    %cst_286 = arith.constant 1.000000e+00 : f32
    %628 = vector.broadcast %cst_286 : f32 to vector<1x256xf32>
    %629 = arith.addf %628, %627 : vector<1x256xf32>
    %630 = tpu.reciprocal %629 {approx = true} : vector<1x256xf32> -> vector<1x256xf32>
    %631 = arith.mulf %345, %630 : vector<1x256xf32>
    %632 = vector.broadcast %631 : vector<1x256xf32> to vector<32x256xf32>
    %633 = arith.mulf %3, %632 : vector<32x256xf32>
    %cst_287 = arith.constant dense<0xFF800000> : vector<32xf32>
    %634 = vector.multi_reduction <maximumf>, %633, %cst_287 [1] : vector<32x256xf32> to vector<32xf32>
    %635 = vector.shape_cast %634 : vector<32xf32> to vector<32x1xf32>
    %c2_288 = arith.constant 2 : index
    %c0_289 = arith.constant 0 : index
    %c0_290 = arith.constant 0 : index
    %636 = vector.load %arg5[%c2_288, %c0_289, %c0_290] : memref<6x32x1xf32, #tpu.memory_space<vmem>>, vector<1x32x1xf32>
    %637 = vector.shape_cast %636 : vector<1x32x1xf32> to vector<32x1xf32>
    %638 = arith.mulf %637, %635 : vector<32x1xf32>
    %639 = vector.shape_cast %638 : vector<32x1xf32> to vector<1x32x1xf32>
    %cst_291 = arith.constant dense<0.000000e+00> : vector<1xf32>
    %640 = vector.multi_reduction <add>, %639, %cst_291 [1, 2] : vector<1x32x1xf32> to vector<1xf32>
    %641 = vector.shape_cast %640 : vector<1xf32> to vector<1x1x1xf32>
    %642 = vector.extract %641[0, 0, 0] : f32 from vector<1x1x1xf32>
    %643 = vector.broadcast %642 : f32 to vector<1x1xf32>
    %cst_292 = arith.constant 0.000000e+00 : f32
    %644 = vector.broadcast %cst_292 : f32 to vector<1x1xf32>
    %645 = arith.maximumf %643, %644 : vector<1x1xf32>
    %c3_293 = arith.constant 3 : index
    %c0_294 = arith.constant 0 : index
    %c0_295 = arith.constant 0 : index
    %646 = vector.load %arg5[%c3_293, %c0_294, %c0_295] : memref<6x32x1xf32, #tpu.memory_space<vmem>>, vector<1x32x1xf32>
    %647 = vector.shape_cast %646 : vector<1x32x1xf32> to vector<32x1xf32>
    %648 = arith.mulf %647, %635 : vector<32x1xf32>
    %649 = vector.shape_cast %648 : vector<32x1xf32> to vector<1x32x1xf32>
    %cst_296 = arith.constant dense<0.000000e+00> : vector<1xf32>
    %650 = vector.multi_reduction <add>, %649, %cst_296 [1, 2] : vector<1x32x1xf32> to vector<1xf32>
    %651 = vector.shape_cast %650 : vector<1xf32> to vector<1x1x1xf32>
    %652 = vector.extract %651[0, 0, 0] : f32 from vector<1x1x1xf32>
    %653 = vector.broadcast %652 : f32 to vector<1x1xf32>
    %cst_297 = arith.constant 0.000000e+00 : f32
    %654 = vector.broadcast %cst_297 : f32 to vector<1x1xf32>
    %655 = arith.maximumf %653, %654 : vector<1x1xf32>
    %c2_298 = arith.constant 2 : index
    %c0_299 = arith.constant 0 : index
    %c0_300 = arith.constant 0 : index
    %656 = vector.load %arg6[%c2_298, %c0_299, %c0_300] : memref<6x32x1xf32, #tpu.memory_space<vmem>>, vector<1x32x1xf32>
    %657 = vector.shape_cast %656 : vector<1x32x1xf32> to vector<32x1xf32>
    %658 = vector.broadcast %645 : vector<1x1xf32> to vector<32x1xf32>
    %659 = arith.mulf %657, %658 : vector<32x1xf32>
    %c3_301 = arith.constant 3 : index
    %c0_302 = arith.constant 0 : index
    %c0_303 = arith.constant 0 : index
    %660 = vector.load %arg6[%c3_301, %c0_302, %c0_303] : memref<6x32x1xf32, #tpu.memory_space<vmem>>, vector<1x32x1xf32>
    %661 = vector.shape_cast %660 : vector<1x32x1xf32> to vector<32x1xf32>
    %662 = vector.broadcast %655 : vector<1x1xf32> to vector<32x1xf32>
    %663 = arith.mulf %661, %662 : vector<32x1xf32>
    %664 = arith.addf %659, %663 : vector<32x1xf32>
    %cst_304 = arith.constant 0.000000e+00 : f32
    %665 = vector.broadcast %cst_304 : f32 to vector<32x1xf32>
    %666 = arith.subf %665, %664 : vector<32x1xf32>
    %667 = math.exp %666 : vector<32x1xf32>
    %cst_305 = arith.constant 1.000000e+00 : f32
    %668 = vector.broadcast %cst_305 : f32 to vector<32x1xf32>
    %669 = arith.addf %668, %667 : vector<32x1xf32>
    %670 = tpu.reciprocal %669 {approx = true} : vector<32x1xf32> -> vector<32x1xf32>
    %c0_306 = arith.constant 0 : index
    %c0_307 = arith.constant 0 : index
    %c0_308 = arith.constant 0 : index
    %671 = vector.load %arg7[%c0_306, %c0_307, %c0_308] : memref<1x32x256xf32, #tpu.memory_space<vmem>>, vector<1x32x256xf32>
    %672 = vector.shape_cast %671 : vector<1x32x256xf32> to vector<32x256xf32>
    %673 = vector.broadcast %670 : vector<32x1xf32> to vector<32x256xf32>
    %674 = arith.mulf %633, %673 : vector<32x256xf32>
    %675 = arith.addf %672, %674 : vector<32x256xf32>
    %c0_309 = arith.constant 0 : index
    %c0_310 = arith.constant 0 : index
    %c0_311 = arith.constant 0 : index
    %676 = vector.load %arg7[%c0_309, %c0_310, %c0_311] : memref<1x32x256xf32, #tpu.memory_space<vmem>>, vector<1x32x256xf32>
    %677 = vector.shape_cast %676 : vector<1x32x256xf32> to vector<32x256xf32>
    %678 = vector.shape_cast %675 : vector<32x256xf32> to vector<1x32x256xf32>
    tpu.vector_store %arg7[%c0_309, %c0_310, %c0_311], %678 {strides = array<i32>} : memref<1x32x256xf32, #tpu.memory_space<vmem>>, vector<1x32x256xf32>,
    %c0_312 = arith.constant 0 : index
    %c2_313 = arith.constant 2 : index
    %c0_314 = arith.constant 0 : index
    %679 = vector.load %arg2[%c0_312, %c2_313, %c0_314] : memref<1x3x256xf32, #tpu.memory_space<vmem>>, vector<1x1x256xf32>
    %680 = vector.shape_cast %679 : vector<1x1x256xf32> to vector<1x256xf32>
    %681 = vector.broadcast %680 : vector<1x256xf32> to vector<32x256xf32>
    %682 = arith.mulf %3, %681 : vector<32x256xf32>
    %cst_315 = arith.constant dense<0xFF800000> : vector<256xf32>
    %683 = vector.multi_reduction <maximumf>, %682, %cst_315 [0] : vector<32x256xf32> to vector<256xf32>
    %684 = vector.shape_cast %683 : vector<256xf32> to vector<1x256xf32>
    %c0_316 = arith.constant 0 : index
    %c51_317 = arith.constant 51 : index
    %685 = vector.load %arg8[%c0_316, %c51_317] : memref<1x358xf32, #tpu.memory_space<vmem>>, vector<1x256xf32>
    tpu.vector_store %arg8[%c0_316, %c51_317], %684 {strides = array<i32>} : memref<1x358xf32, #tpu.memory_space<vmem>>, vector<1x256xf32>,
    %cst_318 = arith.constant 0.000000e+00 : f32
    %686 = vector.broadcast %cst_318 : f32 to vector<1x256xf32>
    %cst_319 = arith.constant 0.000000e+00 : f32
    %687 = vector.broadcast %cst_319 : f32 to vector<1x256xf32>
    %c98_320 = arith.constant 98 : index
    %688 = memref.load %arg3[%c98_320] : memref<147xf32, #tpu.memory_space<smem>>
    %c0_321 = arith.constant 0 : index
    %c0_322 = arith.constant 0 : index
    %689 = vector.load %arg8[%c0_321, %c0_322] : memref<1x358xf32, #tpu.memory_space<vmem>>, vector<1x256xf32>
    %690 = vector.broadcast %688 : f32 to vector<1x256xf32>
    %691 = arith.mulf %690, %689 : vector<1x256xf32>
    %692 = arith.addf %687, %691 : vector<1x256xf32>
    %c105 = arith.constant 105 : index
    %693 = memref.load %arg3[%c105] : memref<147xf32, #tpu.memory_space<smem>>
    %c0_323 = arith.constant 0 : index
    %c16_324 = arith.constant 16 : index
    %694 = vector.load %arg8[%c0_323, %c16_324] : memref<1x358xf32, #tpu.memory_space<vmem>>, vector<1x256xf32>
    %695 = vector.broadcast %693 : f32 to vector<1x256xf32>
    %696 = arith.mulf %695, %694 : vector<1x256xf32>
    %697 = arith.addf %692, %696 : vector<1x256xf32>
    %c112 = arith.constant 112 : index
    %698 = memref.load %arg3[%c112] : memref<147xf32, #tpu.memory_space<smem>>
    %c0_325 = arith.constant 0 : index
    %c32_326 = arith.constant 32 : index
    %699 = vector.load %arg8[%c0_325, %c32_326] : memref<1x358xf32, #tpu.memory_space<vmem>>, vector<1x256xf32>
    %700 = vector.broadcast %698 : f32 to vector<1x256xf32>
    %701 = arith.mulf %700, %699 : vector<1x256xf32>
    %702 = arith.addf %697, %701 : vector<1x256xf32>
    %c119 = arith.constant 119 : index
    %703 = memref.load %arg3[%c119] : memref<147xf32, #tpu.memory_space<smem>>
    %c0_327 = arith.constant 0 : index
    %c48_328 = arith.constant 48 : index
    %704 = vector.load %arg8[%c0_327, %c48_328] : memref<1x358xf32, #tpu.memory_space<vmem>>, vector<1x256xf32>
    %705 = vector.broadcast %703 : f32 to vector<1x256xf32>
    %706 = arith.mulf %705, %704 : vector<1x256xf32>
    %707 = arith.addf %702, %706 : vector<1x256xf32>
    %c126 = arith.constant 126 : index
    %708 = memref.load %arg3[%c126] : memref<147xf32, #tpu.memory_space<smem>>
    %c0_329 = arith.constant 0 : index
    %c64_330 = arith.constant 64 : index
    %709 = vector.load %arg8[%c0_329, %c64_330] : memref<1x358xf32, #tpu.memory_space<vmem>>, vector<1x256xf32>
    %710 = vector.broadcast %708 : f32 to vector<1x256xf32>
    %711 = arith.mulf %710, %709 : vector<1x256xf32>
    %712 = arith.addf %707, %711 : vector<1x256xf32>
    %c133 = arith.constant 133 : index
    %713 = memref.load %arg3[%c133] : memref<147xf32, #tpu.memory_space<smem>>
    %c0_331 = arith.constant 0 : index
    %c80_332 = arith.constant 80 : index
    %714 = vector.load %arg8[%c0_331, %c80_332] : memref<1x358xf32, #tpu.memory_space<vmem>>, vector<1x256xf32>
    %715 = vector.broadcast %713 : f32 to vector<1x256xf32>
    %716 = arith.mulf %715, %714 : vector<1x256xf32>
    %717 = arith.addf %712, %716 : vector<1x256xf32>
    %c140 = arith.constant 140 : index
    %718 = memref.load %arg3[%c140] : memref<147xf32, #tpu.memory_space<smem>>
    %c0_333 = arith.constant 0 : index
    %c96_334 = arith.constant 96 : index
    %719 = vector.load %arg8[%c0_333, %c96_334] : memref<1x358xf32, #tpu.memory_space<vmem>>, vector<1x256xf32>
    %720 = vector.broadcast %718 : f32 to vector<1x256xf32>
    %721 = arith.mulf %720, %719 : vector<1x256xf32>
    %722 = arith.addf %717, %721 : vector<1x256xf32>
    %c0_335 = arith.constant 0 : index
    %c0_336 = arith.constant 0 : index
    %723 = vector.load %arg4[%c0_335, %c0_336] : memref<7x256xf32, #tpu.memory_space<vmem>>, vector<1x256xf32>
    %724 = arith.mulf %722, %723 : vector<1x256xf32>
    %725 = arith.addf %686, %724 : vector<1x256xf32>
    %cst_337 = arith.constant 0.000000e+00 : f32
    %726 = vector.broadcast %cst_337 : f32 to vector<1x256xf32>
    %c99_338 = arith.constant 99 : index
    %727 = memref.load %arg3[%c99_338] : memref<147xf32, #tpu.memory_space<smem>>
    %c0_339 = arith.constant 0 : index
    %c1_340 = arith.constant 1 : index
    %728 = vector.load %arg8[%c0_339, %c1_340] : memref<1x358xf32, #tpu.memory_space<vmem>>, vector<1x256xf32>
    %729 = vector.broadcast %727 : f32 to vector<1x256xf32>
    %730 = arith.mulf %729, %728 : vector<1x256xf32>
    %731 = arith.addf %726, %730 : vector<1x256xf32>
    %c106 = arith.constant 106 : index
    %732 = memref.load %arg3[%c106] : memref<147xf32, #tpu.memory_space<smem>>
    %c0_341 = arith.constant 0 : index
    %c17_342 = arith.constant 17 : index
    %733 = vector.load %arg8[%c0_341, %c17_342] : memref<1x358xf32, #tpu.memory_space<vmem>>, vector<1x256xf32>
    %734 = vector.broadcast %732 : f32 to vector<1x256xf32>
    %735 = arith.mulf %734, %733 : vector<1x256xf32>
    %736 = arith.addf %731, %735 : vector<1x256xf32>
    %c113 = arith.constant 113 : index
    %737 = memref.load %arg3[%c113] : memref<147xf32, #tpu.memory_space<smem>>
    %c0_343 = arith.constant 0 : index
    %c33_344 = arith.constant 33 : index
    %738 = vector.load %arg8[%c0_343, %c33_344] : memref<1x358xf32, #tpu.memory_space<vmem>>, vector<1x256xf32>
    %739 = vector.broadcast %737 : f32 to vector<1x256xf32>
    %740 = arith.mulf %739, %738 : vector<1x256xf32>
    %741 = arith.addf %736, %740 : vector<1x256xf32>
    %c120 = arith.constant 120 : index
    %742 = memref.load %arg3[%c120] : memref<147xf32, #tpu.memory_space<smem>>
    %c0_345 = arith.constant 0 : index
    %c49_346 = arith.constant 49 : index
    %743 = vector.load %arg8[%c0_345, %c49_346] : memref<1x358xf32, #tpu.memory_space<vmem>>, vector<1x256xf32>
    %744 = vector.broadcast %742 : f32 to vector<1x256xf32>
    %745 = arith.mulf %744, %743 : vector<1x256xf32>
    %746 = arith.addf %741, %745 : vector<1x256xf32>
    %c127 = arith.constant 127 : index
    %747 = memref.load %arg3[%c127] : memref<147xf32, #tpu.memory_space<smem>>
    %c0_347 = arith.constant 0 : index
    %c65_348 = arith.constant 65 : index
    %748 = vector.load %arg8[%c0_347, %c65_348] : memref<1x358xf32, #tpu.memory_space<vmem>>, vector<1x256xf32>
    %749 = vector.broadcast %747 : f32 to vector<1x256xf32>
    %750 = arith.mulf %749, %748 : vector<1x256xf32>
    %751 = arith.addf %746, %750 : vector<1x256xf32>
    %c134 = arith.constant 134 : index
    %752 = memref.load %arg3[%c134] : memref<147xf32, #tpu.memory_space<smem>>
    %c0_349 = arith.constant 0 : index
    %c81_350 = arith.constant 81 : index
    %753 = vector.load %arg8[%c0_349, %c81_350] : memref<1x358xf32, #tpu.memory_space<vmem>>, vector<1x256xf32>
    %754 = vector.broadcast %752 : f32 to vector<1x256xf32>
    %755 = arith.mulf %754, %753 : vector<1x256xf32>
    %756 = arith.addf %751, %755 : vector<1x256xf32>
    %c141 = arith.constant 141 : index
    %757 = memref.load %arg3[%c141] : memref<147xf32, #tpu.memory_space<smem>>
    %c0_351 = arith.constant 0 : index
    %c97_352 = arith.constant 97 : index
    %758 = vector.load %arg8[%c0_351, %c97_352] : memref<1x358xf32, #tpu.memory_space<vmem>>, vector<1x256xf32>
    %759 = vector.broadcast %757 : f32 to vector<1x256xf32>
    %760 = arith.mulf %759, %758 : vector<1x256xf32>
    %761 = arith.addf %756, %760 : vector<1x256xf32>
    %c1_353 = arith.constant 1 : index
    %c0_354 = arith.constant 0 : index
    %762 = vector.load %arg4[%c1_353, %c0_354] : memref<7x256xf32, #tpu.memory_space<vmem>>, vector<1x256xf32>
    %763 = arith.mulf %761, %762 : vector<1x256xf32>
    %764 = arith.addf %725, %763 : vector<1x256xf32>
    %cst_355 = arith.constant 0.000000e+00 : f32
    %765 = vector.broadcast %cst_355 : f32 to vector<1x256xf32>
    %c100_356 = arith.constant 100 : index
    %766 = memref.load %arg3[%c100_356] : memref<147xf32, #tpu.memory_space<smem>>
    %c0_357 = arith.constant 0 : index
    %c2_358 = arith.constant 2 : index
    %767 = vector.load %arg8[%c0_357, %c2_358] : memref<1x358xf32, #tpu.memory_space<vmem>>, vector<1x256xf32>
    %768 = vector.broadcast %766 : f32 to vector<1x256xf32>
    %769 = arith.mulf %768, %767 : vector<1x256xf32>
    %770 = arith.addf %765, %769 : vector<1x256xf32>
    %c107 = arith.constant 107 : index
    %771 = memref.load %arg3[%c107] : memref<147xf32, #tpu.memory_space<smem>>
    %c0_359 = arith.constant 0 : index
    %c18_360 = arith.constant 18 : index
    %772 = vector.load %arg8[%c0_359, %c18_360] : memref<1x358xf32, #tpu.memory_space<vmem>>, vector<1x256xf32>
    %773 = vector.broadcast %771 : f32 to vector<1x256xf32>
    %774 = arith.mulf %773, %772 : vector<1x256xf32>
    %775 = arith.addf %770, %774 : vector<1x256xf32>
    %c114 = arith.constant 114 : index
    %776 = memref.load %arg3[%c114] : memref<147xf32, #tpu.memory_space<smem>>
    %c0_361 = arith.constant 0 : index
    %c34_362 = arith.constant 34 : index
    %777 = vector.load %arg8[%c0_361, %c34_362] : memref<1x358xf32, #tpu.memory_space<vmem>>, vector<1x256xf32>
    %778 = vector.broadcast %776 : f32 to vector<1x256xf32>
    %779 = arith.mulf %778, %777 : vector<1x256xf32>
    %780 = arith.addf %775, %779 : vector<1x256xf32>
    %c121 = arith.constant 121 : index
    %781 = memref.load %arg3[%c121] : memref<147xf32, #tpu.memory_space<smem>>
    %c0_363 = arith.constant 0 : index
    %c50_364 = arith.constant 50 : index
    %782 = vector.load %arg8[%c0_363, %c50_364] : memref<1x358xf32, #tpu.memory_space<vmem>>, vector<1x256xf32>
    %783 = vector.broadcast %781 : f32 to vector<1x256xf32>
    %784 = arith.mulf %783, %782 : vector<1x256xf32>
    %785 = arith.addf %780, %784 : vector<1x256xf32>
    %c128 = arith.constant 128 : index
    %786 = memref.load %arg3[%c128] : memref<147xf32, #tpu.memory_space<smem>>
    %c0_365 = arith.constant 0 : index
    %c66_366 = arith.constant 66 : index
    %787 = vector.load %arg8[%c0_365, %c66_366] : memref<1x358xf32, #tpu.memory_space<vmem>>, vector<1x256xf32>
    %788 = vector.broadcast %786 : f32 to vector<1x256xf32>
    %789 = arith.mulf %788, %787 : vector<1x256xf32>
    %790 = arith.addf %785, %789 : vector<1x256xf32>
    %c135 = arith.constant 135 : index
    %791 = memref.load %arg3[%c135] : memref<147xf32, #tpu.memory_space<smem>>
    %c0_367 = arith.constant 0 : index
    %c82_368 = arith.constant 82 : index
    %792 = vector.load %arg8[%c0_367, %c82_368] : memref<1x358xf32, #tpu.memory_space<vmem>>, vector<1x256xf32>
    %793 = vector.broadcast %791 : f32 to vector<1x256xf32>
    %794 = arith.mulf %793, %792 : vector<1x256xf32>
    %795 = arith.addf %790, %794 : vector<1x256xf32>
    %c142 = arith.constant 142 : index
    %796 = memref.load %arg3[%c142] : memref<147xf32, #tpu.memory_space<smem>>
    %c0_369 = arith.constant 0 : index
    %c98_370 = arith.constant 98 : index
    %797 = vector.load %arg8[%c0_369, %c98_370] : memref<1x358xf32, #tpu.memory_space<vmem>>, vector<1x256xf32>
    %798 = vector.broadcast %796 : f32 to vector<1x256xf32>
    %799 = arith.mulf %798, %797 : vector<1x256xf32>
    %800 = arith.addf %795, %799 : vector<1x256xf32>
    %c2_371 = arith.constant 2 : index
    %c0_372 = arith.constant 0 : index
    %801 = vector.load %arg4[%c2_371, %c0_372] : memref<7x256xf32, #tpu.memory_space<vmem>>, vector<1x256xf32>
    %802 = arith.mulf %800, %801 : vector<1x256xf32>
    %803 = arith.addf %764, %802 : vector<1x256xf32>
    %cst_373 = arith.constant 0.000000e+00 : f32
    %804 = vector.broadcast %cst_373 : f32 to vector<1x256xf32>
    %c101_374 = arith.constant 101 : index
    %805 = memref.load %arg3[%c101_374] : memref<147xf32, #tpu.memory_space<smem>>
    %c0_375 = arith.constant 0 : index
    %c3_376 = arith.constant 3 : index
    %806 = vector.load %arg8[%c0_375, %c3_376] : memref<1x358xf32, #tpu.memory_space<vmem>>, vector<1x256xf32>
    %807 = vector.broadcast %805 : f32 to vector<1x256xf32>
    %808 = arith.mulf %807, %806 : vector<1x256xf32>
    %809 = arith.addf %804, %808 : vector<1x256xf32>
    %c108 = arith.constant 108 : index
    %810 = memref.load %arg3[%c108] : memref<147xf32, #tpu.memory_space<smem>>
    %c0_377 = arith.constant 0 : index
    %c19_378 = arith.constant 19 : index
    %811 = vector.load %arg8[%c0_377, %c19_378] : memref<1x358xf32, #tpu.memory_space<vmem>>, vector<1x256xf32>
    %812 = vector.broadcast %810 : f32 to vector<1x256xf32>
    %813 = arith.mulf %812, %811 : vector<1x256xf32>
    %814 = arith.addf %809, %813 : vector<1x256xf32>
    %c115 = arith.constant 115 : index
    %815 = memref.load %arg3[%c115] : memref<147xf32, #tpu.memory_space<smem>>
    %c0_379 = arith.constant 0 : index
    %c35_380 = arith.constant 35 : index
    %816 = vector.load %arg8[%c0_379, %c35_380] : memref<1x358xf32, #tpu.memory_space<vmem>>, vector<1x256xf32>
    %817 = vector.broadcast %815 : f32 to vector<1x256xf32>
    %818 = arith.mulf %817, %816 : vector<1x256xf32>
    %819 = arith.addf %814, %818 : vector<1x256xf32>
    %c122 = arith.constant 122 : index
    %820 = memref.load %arg3[%c122] : memref<147xf32, #tpu.memory_space<smem>>
    %c0_381 = arith.constant 0 : index
    %c51_382 = arith.constant 51 : index
    %821 = vector.load %arg8[%c0_381, %c51_382] : memref<1x358xf32, #tpu.memory_space<vmem>>, vector<1x256xf32>
    %822 = vector.broadcast %820 : f32 to vector<1x256xf32>
    %823 = arith.mulf %822, %821 : vector<1x256xf32>
    %824 = arith.addf %819, %823 : vector<1x256xf32>
    %c129 = arith.constant 129 : index
    %825 = memref.load %arg3[%c129] : memref<147xf32, #tpu.memory_space<smem>>
    %c0_383 = arith.constant 0 : index
    %c67_384 = arith.constant 67 : index
    %826 = vector.load %arg8[%c0_383, %c67_384] : memref<1x358xf32, #tpu.memory_space<vmem>>, vector<1x256xf32>
    %827 = vector.broadcast %825 : f32 to vector<1x256xf32>
    %828 = arith.mulf %827, %826 : vector<1x256xf32>
    %829 = arith.addf %824, %828 : vector<1x256xf32>
    %c136 = arith.constant 136 : index
    %830 = memref.load %arg3[%c136] : memref<147xf32, #tpu.memory_space<smem>>
    %c0_385 = arith.constant 0 : index
    %c83_386 = arith.constant 83 : index
    %831 = vector.load %arg8[%c0_385, %c83_386] : memref<1x358xf32, #tpu.memory_space<vmem>>, vector<1x256xf32>
    %832 = vector.broadcast %830 : f32 to vector<1x256xf32>
    %833 = arith.mulf %832, %831 : vector<1x256xf32>
    %834 = arith.addf %829, %833 : vector<1x256xf32>
    %c143 = arith.constant 143 : index
    %835 = memref.load %arg3[%c143] : memref<147xf32, #tpu.memory_space<smem>>
    %c0_387 = arith.constant 0 : index
    %c99_388 = arith.constant 99 : index
    %836 = vector.load %arg8[%c0_387, %c99_388] : memref<1x358xf32, #tpu.memory_space<vmem>>, vector<1x256xf32>
    %837 = vector.broadcast %835 : f32 to vector<1x256xf32>
    %838 = arith.mulf %837, %836 : vector<1x256xf32>
    %839 = arith.addf %834, %838 : vector<1x256xf32>
    %c3_389 = arith.constant 3 : index
    %c0_390 = arith.constant 0 : index
    %840 = vector.load %arg4[%c3_389, %c0_390] : memref<7x256xf32, #tpu.memory_space<vmem>>, vector<1x256xf32>
    %841 = arith.mulf %839, %840 : vector<1x256xf32>
    %842 = arith.addf %803, %841 : vector<1x256xf32>
    %cst_391 = arith.constant 0.000000e+00 : f32
    %843 = vector.broadcast %cst_391 : f32 to vector<1x256xf32>
    %c102_392 = arith.constant 102 : index
    %844 = memref.load %arg3[%c102_392] : memref<147xf32, #tpu.memory_space<smem>>
    %c0_393 = arith.constant 0 : index
    %c4_394 = arith.constant 4 : index
    %845 = vector.load %arg8[%c0_393, %c4_394] : memref<1x358xf32, #tpu.memory_space<vmem>>, vector<1x256xf32>
    %846 = vector.broadcast %844 : f32 to vector<1x256xf32>
    %847 = arith.mulf %846, %845 : vector<1x256xf32>
    %848 = arith.addf %843, %847 : vector<1x256xf32>
    %c109 = arith.constant 109 : index
    %849 = memref.load %arg3[%c109] : memref<147xf32, #tpu.memory_space<smem>>
    %c0_395 = arith.constant 0 : index
    %c20_396 = arith.constant 20 : index
    %850 = vector.load %arg8[%c0_395, %c20_396] : memref<1x358xf32, #tpu.memory_space<vmem>>, vector<1x256xf32>
    %851 = vector.broadcast %849 : f32 to vector<1x256xf32>
    %852 = arith.mulf %851, %850 : vector<1x256xf32>
    %853 = arith.addf %848, %852 : vector<1x256xf32>
    %c116 = arith.constant 116 : index
    %854 = memref.load %arg3[%c116] : memref<147xf32, #tpu.memory_space<smem>>
    %c0_397 = arith.constant 0 : index
    %c36_398 = arith.constant 36 : index
    %855 = vector.load %arg8[%c0_397, %c36_398] : memref<1x358xf32, #tpu.memory_space<vmem>>, vector<1x256xf32>
    %856 = vector.broadcast %854 : f32 to vector<1x256xf32>
    %857 = arith.mulf %856, %855 : vector<1x256xf32>
    %858 = arith.addf %853, %857 : vector<1x256xf32>
    %c123 = arith.constant 123 : index
    %859 = memref.load %arg3[%c123] : memref<147xf32, #tpu.memory_space<smem>>
    %c0_399 = arith.constant 0 : index
    %c52_400 = arith.constant 52 : index
    %860 = vector.load %arg8[%c0_399, %c52_400] : memref<1x358xf32, #tpu.memory_space<vmem>>, vector<1x256xf32>
    %861 = vector.broadcast %859 : f32 to vector<1x256xf32>
    %862 = arith.mulf %861, %860 : vector<1x256xf32>
    %863 = arith.addf %858, %862 : vector<1x256xf32>
    %c130 = arith.constant 130 : index
    %864 = memref.load %arg3[%c130] : memref<147xf32, #tpu.memory_space<smem>>
    %c0_401 = arith.constant 0 : index
    %c68_402 = arith.constant 68 : index
    %865 = vector.load %arg8[%c0_401, %c68_402] : memref<1x358xf32, #tpu.memory_space<vmem>>, vector<1x256xf32>
    %866 = vector.broadcast %864 : f32 to vector<1x256xf32>
    %867 = arith.mulf %866, %865 : vector<1x256xf32>
    %868 = arith.addf %863, %867 : vector<1x256xf32>
    %c137 = arith.constant 137 : index
    %869 = memref.load %arg3[%c137] : memref<147xf32, #tpu.memory_space<smem>>
    %c0_403 = arith.constant 0 : index
    %c84_404 = arith.constant 84 : index
    %870 = vector.load %arg8[%c0_403, %c84_404] : memref<1x358xf32, #tpu.memory_space<vmem>>, vector<1x256xf32>
    %871 = vector.broadcast %869 : f32 to vector<1x256xf32>
    %872 = arith.mulf %871, %870 : vector<1x256xf32>
    %873 = arith.addf %868, %872 : vector<1x256xf32>
    %c144 = arith.constant 144 : index
    %874 = memref.load %arg3[%c144] : memref<147xf32, #tpu.memory_space<smem>>
    %c0_405 = arith.constant 0 : index
    %c100_406 = arith.constant 100 : index
    %875 = vector.load %arg8[%c0_405, %c100_406] : memref<1x358xf32, #tpu.memory_space<vmem>>, vector<1x256xf32>
    %876 = vector.broadcast %874 : f32 to vector<1x256xf32>
    %877 = arith.mulf %876, %875 : vector<1x256xf32>
    %878 = arith.addf %873, %877 : vector<1x256xf32>
    %c4_407 = arith.constant 4 : index
    %c0_408 = arith.constant 0 : index
    %879 = vector.load %arg4[%c4_407, %c0_408] : memref<7x256xf32, #tpu.memory_space<vmem>>, vector<1x256xf32>
    %880 = arith.mulf %878, %879 : vector<1x256xf32>
    %881 = arith.addf %842, %880 : vector<1x256xf32>
    %cst_409 = arith.constant 0.000000e+00 : f32
    %882 = vector.broadcast %cst_409 : f32 to vector<1x256xf32>
    %c103 = arith.constant 103 : index
    %883 = memref.load %arg3[%c103] : memref<147xf32, #tpu.memory_space<smem>>
    %c0_410 = arith.constant 0 : index
    %c5_411 = arith.constant 5 : index
    %884 = vector.load %arg8[%c0_410, %c5_411] : memref<1x358xf32, #tpu.memory_space<vmem>>, vector<1x256xf32>
    %885 = vector.broadcast %883 : f32 to vector<1x256xf32>
    %886 = arith.mulf %885, %884 : vector<1x256xf32>
    %887 = arith.addf %882, %886 : vector<1x256xf32>
    %c110 = arith.constant 110 : index
    %888 = memref.load %arg3[%c110] : memref<147xf32, #tpu.memory_space<smem>>
    %c0_412 = arith.constant 0 : index
    %c21_413 = arith.constant 21 : index
    %889 = vector.load %arg8[%c0_412, %c21_413] : memref<1x358xf32, #tpu.memory_space<vmem>>, vector<1x256xf32>
    %890 = vector.broadcast %888 : f32 to vector<1x256xf32>
    %891 = arith.mulf %890, %889 : vector<1x256xf32>
    %892 = arith.addf %887, %891 : vector<1x256xf32>
    %c117 = arith.constant 117 : index
    %893 = memref.load %arg3[%c117] : memref<147xf32, #tpu.memory_space<smem>>
    %c0_414 = arith.constant 0 : index
    %c37_415 = arith.constant 37 : index
    %894 = vector.load %arg8[%c0_414, %c37_415] : memref<1x358xf32, #tpu.memory_space<vmem>>, vector<1x256xf32>
    %895 = vector.broadcast %893 : f32 to vector<1x256xf32>
    %896 = arith.mulf %895, %894 : vector<1x256xf32>
    %897 = arith.addf %892, %896 : vector<1x256xf32>
    %c124 = arith.constant 124 : index
    %898 = memref.load %arg3[%c124] : memref<147xf32, #tpu.memory_space<smem>>
    %c0_416 = arith.constant 0 : index
    %c53_417 = arith.constant 53 : index
    %899 = vector.load %arg8[%c0_416, %c53_417] : memref<1x358xf32, #tpu.memory_space<vmem>>, vector<1x256xf32>
    %900 = vector.broadcast %898 : f32 to vector<1x256xf32>
    %901 = arith.mulf %900, %899 : vector<1x256xf32>
    %902 = arith.addf %897, %901 : vector<1x256xf32>
    %c131 = arith.constant 131 : index
    %903 = memref.load %arg3[%c131] : memref<147xf32, #tpu.memory_space<smem>>
    %c0_418 = arith.constant 0 : index
    %c69_419 = arith.constant 69 : index
    %904 = vector.load %arg8[%c0_418, %c69_419] : memref<1x358xf32, #tpu.memory_space<vmem>>, vector<1x256xf32>
    %905 = vector.broadcast %903 : f32 to vector<1x256xf32>
    %906 = arith.mulf %905, %904 : vector<1x256xf32>
    %907 = arith.addf %902, %906 : vector<1x256xf32>
    %c138 = arith.constant 138 : index
    %908 = memref.load %arg3[%c138] : memref<147xf32, #tpu.memory_space<smem>>
    %c0_420 = arith.constant 0 : index
    %c85_421 = arith.constant 85 : index
    %909 = vector.load %arg8[%c0_420, %c85_421] : memref<1x358xf32, #tpu.memory_space<vmem>>, vector<1x256xf32>
    %910 = vector.broadcast %908 : f32 to vector<1x256xf32>
    %911 = arith.mulf %910, %909 : vector<1x256xf32>
    %912 = arith.addf %907, %911 : vector<1x256xf32>
    %c145 = arith.constant 145 : index
    %913 = memref.load %arg3[%c145] : memref<147xf32, #tpu.memory_space<smem>>
    %c0_422 = arith.constant 0 : index
    %c101_423 = arith.constant 101 : index
    %914 = vector.load %arg8[%c0_422, %c101_423] : memref<1x358xf32, #tpu.memory_space<vmem>>, vector<1x256xf32>
    %915 = vector.broadcast %913 : f32 to vector<1x256xf32>
    %916 = arith.mulf %915, %914 : vector<1x256xf32>
    %917 = arith.addf %912, %916 : vector<1x256xf32>
    %c5_424 = arith.constant 5 : index
    %c0_425 = arith.constant 0 : index
    %918 = vector.load %arg4[%c5_424, %c0_425] : memref<7x256xf32, #tpu.memory_space<vmem>>, vector<1x256xf32>
    %919 = arith.mulf %917, %918 : vector<1x256xf32>
    %920 = arith.addf %881, %919 : vector<1x256xf32>
    %cst_426 = arith.constant 0.000000e+00 : f32
    %921 = vector.broadcast %cst_426 : f32 to vector<1x256xf32>
    %c104 = arith.constant 104 : index
    %922 = memref.load %arg3[%c104] : memref<147xf32, #tpu.memory_space<smem>>
    %c0_427 = arith.constant 0 : index
    %c6_428 = arith.constant 6 : index
    %923 = vector.load %arg8[%c0_427, %c6_428] : memref<1x358xf32, #tpu.memory_space<vmem>>, vector<1x256xf32>
    %924 = vector.broadcast %922 : f32 to vector<1x256xf32>
    %925 = arith.mulf %924, %923 : vector<1x256xf32>
    %926 = arith.addf %921, %925 : vector<1x256xf32>
    %c111 = arith.constant 111 : index
    %927 = memref.load %arg3[%c111] : memref<147xf32, #tpu.memory_space<smem>>
    %c0_429 = arith.constant 0 : index
    %c22_430 = arith.constant 22 : index
    %928 = vector.load %arg8[%c0_429, %c22_430] : memref<1x358xf32, #tpu.memory_space<vmem>>, vector<1x256xf32>
    %929 = vector.broadcast %927 : f32 to vector<1x256xf32>
    %930 = arith.mulf %929, %928 : vector<1x256xf32>
    %931 = arith.addf %926, %930 : vector<1x256xf32>
    %c118 = arith.constant 118 : index
    %932 = memref.load %arg3[%c118] : memref<147xf32, #tpu.memory_space<smem>>
    %c0_431 = arith.constant 0 : index
    %c38_432 = arith.constant 38 : index
    %933 = vector.load %arg8[%c0_431, %c38_432] : memref<1x358xf32, #tpu.memory_space<vmem>>, vector<1x256xf32>
    %934 = vector.broadcast %932 : f32 to vector<1x256xf32>
    %935 = arith.mulf %934, %933 : vector<1x256xf32>
    %936 = arith.addf %931, %935 : vector<1x256xf32>
    %c125 = arith.constant 125 : index
    %937 = memref.load %arg3[%c125] : memref<147xf32, #tpu.memory_space<smem>>
    %c0_433 = arith.constant 0 : index
    %c54_434 = arith.constant 54 : index
    %938 = vector.load %arg8[%c0_433, %c54_434] : memref<1x358xf32, #tpu.memory_space<vmem>>, vector<1x256xf32>
    %939 = vector.broadcast %937 : f32 to vector<1x256xf32>
    %940 = arith.mulf %939, %938 : vector<1x256xf32>
    %941 = arith.addf %936, %940 : vector<1x256xf32>
    %c132 = arith.constant 132 : index
    %942 = memref.load %arg3[%c132] : memref<147xf32, #tpu.memory_space<smem>>
    %c0_435 = arith.constant 0 : index
    %c70_436 = arith.constant 70 : index
    %943 = vector.load %arg8[%c0_435, %c70_436] : memref<1x358xf32, #tpu.memory_space<vmem>>, vector<1x256xf32>
    %944 = vector.broadcast %942 : f32 to vector<1x256xf32>
    %945 = arith.mulf %944, %943 : vector<1x256xf32>
    %946 = arith.addf %941, %945 : vector<1x256xf32>
    %c139 = arith.constant 139 : index
    %947 = memref.load %arg3[%c139] : memref<147xf32, #tpu.memory_space<smem>>
    %c0_437 = arith.constant 0 : index
    %c86_438 = arith.constant 86 : index
    %948 = vector.load %arg8[%c0_437, %c86_438] : memref<1x358xf32, #tpu.memory_space<vmem>>, vector<1x256xf32>
    %949 = vector.broadcast %947 : f32 to vector<1x256xf32>
    %950 = arith.mulf %949, %948 : vector<1x256xf32>
    %951 = arith.addf %946, %950 : vector<1x256xf32>
    %c146 = arith.constant 146 : index
    %952 = memref.load %arg3[%c146] : memref<147xf32, #tpu.memory_space<smem>>
    %c0_439 = arith.constant 0 : index
    %c102_440 = arith.constant 102 : index
    %953 = vector.load %arg8[%c0_439, %c102_440] : memref<1x358xf32, #tpu.memory_space<vmem>>, vector<1x256xf32>
    %954 = vector.broadcast %952 : f32 to vector<1x256xf32>
    %955 = arith.mulf %954, %953 : vector<1x256xf32>
    %956 = arith.addf %951, %955 : vector<1x256xf32>
    %c6_441 = arith.constant 6 : index
    %c0_442 = arith.constant 0 : index
    %957 = vector.load %arg4[%c6_441, %c0_442] : memref<7x256xf32, #tpu.memory_space<vmem>>, vector<1x256xf32>
    %958 = arith.mulf %956, %957 : vector<1x256xf32>
    %959 = arith.addf %920, %958 : vector<1x256xf32>
    %cst_443 = arith.constant 0.000000e+00 : f32
    %960 = vector.broadcast %cst_443 : f32 to vector<1x256xf32>
    %961 = arith.subf %960, %959 : vector<1x256xf32>
    %962 = math.exp %961 : vector<1x256xf32>
    %cst_444 = arith.constant 1.000000e+00 : f32
    %963 = vector.broadcast %cst_444 : f32 to vector<1x256xf32>
    %964 = arith.addf %963, %962 : vector<1x256xf32>
    %965 = tpu.reciprocal %964 {approx = true} : vector<1x256xf32> -> vector<1x256xf32>
    %966 = arith.mulf %680, %965 : vector<1x256xf32>
    %967 = vector.broadcast %966 : vector<1x256xf32> to vector<32x256xf32>
    %968 = arith.mulf %3, %967 : vector<32x256xf32>
    %cst_445 = arith.constant dense<0xFF800000> : vector<32xf32>
    %969 = vector.multi_reduction <maximumf>, %968, %cst_445 [1] : vector<32x256xf32> to vector<32xf32>
    %970 = vector.shape_cast %969 : vector<32xf32> to vector<32x1xf32>
    %c4_446 = arith.constant 4 : index
    %c0_447 = arith.constant 0 : index
    %c0_448 = arith.constant 0 : index
    %971 = vector.load %arg5[%c4_446, %c0_447, %c0_448] : memref<6x32x1xf32, #tpu.memory_space<vmem>>, vector<1x32x1xf32>
    %972 = vector.shape_cast %971 : vector<1x32x1xf32> to vector<32x1xf32>
    %973 = arith.mulf %972, %970 : vector<32x1xf32>
    %974 = vector.shape_cast %973 : vector<32x1xf32> to vector<1x32x1xf32>
    %cst_449 = arith.constant dense<0.000000e+00> : vector<1xf32>
    %975 = vector.multi_reduction <add>, %974, %cst_449 [1, 2] : vector<1x32x1xf32> to vector<1xf32>
    %976 = vector.shape_cast %975 : vector<1xf32> to vector<1x1x1xf32>
    %977 = vector.extract %976[0, 0, 0] : f32 from vector<1x1x1xf32>
    %978 = vector.broadcast %977 : f32 to vector<1x1xf32>
    %cst_450 = arith.constant 0.000000e+00 : f32
    %979 = vector.broadcast %cst_450 : f32 to vector<1x1xf32>
    %980 = arith.maximumf %978, %979 : vector<1x1xf32>
    %c5_451 = arith.constant 5 : index
    %c0_452 = arith.constant 0 : index
    %c0_453 = arith.constant 0 : index
    %981 = vector.load %arg5[%c5_451, %c0_452, %c0_453] : memref<6x32x1xf32, #tpu.memory_space<vmem>>, vector<1x32x1xf32>
    %982 = vector.shape_cast %981 : vector<1x32x1xf32> to vector<32x1xf32>
    %983 = arith.mulf %982, %970 : vector<32x1xf32>
    %984 = vector.shape_cast %983 : vector<32x1xf32> to vector<1x32x1xf32>
    %cst_454 = arith.constant dense<0.000000e+00> : vector<1xf32>
    %985 = vector.multi_reduction <add>, %984, %cst_454 [1, 2] : vector<1x32x1xf32> to vector<1xf32>
    %986 = vector.shape_cast %985 : vector<1xf32> to vector<1x1x1xf32>
    %987 = vector.extract %986[0, 0, 0] : f32 from vector<1x1x1xf32>
    %988 = vector.broadcast %987 : f32 to vector<1x1xf32>
    %cst_455 = arith.constant 0.000000e+00 : f32
    %989 = vector.broadcast %cst_455 : f32 to vector<1x1xf32>
    %990 = arith.maximumf %988, %989 : vector<1x1xf32>
    %c4_456 = arith.constant 4 : index
    %c0_457 = arith.constant 0 : index
    %c0_458 = arith.constant 0 : index
    %991 = vector.load %arg6[%c4_456, %c0_457, %c0_458] : memref<6x32x1xf32, #tpu.memory_space<vmem>>, vector<1x32x1xf32>
    %992 = vector.shape_cast %991 : vector<1x32x1xf32> to vector<32x1xf32>
    %993 = vector.broadcast %980 : vector<1x1xf32> to vector<32x1xf32>
    %994 = arith.mulf %992, %993 : vector<32x1xf32>
    %c5_459 = arith.constant 5 : index
    %c0_460 = arith.constant 0 : index
    %c0_461 = arith.constant 0 : index
    %995 = vector.load %arg6[%c5_459, %c0_460, %c0_461] : memref<6x32x1xf32, #tpu.memory_space<vmem>>, vector<1x32x1xf32>
    %996 = vector.shape_cast %995 : vector<1x32x1xf32> to vector<32x1xf32>
    %997 = vector.broadcast %990 : vector<1x1xf32> to vector<32x1xf32>
    %998 = arith.mulf %996, %997 : vector<32x1xf32>
    %999 = arith.addf %994, %998 : vector<32x1xf32>
    %cst_462 = arith.constant 0.000000e+00 : f32
    %1000 = vector.broadcast %cst_462 : f32 to vector<32x1xf32>
    %1001 = arith.subf %1000, %999 : vector<32x1xf32>
    %1002 = math.exp %1001 : vector<32x1xf32>
    %cst_463 = arith.constant 1.000000e+00 : f32
    %1003 = vector.broadcast %cst_463 : f32 to vector<32x1xf32>
    %1004 = arith.addf %1003, %1002 : vector<32x1xf32>
    %1005 = tpu.reciprocal %1004 {approx = true} : vector<32x1xf32> -> vector<32x1xf32>
    %c0_464 = arith.constant 0 : index
    %c0_465 = arith.constant 0 : index
    %c0_466 = arith.constant 0 : index
    %1006 = vector.load %arg7[%c0_464, %c0_465, %c0_466] : memref<1x32x256xf32, #tpu.memory_space<vmem>>, vector<1x32x256xf32>
    %1007 = vector.shape_cast %1006 : vector<1x32x256xf32> to vector<32x256xf32>
    %1008 = vector.broadcast %1005 : vector<32x1xf32> to vector<32x256xf32>
    %1009 = arith.mulf %968, %1008 : vector<32x256xf32>
    %1010 = arith.addf %1007, %1009 : vector<32x256xf32>
    %c0_467 = arith.constant 0 : index
    %c0_468 = arith.constant 0 : index
    %c0_469 = arith.constant 0 : index
    %1011 = vector.load %arg7[%c0_467, %c0_468, %c0_469] : memref<1x32x256xf32, #tpu.memory_space<vmem>>, vector<1x32x256xf32>
    %1012 = vector.shape_cast %1011 : vector<1x32x256xf32> to vector<32x256xf32>
    %1013 = vector.shape_cast %1010 : vector<32x256xf32> to vector<1x32x256xf32>
    tpu.vector_store %arg7[%c0_467, %c0_468, %c0_469], %1013 {strides = array<i32>} : memref<1x32x256xf32, #tpu.memory_space<vmem>>, vector<1x32x256xf32>,
    return
  }
  func.func @transform_0(%arg0: i32) -> (i32, i32, i32) {
    %c0_i32 = arith.constant 0 : i32
    %c0_i32_0 = arith.constant 0 : i32
    %c0_i32_1 = arith.constant 0 : i32
    return %arg0, %c0_i32, %c0_i32_0 : i32, i32, i32
  }
  func.func @transform_1(%arg0: i32) -> (i32, i32, i32) {
    %c0_i32 = arith.constant 0 : i32
    %c0_i32_0 = arith.constant 0 : i32
    %c0_i32_1 = arith.constant 0 : i32
    return %arg0, %c0_i32, %c0_i32_0 : i32, i32, i32
  }
  func.func @transform_2(%arg0: i32) -> i32 {
    %c0_i32 = arith.constant 0 : i32
    %c0_i32_0 = arith.constant 0 : i32
    return %c0_i32 : i32
  }
  func.func @transform_3(%arg0: i32) -> (i32, i32) {
    %c0_i32 = arith.constant 0 : i32
    %c0_i32_0 = arith.constant 0 : i32
    %c0_i32_1 = arith.constant 0 : i32
    return %c0_i32, %c0_i32_0 : i32, i32
  }
  func.func @transform_4(%arg0: i32) -> (i32, i32, i32) {
    %c0_i32 = arith.constant 0 : i32
    %c0_i32_0 = arith.constant 0 : i32
    %c0_i32_1 = arith.constant 0 : i32
    %c0_i32_2 = arith.constant 0 : i32
    return %c0_i32, %c0_i32_0, %c0_i32_1 : i32, i32, i32
  }
  func.func @transform_5(%arg0: i32) -> (i32, i32, i32) {
    %c0_i32 = arith.constant 0 : i32
    %c0_i32_0 = arith.constant 0 : i32
    %c0_i32_1 = arith.constant 0 : i32
    %c0_i32_2 = arith.constant 0 : i32
    return %c0_i32, %c0_i32_0, %c0_i32_1 : i32, i32, i32
  }
  func.func @transform_6(%arg0: i32) -> (i32, i32, i32) {
    %c0_i32 = arith.constant 0 : i32
    %c0_i32_0 = arith.constant 0 : i32
    %c0_i32_1 = arith.constant 0 : i32
    return %arg0, %c0_i32, %c0_i32_0 : i32, i32, i32
  }
}

</mosaic_0001>

<llo_original>
// kernel: tpu_custom_call.1
$region0: #{tpu_custom_call.1}
  #allocation0 [shape = 'u32[]', space=smem, size = 0x4, offset = 0x4, fixed_abs, tag = 'smem constant byte address 0x4 - core index']
  #allocation1 [shape = 'u32[144,128]{1,0:T(1,128)}', space=vmem, size = 0x12000, scoped, tag = 'internal scratch']
  #allocation2 [shape = 'f32[1,358]{1,0:T(1,128)}', space=vmem, size = 0x600, scoped, tag = 'scratch operand']
  %s0 = inlined_call_operand.vmem [shape: f32[2,32,256], index: 0, kind: input, shape index: {}]
  %s1 = inlined_call_operand.vmem [shape: f32[2,3,256], index: 1, kind: input, shape index: {}]
  %s2 = inlined_call_operand.vmem [shape: f32[147], index: 2, kind: input, shape index: {}]
  %s3 = inlined_call_operand.vmem [shape: f32[7,256], index: 3, kind: input, shape index: {}]
  %s4 = inlined_call_operand.vmem [shape: f32[6,32,1], index: 4, kind: input, shape index: {}]
  %s5 = inlined_call_operand.vmem [shape: f32[6,32,1], index: 5, kind: input, shape index: {}]
  %s6 = inlined_call_operand.hbm [shape: f32[2,32,256], index: 6, kind: output, shape index: {}]
  %s7 = sld [smem:[#allocation0]]
  $region61: #{tpu_custom_call.1} parent=0
    _
  %s9 = ssub.s32 1, %s7
  %s10 = scalar_select 0, %s9, %s7
  $region1: #{tpu_custom_call.1} parent=0
    #allocation3 [shape = 'u8[1024]{0}', space=smem, size = 0x400, scoped, tag = 'input window, operand 2, single buffered']
    #allocation4 [shape = 's32[2]{0}', space=sflag, size = 0x8, scoped, tag = 'scoped memory for tpu_custom_call.1']
    #allocation5 [shape = 's32[2]{0}', space=sflag, size = 0x8, scoped, tag = 'scoped memory for tpu_custom_call.1']
    #allocation6 [shape = 'u8[65536]{0}', space=vmem, size = 0x10000, scoped, tag = 'output window, operand 0']
    %11 = vsyncpa [#allocation5], 0
    %12 = vsyncpa [#allocation4], 0
    %s13 = scalar_lea.sflag [#allocation4], 1
    %14 = vsyncpa %s13, 0
    loop: start=0, step=1, limit=4
    $region2: #{tpu_custom_call.1} parent=1 // loop_pre_header
      _
    $region3: #{tpu_custom_call.1} parent=1 // loop_header
      %s16 = sphi 0, %s20
      %p17 = scmp.ge.s32.totalorder %s16, 4
      %s26 = sphi 0, %s28
      %s29 = sphi 0, %s26
      %s30 = sphi 0, %s29
      %s46 = sphi 0, %s30
      %s52 = sphi 0, %s54
      %s55 = sphi 0, %s52
      %s56 = sphi 0, %s55
      %s72 = sphi 0, %s56
      %s76 = sphi 0, %s76
      %s78 = sphi 0, %s76
      %s79 = sphi 0, %s78
      %s93 = sphi 0, %s79
      %s97 = sphi 0, %s97
      %s99 = sphi 0, %s97
      %s100 = sphi 0, %s99
      %s114 = sphi 0, %s100
      %s118 = sphi 0, %s118
      %s120 = sphi 0, %s118
      %s121 = sphi 0, %s120
      %s135 = sphi 0, %s121
      %s139 = sphi 0, %s139
      %s141 = sphi 0, %s139
      %s142 = sphi 0, %s141
      %s156 = sphi 0, %s142
      %s162 = sphi 0, %s164
      %s165 = sphi 0, %s162
      %s166 = sphi 0, %s165
      %s182 = sphi 0, %s166
    $region4: #{tpu_custom_call.1} parent=1 // loop_header_branch
      %19 = sbr.rel (%p17) target = $region8
    $region5: #{tpu_custom_call.1} parent=1 // loop_body
      %s21 = ssub.s32 %s16, 1
      %s22 = ssub.s32 %s16, 2
      %s23 = sadd.s32 %s16, 1
      %s24 = ssub.s32 %s16, %s23
      %p25 = scmp.eq.s32.totalorder %s24, 0
      %s27 = sadd.s32 %s26, 1
      %s28 = scalar_select %p25, %s26, %s27
      %p31 = pneg %p25
      %p32 = scmp.eq.s32.totalorder %s16, 1
      %p33 = por %p31, %p32
      %p34 = scmp.ne.s32.totalorder %s26, %s29
      %p35 = scmp.eq.s32.totalorder %s16, 0
      %p36 = por %p34, %p35
      %p37 = scmp.ne.s32.totalorder %s26, %s29
      %p38 = scmp.eq.s32.totalorder %s21, 1
      %p39 = por %p37, %p38
      %p40 = scmp.ne.s32.totalorder %s29, %s30
      %p41 = scmp.eq.s32.totalorder %s21, 0
      %p42 = por %p40, %p41
      %p43 = scmp.ne.s32.totalorder %s29, %s30
      %p44 = scmp.eq.s32.totalorder %s22, 1
      %p45 = por %p43, %p44
      %p47 = scmp.ne.s32.totalorder %s30, %s46
      %p48 = scmp.eq.s32.totalorder %s22, 0
      %p49 = por %p47, %p48
      %s50 = ssub.s32 %s16, %s23
      %p51 = scmp.eq.s32.totalorder %s50, 0
      %s53 = sadd.s32 %s52, 1
      %s54 = scalar_select %p51, %s52, %s53
      %p57 = pneg %p51
      %p58 = scmp.eq.s32.totalorder %s16, 1
      %p59 = por %p57, %p58
      %p60 = scmp.ne.s32.totalorder %s52, %s55
      %p61 = scmp.eq.s32.totalorder %s16, 0
      %p62 = por %p60, %p61
      %p63 = scmp.ne.s32.totalorder %s52, %s55
      %p64 = scmp.eq.s32.totalorder %s21, 1
      %p65 = por %p63, %p64
      %p66 = scmp.ne.s32.totalorder %s55, %s56
      %p67 = scmp.eq.s32.totalorder %s21, 0
      %p68 = por %p66, %p67
      %p69 = scmp.ne.s32.totalorder %s55, %s56
      %p70 = scmp.eq.s32.totalorder %s22, 1
      %p71 = por %p69, %p70
      %p73 = scmp.ne.s32.totalorder %s56, %s72
      %p74 = scmp.eq.s32.totalorder %s22, 0
      %p75 = por %p73, %p74
      %s77 = sadd.s32 %s76, 1
      %p80 = scmp.eq.s32.totalorder %s16, 1
      %p81 = scmp.ne.s32.totalorder %s76, %s78
      %p82 = scmp.eq.s32.totalorder %s16, 0
      %p83 = por %p81, %p82
      %p84 = scmp.ne.s32.totalorder %s76, %s78
      %p85 = scmp.eq.s32.totalorder %s21, 1
      %p86 = por %p84, %p85
      %p87 = scmp.ne.s32.totalorder %s78, %s79
      %p88 = scmp.eq.s32.totalorder %s21, 0
      %p89 = por %p87, %p88
      %p90 = scmp.ne.s32.totalorder %s78, %s79
      %p91 = scmp.eq.s32.totalorder %s22, 1
      %p92 = por %p90, %p91
      %p94 = scmp.ne.s32.totalorder %s79, %s93
      %p95 = scmp.eq.s32.totalorder %s22, 0
      %p96 = por %p94, %p95
      %s98 = sadd.s32 %s97, 1
      %p101 = scmp.eq.s32.totalorder %s16, 1
      %p102 = scmp.ne.s32.totalorder %s97, %s99
      %p103 = scmp.eq.s32.totalorder %s16, 0
      %p104 = por %p102, %p103
      %p105 = scmp.ne.s32.totalorder %s97, %s99
      %p106 = scmp.eq.s32.totalorder %s21, 1
      %p107 = por %p105, %p106
      %p108 = scmp.ne.s32.totalorder %s99, %s100
      %p109 = scmp.eq.s32.totalorder %s21, 0
      %p110 = por %p108, %p109
      %p111 = scmp.ne.s32.totalorder %s99, %s100
      %p112 = scmp.eq.s32.totalorder %s22, 1
      %p113 = por %p111, %p112
      %p115 = scmp.ne.s32.totalorder %s100, %s114
      %p116 = scmp.eq.s32.totalorder %s22, 0
      %p117 = por %p115, %p116
      %s119 = sadd.s32 %s118, 1
      %p122 = scmp.eq.s32.totalorder %s16, 1
      %p123 = scmp.ne.s32.totalorder %s118, %s120
      %p124 = scmp.eq.s32.totalorder %s16, 0
      %p125 = por %p123, %p124
      %p126 = scmp.ne.s32.totalorder %s118, %s120
      %p127 = scmp.eq.s32.totalorder %s21, 1
      %p128 = por %p126, %p127
      %p129 = scmp.ne.s32.totalorder %s120, %s121
      %p130 = scmp.eq.s32.totalorder %s21, 0
      %p131 = por %p129, %p130
      %p132 = scmp.ne.s32.totalorder %s120, %s121
      %p133 = scmp.eq.s32.totalorder %s22, 1
      %p134 = por %p132, %p133
      %p136 = scmp.ne.s32.totalorder %s121, %s135
      %p137 = scmp.eq.s32.totalorder %s22, 0
      %p138 = por %p136, %p137
      %s140 = sadd.s32 %s139, 1
      %p143 = scmp.eq.s32.totalorder %s16, 1
      %p144 = scmp.ne.s32.totalorder %s139, %s141
      %p145 = scmp.eq.s32.totalorder %s16, 0
      %p146 = por %p144, %p145
      %p147 = scmp.ne.s32.totalorder %s139, %s141
      %p148 = scmp.eq.s32.totalorder %s21, 1
      %p149 = por %p147, %p148
      %p150 = scmp.ne.s32.totalorder %s141, %s142
      %p151 = scmp.eq.s32.totalorder %s21, 0
      %p152 = por %p150, %p151
      %p153 = scmp.ne.s32.totalorder %s141, %s142
      %p154 = scmp.eq.s32.totalorder %s22, 1
      %p155 = por %p153, %p154
      %p157 = scmp.ne.s32.totalorder %s142, %s156
      %p158 = scmp.eq.s32.totalorder %s22, 0
      %p159 = por %p157, %p158
      %s160 = ssub.s32 %s16, %s23
      %p161 = scmp.eq.s32.totalorder %s160, 0
      %s163 = sadd.s32 %s162, 1
      %s164 = scalar_select %p161, %s162, %s163
      %p167 = pneg %p161
      %p168 = scmp.eq.s32.totalorder %s16, 1
      %p169 = por %p167, %p168
      %p170 = scmp.ne.s32.totalorder %s162, %s165
      %p171 = scmp.eq.s32.totalorder %s16, 0
      %p172 = por %p170, %p171
      %p173 = scmp.ne.s32.totalorder %s162, %s165
      %p174 = scmp.eq.s32.totalorder %s21, 1
      %p175 = por %p173, %p174
      %p176 = scmp.ne.s32.totalorder %s165, %s166
      %p177 = scmp.eq.s32.totalorder %s21, 0
      %p178 = por %p176, %p177
      %p179 = scmp.ne.s32.totalorder %s165, %s166
      %p180 = scmp.eq.s32.totalorder %s22, 1
      %p181 = por %p179, %p180
      %p183 = scmp.ne.s32.totalorder %s166, %s182
      %p184 = scmp.eq.s32.totalorder %s22, 0
      %p185 = por %p183, %p184
      %p186 = scmp.le.s32.totalorder 1, %s16
      %p187 = scmp.lt.s32.totalorder %s16, 3
      %p188 = pnand %p186, %p187
      %p189 = pneg %p188
      // Predicated region
      $region9: #{tpu_custom_call.1} parent=5 // pred_check
        _
      $region10: #{tpu_custom_call.1} parent=5 // pred_check_branch
        %191 = sbr.rel (%p188) target = $region12
      $region11: #{tpu_custom_call.1} parent=5 // pred_region
        %s192 = ssub.s32 %s16, 1
        // Predicated region
        $region13: #{tpu_custom_call.1} parent=11 // pred_check
          %p193 = pneg %p89
        $region14: #{tpu_custom_call.1} parent=11 // pred_check_branch
          %195 = sbr.rel (%p193) target = $region16
        $region15: #{tpu_custom_call.1} parent=11 // pred_region
          %s197 = ssub.s32 32, 32
          %198 = vsyncadd [#allocation5], %s197
          %s200 = sshll.u32 %s2, 4
          %s201 = int_to_ptr.vmem [resolvable:$true] %s200
          %203 = dma.vmem_to_smem %s201, 32, [#allocation3], [#allocation5]
        $region16: #{tpu_custom_call.1} parent=11 // pred_fallthru
          _
        // Predicated region
        $region17: #{tpu_custom_call.1} parent=11 // pred_check
          %p204 = pneg %p110
        $region18: #{tpu_custom_call.1} parent=11 // pred_check_branch
          %206 = sbr.rel (%p204) target = $region20
        $region19: #{tpu_custom_call.1} parent=11 // pred_region
          _
        $region20: #{tpu_custom_call.1} parent=11 // pred_fallthru
          _
        // Predicated region
        $region21: #{tpu_custom_call.1} parent=11 // pred_check
          %p207 = pneg %p131
        $region22: #{tpu_custom_call.1} parent=11 // pred_check_branch
          %209 = sbr.rel (%p207) target = $region24
        $region23: #{tpu_custom_call.1} parent=11 // pred_region
          _
        $region24: #{tpu_custom_call.1} parent=11 // pred_fallthru
          _
        // Predicated region
        $region25: #{tpu_custom_call.1} parent=11 // pred_check
          %p210 = pneg %p152
        $region26: #{tpu_custom_call.1} parent=11 // pred_check_branch
          %212 = sbr.rel (%p210) target = $region28
        $region27: #{tpu_custom_call.1} parent=11 // pred_region
          _
        $region28: #{tpu_custom_call.1} parent=11 // pred_fallthru
          _
      $region12: #{tpu_custom_call.1} parent=5 // pred_fallthru
        _
      %p213 = scmp.lt.s32.totalorder %s16, 2
      // Predicated region
      $region29: #{tpu_custom_call.1} parent=5 // pred_check
        %p214 = pneg %p213
      $region30: #{tpu_custom_call.1} parent=5 // pred_check_branch
        %216 = sbr.rel (%p214) target = $region32
      $region31: #{tpu_custom_call.1} parent=5 // pred_region
        // Predicated region
        $region33: #{tpu_custom_call.1} parent=31 // pred_check
          %p217 = pneg %p36
        $region34: #{tpu_custom_call.1} parent=31 // pred_check_branch
          %219 = sbr.rel (%p217) target = $region36
        $region35: #{tpu_custom_call.1} parent=31 // pred_region
          %p220 = scmp.lt.s32.totalorder %s16, 1
          %s221 = scalar_select %p220, %s16, 1
          %s222 = smul.addr %s221, 8
          %s223 = smul.addr %s222, 8
          %s224 = scalar_lea.vmem %s0, %s223
        $region36: #{tpu_custom_call.1} parent=31 // pred_fallthru
          _
        // Predicated region
        $region37: #{tpu_custom_call.1} parent=31 // pred_check
          %p225 = pneg %p62
        $region38: #{tpu_custom_call.1} parent=31 // pred_check_branch
          %227 = sbr.rel (%p225) target = $region40
        $region39: #{tpu_custom_call.1} parent=31 // pred_region
          %p228 = scmp.lt.s32.totalorder %s16, 1
          %s229 = scalar_select %p228, %s16, 1
          %s230 = smul.addr %s229, 2
          %s231 = smul.addr %s230, 4
          %s232 = scalar_lea.vmem %s1, %s231
        $region40: #{tpu_custom_call.1} parent=31 // pred_fallthru
          _
      $region32: #{tpu_custom_call.1} parent=5 // pred_fallthru
        _
      %p233 = scmp.le.s32.totalorder 1, %s16
      %p234 = scmp.lt.s32.totalorder %s16, 3
      %p235 = pnand %p233, %p234
      %p236 = pneg %p235
      // Predicated region
      $region41: #{tpu_custom_call.1} parent=5 // pred_check
        _
      $region42: #{tpu_custom_call.1} parent=5 // pred_check_branch
        %238 = sbr.rel (%p235) target = $region44
      $region43: #{tpu_custom_call.1} parent=5 // pred_region
        %s239 = ssub.s32 %s16, 1
        // Predicated region
        $region45: #{tpu_custom_call.1} parent=43 // pred_check
          %p240 = pneg %p89
        $region46: #{tpu_custom_call.1} parent=43 // pred_check_branch
          %242 = sbr.rel (%p240) target = $region48
        $region47: #{tpu_custom_call.1} parent=43 // pred_region
          %243 = dma.done [#allocation5], 32
        $region48: #{tpu_custom_call.1} parent=43 // pred_fallthru
          _
        %244 = sfence
        %p245 = scmp.lt.s32.totalorder %s21, 1
        %s246 = scalar_select %p245, %s21, 1
        %s247 = smul.addr %s246, 8
        %s248 = smul.addr %s247, 8
        %s249 = scalar_lea.vmem %s0, %s248
        %p250 = pneg %p42
        %p251 = pneg %p39
        %p252 = scmp.lt.s32.totalorder %s21, 1
        %s253 = scalar_select %p252, %s21, 1
        %s254 = smul.addr %s253, 2
        %s255 = smul.addr %s254, 4
        %s256 = scalar_lea.vmem %s1, %s255
        %p257 = pneg %p68
        %p258 = pneg %p65
        %p259 = pneg %p89
        %p260 = pneg %p86
        %p261 = pneg %p110
        %p262 = pneg %p107
        %p263 = pneg %p131
        %p264 = pneg %p128
        %p265 = pneg %p152
        %p266 = pneg %p149
        %p267 = pneg %p178
        %p268 = pneg %p175
        %s269 = sand.u32 %s165, 1
        %s270 = scalar_lea.sflag [#allocation4], %s269
        %s271 = sand.u32 %s165, 1
        %s272 = smul.addr %s271, 64
        %s273 = scalar_lea.vmem [#allocation6], %s272
        %p274 = scmp.lt.s32.totalorder %s21, 1
        %s275 = scalar_select %p274, %s21, 1
        %s276 = smul.addr %s275, 8
        %s277 = smul.addr %s276, 8
        %s278 = scalar_lea.vmem %s0, %s277
        %p279 = scmp.lt.s32.totalorder %s21, 1
        %s280 = scalar_select %p279, %s21, 1
        %s281 = smul.addr %s280, 2
        %s282 = smul.addr %s281, 4
        %s283 = scalar_lea.vmem %s1, %s282
        %v284 = vlaneseq
        %vm285 = vcmp.ge.s32.totalorder %v284, 0
        %vm286 = vcmp.lt.s32.totalorder %v284, 358
        %vm287 = vmand %vm285, %vm286
        %288 = vst.msk [vmem:[#allocation2] sm:$0x7] %vm287, 0.0
        %v289 = vld [vmem:[%s278] sm:$0xff]
        %v290 = vld [vmem:[%s278 + $0x8] sm:$0xff]
        %v291 = vld [vmem:[%s278 + $0x10] sm:$0xff]
        %v292 = vld [vmem:[%s278 + $0x18] sm:$0xff]
        %v293 = vld [vmem:[%s278 + $0x20] sm:$0xff]
        %v294 = vld [vmem:[%s278 + $0x28] sm:$0xff]
        %v295 = vld [vmem:[%s278 + $0x30] sm:$0xff]
        %v296 = vld [vmem:[%s278 + $0x38] sm:$0xff]
        %297 = vst [vmem:[%s273] sm:$0xff] %v289
        %298 = vst [vmem:[%s273 + $0x8] sm:$0xff] %v290
        %299 = vst [vmem:[%s273 + $0x10] sm:$0xff] %v291
        %300 = vst [vmem:[%s273 + $0x18] sm:$0xff] %v292
        %301 = vst [vmem:[%s273 + $0x20] sm:$0xff] %v293
        %302 = vst [vmem:[%s273 + $0x28] sm:$0xff] %v294
        %303 = vst [vmem:[%s273 + $0x30] sm:$0xff] %v295
        %304 = vst [vmem:[%s273 + $0x38] sm:$0xff] %v296
        %v305 = vld [vmem:[%s283] ss:$4 sm:$0x3]
        %v307 = vlaneseq
        %v308 = vshrl.u32 %v307, 7
        %v309 = vsub.s32 0, %v308
        %v310 = vrot.slane %v305, %v309
        %v311 = vlaneseq
        %v312 = vshrl.u32 %v311, 7
        %v313 = vsub.s32 1, %v312
        %v314 = vrot.slane %v305, %v313
        %v317 = vmul.f32 %v289, %v310
        %v318 = vmul.f32 %v290, %v314
        %v319 = vmul.f32 %v291, %v310
        %v320 = vmul.f32 %v292, %v314
        %v321 = vmul.f32 %v293, %v310
        %v322 = vmul.f32 %v294, %v314
        %v323 = vmul.f32 %v295, %v310
        %v324 = vmul.f32 %v296, %v314
        %v325 = vmax.f32 %v317, %v321
        %v326 = vmax.f32 %v319, %v323
        %v327 = vmax.f32 %v325, %v326
        %v328 = vrot.slane %v327, 4
        %v329 = vmax.f32 %v327, %v328
        %v330 = vrot.slane %v329, 2
        %v331 = vmax.f32 %v329, %v330
        %v332 = vrot.slane %v331, 1
        %v333 = vmax.f32 %v331, %v332
        %v334 = vmax.f32 %v318, %v322
        %v335 = vmax.f32 %v320, %v324
        %v336 = vmax.f32 %v334, %v335
        %v337 = vrot.slane %v336, 4
        %v338 = vmax.f32 %v336, %v337
        %v339 = vrot.slane %v338, 2
        %v340 = vmax.f32 %v338, %v339
        %v341 = vrot.slane %v340, 1
        %v342 = vmax.f32 %v340, %v341
        %v345 = vcombine.low %v333, %v342
        %v347 = vunpack.c.l.s4 1966171168
        %v348 = vunpack.c.0.s8 %v347
        %v349 = vlaneseq
        %v350 = vshrl.u32 %v349, 7
        %v351 = vsub.s32 %v348, %v350
        %v352 = vrot.slane %v345, %v351
        %v354 = vunpack.c.l.s4 1966171168
        %v355 = vunpack.c.0.s8 %v354
        %v356 = vlaneseq
        %v357 = vshrl.u32 %v356, 7
        %v358 = vsub.s32 %v355, %v357
        %v359 = vrot.slane %v352, %v358
        %360 = vrot.lane.b32.xlu0 %v359, 51
        %v361 = vpop.permute.xlu0 %360
        %v362 = vrot.slane %v361, 7
        %vm363 = vcmask 416768
        %v364 = vsel %vm363, %v362, %v361
        %vm366 = vcmp.ge.s32.totalorder %v284, 51
        %vm367 = vcmp.lt.s32.totalorder %v284, 307
        %vm368 = vmand %vm366, %vm367
        %369 = vst.msk [vmem:[#allocation2] sm:$0x7] %vm368, %v364
        %s370 = sld [smem:[#allocation3]]
        %v371 = vld [vmem:[#allocation2] sm:$0x3]
        %v372 = vstv %s370
        %v373 = vmul.f32 %v372, %v371
        %v374 = vadd.f32 %v373, 0.0
        %s375 = sld [smem:[#allocation3 + $0x7]]
        %v376 = vld [vmem:[#allocation2] sm:$0x7]
        %v377 = vstv %s375
        %v378 = vmul.f32 %v377, %v376
        %380 = vrot.lane.b32.xlu0 %v378, 112
        %v381 = vpop.permute.xlu0 %380
        %v382 = vrot.slane %v381, 1
        %vm383 = vcmask 916480
        %v384 = vsel %vm383, %v381, %v382
        %v386 = vadd.f32 %v374, %v384
        %s387 = sld [smem:[#allocation3 + $0xe]]
        %v388 = vstv %s387
        %v389 = vmul.f32 %v388, %v376
        %391 = vrot.lane.b32.xlu0 %v389, 96
        %v392 = vpop.permute.xlu0 %391
        %v393 = vrot.slane %v392, 1
        %vm394 = vcmask 785408
        %v395 = vsel %vm394, %v392, %v393
        %v397 = vadd.f32 %v386, %v395
        %s398 = sld [smem:[#allocation3 + $0x15]]
        %v399 = vstv %s398
        %v400 = vmul.f32 %v399, %v376
        %402 = vrot.lane.b32.xlu0 %v400, 80
        %v403 = vpop.permute.xlu0 %402
        %v404 = vrot.slane %v403, 1
        %vm405 = vcmask 654336
        %v406 = vsel %vm405, %v403, %v404
        %v408 = vadd.f32 %v397, %v406
        %s409 = sld [smem:[#allocation3 + $0x1c]]
        %v410 = vstv %s409
        %v411 = vmul.f32 %v410, %v376
        %413 = vrot.lane.b32.xlu0 %v411, 64
        %v414 = vpop.permute.xlu0 %413
        %v415 = vrot.slane %v414, 1
        %vm416 = vcmask 523264
        %v417 = vsel %vm416, %v414, %v415
        %v419 = vadd.f32 %v408, %v417
        %s420 = sld [smem:[#allocation3 + $0x23]]
        %v421 = vstv %s420
        %v422 = vmul.f32 %v421, %v376
        %424 = vrot.lane.b32.xlu0 %v422, 48
        %v425 = vpop.permute.xlu0 %424
        %v426 = vrot.slane %v425, 1
        %vm427 = vcmask 392192
        %v428 = vsel %vm427, %v425, %v426
        %v430 = vadd.f32 %v419, %v428
        %s431 = sld [smem:[#allocation3 + $0x2a]]
        %v432 = vstv %s431
        %v433 = vmul.f32 %v432, %v376
        %435 = vrot.lane.b32.xlu0 %v433, 32
        %v436 = vpop.permute.xlu0 %435
        %v437 = vrot.slane %v436, 1
        %vm438 = vcmask 261120
        %v439 = vsel %vm438, %v436, %v437
        %v441 = vadd.f32 %v430, %v439
        %v442 = vld [vmem:[%s3] ss:$8 sm:$0x3]
        %v443 = vmul.f32 %v441, %v442
        %v444 = vadd.f32 %v443, 0.0
        %s445 = sld [smem:[#allocation3 + $0x1]]
        %v446 = vstv %s445
        %v447 = vmul.f32 %v446, %v376
        %v448 = vadd.f32 %v447, 0.0
        %s449 = sld [smem:[#allocation3 + $0x8]]
        %v450 = vstv %s449
        %v451 = vmul.f32 %v450, %v376
        %453 = vrot.lane.b32.xlu0 %v451, 112
        %v454 = vpop.permute.xlu0 %453
        %v455 = vrot.slane %v454, 1
        %v456 = vsel %vm383, %v454, %v455
        %v458 = vadd.f32 %v448, %v456
        %s459 = sld [smem:[#allocation3 + $0xf]]
        %v460 = vstv %s459
        %v461 = vmul.f32 %v460, %v376
        %463 = vrot.lane.b32.xlu0 %v461, 96
        %v464 = vpop.permute.xlu0 %463
        %v465 = vrot.slane %v464, 1
        %v466 = vsel %vm394, %v464, %v465
        %v468 = vadd.f32 %v458, %v466
        %s469 = sld [smem:[#allocation3 + $0x16]]
        %v470 = vstv %s469
        %v471 = vmul.f32 %v470, %v376
        %473 = vrot.lane.b32.xlu0 %v471, 80
        %v474 = vpop.permute.xlu0 %473
        %v475 = vrot.slane %v474, 1
        %v476 = vsel %vm405, %v474, %v475
        %v478 = vadd.f32 %v468, %v476
        %s479 = sld [smem:[#allocation3 + $0x1d]]
        %v480 = vstv %s479
        %v481 = vmul.f32 %v480, %v376
        %483 = vrot.lane.b32.xlu0 %v481, 64
        %v484 = vpop.permute.xlu0 %483
        %v485 = vrot.slane %v484, 1
        %v486 = vsel %vm416, %v484, %v485
        %v488 = vadd.f32 %v478, %v486
        %s489 = sld [smem:[#allocation3 + $0x24]]
        %v490 = vstv %s489
        %v491 = vmul.f32 %v490, %v376
        %493 = vrot.lane.b32.xlu0 %v491, 48
        %v494 = vpop.permute.xlu0 %493
        %v495 = vrot.slane %v494, 1
        %v496 = vsel %vm427, %v494, %v495
        %v498 = vadd.f32 %v488, %v496
        %s499 = sld [smem:[#allocation3 + $0x2b]]
        %v500 = vstv %s499
        %v501 = vmul.f32 %v500, %v376
        %503 = vrot.lane.b32.xlu0 %v501, 32
        %v504 = vpop.permute.xlu0 %503
        %v505 = vrot.slane %v504, 1
        %v506 = vsel %vm438, %v504, %v505
        %v508 = vadd.f32 %v498, %v506
        %s509 = scalar_lea.vmem %s3, 1
        %v510 = vld [vmem:[%s509] ss:$8 sm:$0x3]
        %512 = vrot.lane.b32.xlu0 %v510, 1
        %v513 = vpop.permute.xlu0 %512
        %v514 = vrot.slane %v513, 7
        %vm515 = vcmask 7168
        %v516 = vsel %vm515, %v514, %v513
        %v518 = vmul.f32 %v508, %v516
        %520 = vrot.lane.b32.xlu0 %v518, 127
        %v521 = vpop.permute.xlu0 %520
        %v522 = vrot.slane %v521, 1
        %vm523 = vcmask 1039360
        %v524 = vsel %vm523, %v521, %v522
        %v526 = vadd.f32 %v444, %v524
        %s527 = sld [smem:[#allocation3 + $0x2]]
        %v528 = vstv %s527
        %v529 = vmul.f32 %v528, %v376
        %v530 = vadd.f32 %v529, 0.0
        %s531 = sld [smem:[#allocation3 + $0x9]]
        %v532 = vstv %s531
        %v533 = vmul.f32 %v532, %v376
        %535 = vrot.lane.b32.xlu0 %v533, 112
        %v536 = vpop.permute.xlu0 %535
        %v537 = vrot.slane %v536, 1
        %v538 = vsel %vm383, %v536, %v537
        %v540 = vadd.f32 %v530, %v538
        %s541 = sld [smem:[#allocation3 + $0x10]]
        %v542 = vstv %s541
        %v543 = vmul.f32 %v542, %v376
        %545 = vrot.lane.b32.xlu0 %v543, 96
        %v546 = vpop.permute.xlu0 %545
        %v547 = vrot.slane %v546, 1
        %v548 = vsel %vm394, %v546, %v547
        %v550 = vadd.f32 %v540, %v548
        %s551 = sld [smem:[#allocation3 + $0x17]]
        %v552 = vstv %s551
        %v553 = vmul.f32 %v552, %v376
        %555 = vrot.lane.b32.xlu0 %v553, 80
        %v556 = vpop.permute.xlu0 %555
        %v557 = vrot.slane %v556, 1
        %v558 = vsel %vm405, %v556, %v557
        %v560 = vadd.f32 %v550, %v558
        %s561 = sld [smem:[#allocation3 + $0x1e]]
        %v562 = vstv %s561
        %v563 = vmul.f32 %v562, %v376
        %565 = vrot.lane.b32.xlu0 %v563, 64
        %v566 = vpop.permute.xlu0 %565
        %v567 = vrot.slane %v566, 1
        %v568 = vsel %vm416, %v566, %v567
        %v570 = vadd.f32 %v560, %v568
        %s571 = sld [smem:[#allocation3 + $0x25]]
        %v572 = vstv %s571
        %v573 = vmul.f32 %v572, %v376
        %575 = vrot.lane.b32.xlu0 %v573, 48
        %v576 = vpop.permute.xlu0 %575
        %v577 = vrot.slane %v576, 1
        %v578 = vsel %vm427, %v576, %v577
        %v580 = vadd.f32 %v570, %v578
        %s581 = sld [smem:[#allocation3 + $0x2c]]
        %v582 = vstv %s581
        %v583 = vmul.f32 %v582, %v376
        %585 = vrot.lane.b32.xlu0 %v583, 32
        %v586 = vpop.permute.xlu0 %585
        %v587 = vrot.slane %v586, 1
        %v588 = vsel %vm438, %v586, %v587
        %v590 = vadd.f32 %v580, %v588
        %s591 = scalar_lea.vmem %s3, 2
        %v592 = vld [vmem:[%s591] ss:$8 sm:$0x3]
        %594 = vrot.lane.b32.xlu0 %v592, 2
        %v595 = vpop.permute.xlu0 %594
        %v596 = vrot.slane %v595, 7
        %vm597 = vcmask 15360
        %v598 = vsel %vm597, %v596, %v595
        %v600 = vmul.f32 %v590, %v598
        %602 = vrot.lane.b32.xlu0 %v600, 126
        %v603 = vpop.permute.xlu0 %602
        %v604 = vrot.slane %v603, 1
        %vm605 = vcmask 1031168
        %v606 = vsel %vm605, %v603, %v604
        %v608 = vadd.f32 %v526, %v606
        %s609 = sld [smem:[#allocation3 + $0x3]]
        %v610 = vstv %s609
        %v611 = vmul.f32 %v610, %v376
        %v612 = vadd.f32 %v611, 0.0
        %s613 = sld [smem:[#allocation3 + $0xa]]
        %v614 = vstv %s613
        %v615 = vmul.f32 %v614, %v376
        %617 = vrot.lane.b32.xlu0 %v615, 112
        %v618 = vpop.permute.xlu0 %617
        %v619 = vrot.slane %v618, 1
        %v620 = vsel %vm383, %v618, %v619
        %v622 = vadd.f32 %v612, %v620
        %s623 = sld [smem:[#allocation3 + $0x11]]
        %v624 = vstv %s623
        %v625 = vmul.f32 %v624, %v376
        %627 = vrot.lane.b32.xlu0 %v625, 96
        %v628 = vpop.permute.xlu0 %627
        %v629 = vrot.slane %v628, 1
        %v630 = vsel %vm394, %v628, %v629
        %v632 = vadd.f32 %v622, %v630
        %s633 = sld [smem:[#allocation3 + $0x18]]
        %v634 = vstv %s633
        %v635 = vmul.f32 %v634, %v376
        %637 = vrot.lane.b32.xlu0 %v635, 80
        %v638 = vpop.permute.xlu0 %637
        %v639 = vrot.slane %v638, 1
        %v640 = vsel %vm405, %v638, %v639
        %v642 = vadd.f32 %v632, %v640
        %s643 = sld [smem:[#allocation3 + $0x1f]]
        %v644 = vstv %s643
        %v645 = vmul.f32 %v644, %v376
        %647 = vrot.lane.b32.xlu0 %v645, 64
        %v648 = vpop.permute.xlu0 %647
        %v649 = vrot.slane %v648, 1
        %v650 = vsel %vm416, %v648, %v649
        %v652 = vadd.f32 %v642, %v650
        %s653 = sld [smem:[#allocation3 + $0x26]]
        %v654 = vstv %s653
        %v655 = vmul.f32 %v654, %v376
        %657 = vrot.lane.b32.xlu0 %v655, 48
        %v658 = vpop.permute.xlu0 %657
        %v659 = vrot.slane %v658, 1
        %v660 = vsel %vm427, %v658, %v659
        %v662 = vadd.f32 %v652, %v660
        %s663 = sld [smem:[#allocation3 + $0x2d]]
        %v664 = vstv %s663
        %v665 = vmul.f32 %v664, %v376
        %667 = vrot.lane.b32.xlu0 %v665, 32
        %v668 = vpop.permute.xlu0 %667
        %v669 = vrot.slane %v668, 1
        %v670 = vsel %vm438, %v668, %v669
        %v672 = vadd.f32 %v662, %v670
        %s673 = scalar_lea.vmem %s3, 3
        %v674 = vld [vmem:[%s673] ss:$8 sm:$0x3]
        %676 = vrot.lane.b32.xlu0 %v674, 3
        %v677 = vpop.permute.xlu0 %676
        %v678 = vrot.slane %v677, 7
        %vm679 = vcmask 23552
        %v680 = vsel %vm679, %v678, %v677
        %v682 = vmul.f32 %v672, %v680
        %684 = vrot.lane.b32.xlu0 %v682, 125
        %v685 = vpop.permute.xlu0 %684
        %v686 = vrot.slane %v685, 1
        %vm687 = vcmask 1022976
        %v688 = vsel %vm687, %v685, %v686
        %v690 = vadd.f32 %v608, %v688
        %s691 = sld [smem:[#allocation3 + $0x4]]
        %v692 = vstv %s691
        %v693 = vmul.f32 %v692, %v376
        %v694 = vadd.f32 %v693, 0.0
        %s695 = sld [smem:[#allocation3 + $0xb]]
        %v696 = vstv %s695
        %v697 = vmul.f32 %v696, %v376
        %699 = vrot.lane.b32.xlu0 %v697, 112
        %v700 = vpop.permute.xlu0 %699
        %v701 = vrot.slane %v700, 1
        %v702 = vsel %vm383, %v700, %v701
        %v704 = vadd.f32 %v694, %v702
        %s705 = sld [smem:[#allocation3 + $0x12]]
        %v706 = vstv %s705
        %v707 = vmul.f32 %v706, %v376
        %709 = vrot.lane.b32.xlu0 %v707, 96
        %v710 = vpop.permute.xlu0 %709
        %v711 = vrot.slane %v710, 1
        %v712 = vsel %vm394, %v710, %v711
        %v714 = vadd.f32 %v704, %v712
        %s715 = sld [smem:[#allocation3 + $0x19]]
        %v716 = vstv %s715
        %v717 = vmul.f32 %v716, %v376
        %719 = vrot.lane.b32.xlu0 %v717, 80
        %v720 = vpop.permute.xlu0 %719
        %v721 = vrot.slane %v720, 1
        %v722 = vsel %vm405, %v720, %v721
        %v724 = vadd.f32 %v714, %v722
        %s725 = sld [smem:[#allocation3 + $0x20]]
        %v726 = vstv %s725
        %v727 = vmul.f32 %v726, %v376
        %729 = vrot.lane.b32.xlu0 %v727, 64
        %v730 = vpop.permute.xlu0 %729
        %v731 = vrot.slane %v730, 1
        %v732 = vsel %vm416, %v730, %v731
        %v734 = vadd.f32 %v724, %v732
        %s735 = sld [smem:[#allocation3 + $0x27]]
        %v736 = vstv %s735
        %v737 = vmul.f32 %v736, %v376
        %739 = vrot.lane.b32.xlu0 %v737, 48
        %v740 = vpop.permute.xlu0 %739
        %v741 = vrot.slane %v740, 1
        %v742 = vsel %vm427, %v740, %v741
        %v744 = vadd.f32 %v734, %v742
        %s745 = sld [smem:[#allocation3 + $0x2e]]
        %v746 = vstv %s745
        %v747 = vmul.f32 %v746, %v376
        %749 = vrot.lane.b32.xlu0 %v747, 32
        %v750 = vpop.permute.xlu0 %749
        %v751 = vrot.slane %v750, 1
        %v752 = vsel %vm438, %v750, %v751
        %v754 = vadd.f32 %v744, %v752
        %s755 = scalar_lea.vmem %s3, 4
        %v756 = vld [vmem:[%s755] ss:$8 sm:$0x3]
        %758 = vrot.lane.b32.xlu0 %v756, 4
        %v759 = vpop.permute.xlu0 %758
        %v760 = vrot.slane %v759, 7
        %vm761 = vcmask 31744
        %v762 = vsel %vm761, %v760, %v759
        %v764 = vmul.f32 %v754, %v762
        %766 = vrot.lane.b32.xlu0 %v764, 124
        %v767 = vpop.permute.xlu0 %766
        %v768 = vrot.slane %v767, 1
        %vm769 = vcmask 1014784
        %v770 = vsel %vm769, %v767, %v768
        %v772 = vadd.f32 %v690, %v770
        %s773 = sld [smem:[#allocation3 + $0x5]]
        %v774 = vstv %s773
        %v775 = vmul.f32 %v774, %v376
        %v776 = vadd.f32 %v775, 0.0
        %s777 = sld [smem:[#allocation3 + $0xc]]
        %v778 = vstv %s777
        %v779 = vmul.f32 %v778, %v376
        %781 = vrot.lane.b32.xlu0 %v779, 112
        %v782 = vpop.permute.xlu0 %781
        %v783 = vrot.slane %v782, 1
        %v784 = vsel %vm383, %v782, %v783
        %v786 = vadd.f32 %v776, %v784
        %s787 = sld [smem:[#allocation3 + $0x13]]
        %v788 = vstv %s787
        %v789 = vmul.f32 %v788, %v376
        %791 = vrot.lane.b32.xlu0 %v789, 96
        %v792 = vpop.permute.xlu0 %791
        %v793 = vrot.slane %v792, 1
        %v794 = vsel %vm394, %v792, %v793
        %v796 = vadd.f32 %v786, %v794
        %s797 = sld [smem:[#allocation3 + $0x1a]]
        %v798 = vstv %s797
        %v799 = vmul.f32 %v798, %v376
        %801 = vrot.lane.b32.xlu0 %v799, 80
        %v802 = vpop.permute.xlu0 %801
        %v803 = vrot.slane %v802, 1
        %v804 = vsel %vm405, %v802, %v803
        %v806 = vadd.f32 %v796, %v804
        %s807 = sld [smem:[#allocation3 + $0x21]]
        %v808 = vstv %s807
        %v809 = vmul.f32 %v808, %v376
        %811 = vrot.lane.b32.xlu0 %v809, 64
        %v812 = vpop.permute.xlu0 %811
        %v813 = vrot.slane %v812, 1
        %v814 = vsel %vm416, %v812, %v813
        %v816 = vadd.f32 %v806, %v814
        %s817 = sld [smem:[#allocation3 + $0x28]]
        %v818 = vstv %s817
        %v819 = vmul.f32 %v818, %v376
        %821 = vrot.lane.b32.xlu0 %v819, 48
        %v822 = vpop.permute.xlu0 %821
        %v823 = vrot.slane %v822, 1
        %v824 = vsel %vm427, %v822, %v823
        %v826 = vadd.f32 %v816, %v824
        %s827 = sld [smem:[#allocation3 + $0x2f]]
        %v828 = vstv %s827
        %v829 = vmul.f32 %v828, %v376
        %831 = vrot.lane.b32.xlu0 %v829, 32
        %v832 = vpop.permute.xlu0 %831
        %v833 = vrot.slane %v832, 1
        %v834 = vsel %vm438, %v832, %v833
        %v836 = vadd.f32 %v826, %v834
        %s837 = scalar_lea.vmem %s3, 5
        %v838 = vld [vmem:[%s837] ss:$8 sm:$0x3]
        %840 = vrot.lane.b32.xlu0 %v838, 5
        %v841 = vpop.permute.xlu0 %840
        %v842 = vrot.slane %v841, 7
        %vm843 = vcmask 39936
        %v844 = vsel %vm843, %v842, %v841
        %v846 = vmul.f32 %v836, %v844
        %848 = vrot.lane.b32.xlu0 %v846, 123
        %v849 = vpop.permute.xlu0 %848
        %v850 = vrot.slane %v849, 1
        %vm851 = vcmask 1006592
        %v852 = vsel %vm851, %v849, %v850
        %v854 = vadd.f32 %v772, %v852
        %s855 = sld [smem:[#allocation3 + $0x6]]
        %v856 = vstv %s855
        %v857 = vmul.f32 %v856, %v376
        %v858 = vadd.f32 %v857, 0.0
        %s859 = sld [smem:[#allocation3 + $0xd]]
        %v860 = vstv %s859
        %v861 = vmul.f32 %v860, %v376
        %863 = vrot.lane.b32.xlu0 %v861, 112
        %v864 = vpop.permute.xlu0 %863
        %v865 = vrot.slane %v864, 1
        %v866 = vsel %vm383, %v864, %v865
        %v868 = vadd.f32 %v858, %v866
        %s869 = sld [smem:[#allocation3 + $0x14]]
        %v870 = vstv %s869
        %v871 = vmul.f32 %v870, %v376
        %873 = vrot.lane.b32.xlu0 %v871, 96
        %v874 = vpop.permute.xlu0 %873
        %v875 = vrot.slane %v874, 1
        %v876 = vsel %vm394, %v874, %v875
        %v878 = vadd.f32 %v868, %v876
        %s879 = sld [smem:[#allocation3 + $0x1b]]
        %v880 = vstv %s879
        %v881 = vmul.f32 %v880, %v376
        %883 = vrot.lane.b32.xlu0 %v881, 80
        %v884 = vpop.permute.xlu0 %883
        %v885 = vrot.slane %v884, 1
        %v886 = vsel %vm405, %v884, %v885
        %v888 = vadd.f32 %v878, %v886
        %s889 = sld [smem:[#allocation3 + $0x22]]
        %v890 = vstv %s889
        %v891 = vmul.f32 %v890, %v376
        %893 = vrot.lane.b32.xlu0 %v891, 64
        %v894 = vpop.permute.xlu0 %893
        %v895 = vrot.slane %v894, 1
        %v896 = vsel %vm416, %v894, %v895
        %v898 = vadd.f32 %v888, %v896
        %s899 = sld [smem:[#allocation3 + $0x29]]
        %v900 = vstv %s899
        %v901 = vmul.f32 %v900, %v376
        %903 = vrot.lane.b32.xlu0 %v901, 48
        %v904 = vpop.permute.xlu0 %903
        %v905 = vrot.slane %v904, 1
        %v906 = vsel %vm427, %v904, %v905
        %v908 = vadd.f32 %v898, %v906
        %s909 = sld [smem:[#allocation3 + $0x30]]
        %v910 = vstv %s909
        %v911 = vmul.f32 %v910, %v376
        %913 = vrot.lane.b32.xlu0 %v911, 32
        %v914 = vpop.permute.xlu0 %913
        %v915 = vrot.slane %v914, 1
        %v916 = vsel %vm438, %v914, %v915
        %v918 = vadd.f32 %v908, %v916
        %s919 = scalar_lea.vmem %s3, 6
        %v920 = vld [vmem:[%s919] ss:$8 sm:$0x3]
        %922 = vrot.lane.b32.xlu0 %v920, 6
        %v923 = vpop.permute.xlu0 %922
        %v924 = vrot.slane %v923, 7
        %vm925 = vcmask 48128
        %v926 = vsel %vm925, %v924, %v923
        %v928 = vmul.f32 %v918, %v926
        %930 = vrot.lane.b32.xlu0 %v928, 122
        %v931 = vpop.permute.xlu0 %930
        %v932 = vrot.slane %v931, 1
        %vm933 = vcmask 998400
        %v934 = vsel %vm933, %v931, %v932
        %v936 = vadd.f32 %v854, %v934
        %v937 = vsub.f32 0.0, %v936
        %v938 = vmul.f32 %v937, 1.442695
        %v939 = vpow.pop %v938
        %v940 = vadd.f32 %v939, 1.0
        %v941 = vrcp.pop %v940
        %v942 = vmul.f32 %v305, %v941
        %v944 = vlaneseq
        %v945 = vshrl.u32 %v944, 7
        %v946 = vsub.s32 0, %v945
        %v947 = vrot.slane %v942, %v946
        %v948 = vlaneseq
        %v949 = vshrl.u32 %v948, 7
        %v950 = vsub.s32 1, %v949
        %v951 = vrot.slane %v942, %v950
        %v954 = vmul.f32 %v289, %v947
        %v955 = vmul.f32 %v290, %v951
        %v956 = vmul.f32 %v291, %v947
        %v957 = vmul.f32 %v292, %v951
        %v958 = vmul.f32 %v293, %v947
        %v959 = vmul.f32 %v294, %v951
        %v960 = vmul.f32 %v295, %v947
        %v961 = vmul.f32 %v296, %v951
        %v962 = vmax.f32 %v954, %v955
        %963 = vmax.xlane.f32.xlu0 %v962
        %v964 = vpop.xlane.xlu0 %963
        %v965 = vmax.f32 %v956, %v957
        %966 = vmax.xlane.f32.xlu0 %v965
        %v967 = vpop.xlane.xlu0 %966
        %v968 = vmax.f32 %v958, %v959
        %969 = vmax.xlane.f32.xlu0 %v968
        %v970 = vpop.xlane.xlu0 %969
        %v971 = vmax.f32 %v960, %v961
        %972 = vmax.xlane.f32.xlu0 %v971
        %v973 = vpop.xlane.xlu0 %972
        %v974 = vld [vmem:[%s4] sm:$0xff]
        %v975 = vld [vmem:[%s4 + $0x8] sm:$0xff]
        %v976 = vld [vmem:[%s4 + $0x10] sm:$0xff]
        %v977 = vld [vmem:[%s4 + $0x18] sm:$0xff]
        %v978 = vmul.f32 %v974, %v964
        %v979 = vmul.f32 %v975, %v967
        %v980 = vmul.f32 %v976, %v970
        %v981 = vmul.f32 %v977, %v973
        %v982 = vsel %vm515, %v978, 0.0
        %v983 = vsel %vm515, %v979, 0.0
        %v984 = vadd.f32 %v982, %v983
        %v985 = vsel %vm515, %v980, 0.0
        %v986 = vadd.f32 %v984, %v985
        %v987 = vsel %vm515, %v981, 0.0
        %v988 = vadd.f32 %v986, %v987
        %989 = vadd.xlane.f32.xlu0 %v988
        %v990 = vpop.xlane.xlu0 %989
        %v991 = vrot.slane %v990, 4
        %v992 = vadd.f32 %v990, %v991
        %v993 = vrot.slane %v992, 2
        %v994 = vadd.f32 %v992, %v993
        %v995 = vrot.slane %v994, 1
        %v996 = vadd.f32 %v994, %v995
        %s997 = vtos %v996
        %v998 = vstv %s997
        %v999 = vmax.f32 %v998, 0.0
        %s1000 = scalar_lea.vmem %s4, 32
        %v1001 = vld [vmem:[%s1000] sm:$0xff]
        %v1002 = vld [vmem:[%s1000 + $0x8] sm:$0xff]
        %v1003 = vld [vmem:[%s1000 + $0x10] sm:$0xff]
        %v1004 = vld [vmem:[%s1000 + $0x18] sm:$0xff]
        %v1005 = vmul.f32 %v1001, %v964
        %v1006 = vmul.f32 %v1002, %v967
        %v1007 = vmul.f32 %v1003, %v970
        %v1008 = vmul.f32 %v1004, %v973
        %v1009 = vsel %vm515, %v1005, 0.0
        %v1010 = vsel %vm515, %v1006, 0.0
        %v1011 = vadd.f32 %v1009, %v1010
        %v1012 = vsel %vm515, %v1007, 0.0
        %v1013 = vadd.f32 %v1011, %v1012
        %v1014 = vsel %vm515, %v1008, 0.0
        %v1015 = vadd.f32 %v1013, %v1014
        %1016 = vadd.xlane.f32.xlu0 %v1015
        %v1017 = vpop.xlane.xlu0 %1016
        %v1018 = vrot.slane %v1017, 4
        %v1019 = vadd.f32 %v1017, %v1018
        %v1020 = vrot.slane %v1019, 2
        %v1021 = vadd.f32 %v1019, %v1020
        %v1022 = vrot.slane %v1021, 1
        %v1023 = vadd.f32 %v1021, %v1022
        %s1024 = vtos %v1023
        %v1025 = vstv %s1024
        %v1026 = vmax.f32 %v1025, 0.0
        %v1027 = vld [vmem:[%s5] sm:$0xff]
        %v1028 = vld [vmem:[%s5 + $0x8] sm:$0xff]
        %v1029 = vld [vmem:[%s5 + $0x10] sm:$0xff]
        %v1030 = vld [vmem:[%s5 + $0x18] sm:$0xff]
        %v1031 = vmul.f32 %v1027, %v999
        %v1032 = vmul.f32 %v1028, %v999
        %v1033 = vmul.f32 %v1029, %v999
        %v1034 = vmul.f32 %v1030, %v999
        %s1035 = scalar_lea.vmem %s5, 32
        %v1036 = vld [vmem:[%s1035] sm:$0xff]
        %v1037 = vld [vmem:[%s1035 + $0x8] sm:$0xff]
        %v1038 = vld [vmem:[%s1035 + $0x10] sm:$0xff]
        %v1039 = vld [vmem:[%s1035 + $0x18] sm:$0xff]
        %v1040 = vmul.f32 %v1036, %v1026
        %v1041 = vmul.f32 %v1037, %v1026
        %v1042 = vmul.f32 %v1038, %v1026
        %v1043 = vmul.f32 %v1039, %v1026
        %v1044 = vadd.f32 %v1031, %v1040
        %v1045 = vadd.f32 %v1032, %v1041
        %v1046 = vadd.f32 %v1033, %v1042
        %v1047 = vadd.f32 %v1034, %v1043
        %v1048 = vsub.f32 0.0, %v1044
        %v1049 = vsub.f32 0.0, %v1045
        %v1050 = vsub.f32 0.0, %v1046
        %v1051 = vsub.f32 0.0, %v1047
        %v1052 = vmul.f32 %v1048, 1.442695
        %v1053 = vpow.pop %v1052
        %v1054 = vmul.f32 %v1049, 1.442695
        %v1055 = vpow.pop %v1054
        %v1056 = vmul.f32 %v1050, 1.442695
        %v1057 = vpow.pop %v1056
        %v1058 = vmul.f32 %v1051, 1.442695
        %v1059 = vpow.pop %v1058
        %v1060 = vadd.f32 %v1053, 1.0
        %v1061 = vadd.f32 %v1055, 1.0
        %v1062 = vadd.f32 %v1057, 1.0
        %v1063 = vadd.f32 %v1059, 1.0
        %v1064 = vrcp.pop %v1060
        %v1065 = vrcp.pop %v1061
        %v1066 = vrcp.pop %v1062
        %v1067 = vrcp.pop %v1063
        %v1068 = vld [vmem:[%s273] sm:$0xff]
        %v1069 = vld [vmem:[%s273 + $0x8] sm:$0xff]
        %v1070 = vld [vmem:[%s273 + $0x10] sm:$0xff]
        %v1071 = vld [vmem:[%s273 + $0x18] sm:$0xff]
        %v1072 = vld [vmem:[%s273 + $0x20] sm:$0xff]
        %v1073 = vld [vmem:[%s273 + $0x28] sm:$0xff]
        %v1074 = vld [vmem:[%s273 + $0x30] sm:$0xff]
        %v1075 = vld [vmem:[%s273 + $0x38] sm:$0xff]
        %1077 = vset.pattern.permute.xlu0 0
        %1078 = vperm.xlu0 %1077, %v1064
        %v1079 = vpop.permute.xlu0 %1078
        %1082 = vset.pattern.permute.xlu0 0
        %1083 = vperm.xlu0 %1082, %v1065
        %v1084 = vpop.permute.xlu0 %1083
        %1087 = vset.pattern.permute.xlu0 0
        %1088 = vperm.xlu0 %1087, %v1066
        %v1089 = vpop.permute.xlu0 %1088
        %1092 = vset.pattern.permute.xlu0 0
        %1093 = vperm.xlu0 %1092, %v1067
        %v1094 = vpop.permute.xlu0 %1093
        %v1096 = vmul.f32 %v954, %v1079
        %v1097 = vmul.f32 %v955, %v1079
        %v1098 = vmul.f32 %v956, %v1084
        %v1099 = vmul.f32 %v957, %v1084
        %v1100 = vmul.f32 %v958, %v1089
        %v1101 = vmul.f32 %v959, %v1089
        %v1102 = vmul.f32 %v960, %v1094
        %v1103 = vmul.f32 %v961, %v1094
        %v1104 = vadd.f32 %v1068, %v1096
        %v1105 = vadd.f32 %v1069, %v1097
        %v1106 = vadd.f32 %v1070, %v1098
        %v1107 = vadd.f32 %v1071, %v1099
        %v1108 = vadd.f32 %v1072, %v1100
        %v1109 = vadd.f32 %v1073, %v1101
        %v1110 = vadd.f32 %v1074, %v1102
        %v1111 = vadd.f32 %v1075, %v1103
        %1112 = vst [vmem:[%s273] sm:$0xff] %v1104
        %1113 = vst [vmem:[%s273 + $0x8] sm:$0xff] %v1105
        %1114 = vst [vmem:[%s273 + $0x10] sm:$0xff] %v1106
        %1115 = vst [vmem:[%s273 + $0x18] sm:$0xff] %v1107
        %1116 = vst [vmem:[%s273 + $0x20] sm:$0xff] %v1108
        %1117 = vst [vmem:[%s273 + $0x28] sm:$0xff] %v1109
        %1118 = vst [vmem:[%s273 + $0x30] sm:$0xff] %v1110
        %1119 = vst [vmem:[%s273 + $0x38] sm:$0xff] %v1111
        %s1120 = scalar_lea.vmem %s283, 1
        %v1121 = vld [vmem:[%s1120] ss:$4 sm:$0x3]
        %v1123 = vlaneseq
        %v1124 = vshrl.u32 %v1123, 7
        %v1125 = vsub.s32 0, %v1124
        %v1126 = vrot.slane %v1121, %v1125
        %v1127 = vlaneseq
        %v1128 = vshrl.u32 %v1127, 7
        %v1129 = vsub.s32 1, %v1128
        %v1130 = vrot.slane %v1121, %v1129
        %v1133 = vmul.f32 %v289, %v1126
        %v1134 = vmul.f32 %v290, %v1130
        %v1135 = vmul.f32 %v291, %v1126
        %v1136 = vmul.f32 %v292, %v1130
        %v1137 = vmul.f32 %v293, %v1126
        %v1138 = vmul.f32 %v294, %v1130
        %v1139 = vmul.f32 %v295, %v1126
        %v1140 = vmul.f32 %v296, %v1130
        %v1141 = vmax.f32 %v1133, %v1137
        %v1142 = vmax.f32 %v1135, %v1139
        %v1143 = vmax.f32 %v1141, %v1142
        %v1144 = vrot.slane %v1143, 4
        %v1145 = vmax.f32 %v1143, %v1144
        %v1146 = vrot.slane %v1145, 2
        %v1147 = vmax.f32 %v1145, %v1146
        %v1148 = vrot.slane %v1147, 1
        %v1149 = vmax.f32 %v1147, %v1148
        %v1150 = vmax.f32 %v1134, %v1138
        %v1151 = vmax.f32 %v1136, %v1140
        %v1152 = vmax.f32 %v1150, %v1151
        %v1153 = vrot.slane %v1152, 4
        %v1154 = vmax.f32 %v1152, %v1153
        %v1155 = vrot.slane %v1154, 2
        %v1156 = vmax.f32 %v1154, %v1155
        %v1157 = vrot.slane %v1156, 1
        %v1158 = vmax.f32 %v1156, %v1157
        %v1161 = vcombine.low %v1149, %v1158
        %v1163 = vunpack.c.l.s4 1966171168
        %v1164 = vunpack.c.0.s8 %v1163
        %v1165 = vlaneseq
        %v1166 = vshrl.u32 %v1165, 7
        %v1167 = vsub.s32 %v1164, %v1166
        %v1168 = vrot.slane %v1161, %v1167
        %v1170 = vunpack.c.l.s4 1966171168
        %v1171 = vunpack.c.0.s8 %v1170
        %v1172 = vlaneseq
        %v1173 = vshrl.u32 %v1172, 7
        %v1174 = vsub.s32 %v1171, %v1173
        %v1175 = vrot.slane %v1168, %v1174
        %1176 = vrot.lane.b32.xlu0 %v1175, 51
        %v1177 = vpop.permute.xlu0 %1176
        %v1178 = vrot.slane %v1177, 7
        %v1179 = vsel %vm363, %v1178, %v1177
        %1181 = vst.msk [vmem:[#allocation2] sm:$0x7] %vm368, %v1179
        %s1182 = sld [smem:[#allocation3 + $0x31]]
        %v1183 = vld [vmem:[#allocation2] sm:$0x3]
        %v1184 = vstv %s1182
        %v1185 = vmul.f32 %v1184, %v1183
        %v1186 = vadd.f32 %v1185, 0.0
        %s1187 = sld [smem:[#allocation3 + $0x38]]
        %v1188 = vld [vmem:[#allocation2] sm:$0x7]
        %v1189 = vstv %s1187
        %v1190 = vmul.f32 %v1189, %v1188
        %1192 = vrot.lane.b32.xlu0 %v1190, 112
        %v1193 = vpop.permute.xlu0 %1192
        %v1194 = vrot.slane %v1193, 1
        %v1195 = vsel %vm383, %v1193, %v1194
        %v1197 = vadd.f32 %v1186, %v1195
        %s1198 = sld [smem:[#allocation3 + $0x3f]]
        %v1199 = vstv %s1198
        %v1200 = vmul.f32 %v1199, %v1188
        %1202 = vrot.lane.b32.xlu0 %v1200, 96
        %v1203 = vpop.permute.xlu0 %1202
        %v1204 = vrot.slane %v1203, 1
        %v1205 = vsel %vm394, %v1203, %v1204
        %v1207 = vadd.f32 %v1197, %v1205
        %s1208 = sld [smem:[#allocation3 + $0x46]]
        %v1209 = vstv %s1208
        %v1210 = vmul.f32 %v1209, %v1188
        %1212 = vrot.lane.b32.xlu0 %v1210, 80
        %v1213 = vpop.permute.xlu0 %1212
        %v1214 = vrot.slane %v1213, 1
        %v1215 = vsel %vm405, %v1213, %v1214
        %v1217 = vadd.f32 %v1207, %v1215
        %s1218 = sld [smem:[#allocation3 + $0x4d]]
        %v1219 = vstv %s1218
        %v1220 = vmul.f32 %v1219, %v1188
        %1222 = vrot.lane.b32.xlu0 %v1220, 64
        %v1223 = vpop.permute.xlu0 %1222
        %v1224 = vrot.slane %v1223, 1
        %v1225 = vsel %vm416, %v1223, %v1224
        %v1227 = vadd.f32 %v1217, %v1225
        %s1228 = sld [smem:[#allocation3 + $0x54]]
        %v1229 = vstv %s1228
        %v1230 = vmul.f32 %v1229, %v1188
        %1232 = vrot.lane.b32.xlu0 %v1230, 48
        %v1233 = vpop.permute.xlu0 %1232
        %v1234 = vrot.slane %v1233, 1
        %v1235 = vsel %vm427, %v1233, %v1234
        %v1237 = vadd.f32 %v1227, %v1235
        %s1238 = sld [smem:[#allocation3 + $0x5b]]
        %v1239 = vstv %s1238
        %v1240 = vmul.f32 %v1239, %v1188
        %1242 = vrot.lane.b32.xlu0 %v1240, 32
        %v1243 = vpop.permute.xlu0 %1242
        %v1244 = vrot.slane %v1243, 1
        %v1245 = vsel %vm438, %v1243, %v1244
        %v1247 = vadd.f32 %v1237, %v1245
        %v1248 = vld [vmem:[%s3] ss:$8 sm:$0x3]
        %v1249 = vmul.f32 %v1247, %v1248
        %v1250 = vadd.f32 %v1249, 0.0
        %s1251 = sld [smem:[#allocation3 + $0x32]]
        %v1252 = vstv %s1251
        %v1253 = vmul.f32 %v1252, %v1188
        %v1254 = vadd.f32 %v1253, 0.0
        %s1255 = sld [smem:[#allocation3 + $0x39]]
        %v1256 = vstv %s1255
        %v1257 = vmul.f32 %v1256, %v1188
        %1259 = vrot.lane.b32.xlu0 %v1257, 112
        %v1260 = vpop.permute.xlu0 %1259
        %v1261 = vrot.slane %v1260, 1
        %v1262 = vsel %vm383, %v1260, %v1261
        %v1264 = vadd.f32 %v1254, %v1262
        %s1265 = sld [smem:[#allocation3 + $0x40]]
        %v1266 = vstv %s1265
        %v1267 = vmul.f32 %v1266, %v1188
        %1269 = vrot.lane.b32.xlu0 %v1267, 96
        %v1270 = vpop.permute.xlu0 %1269
        %v1271 = vrot.slane %v1270, 1
        %v1272 = vsel %vm394, %v1270, %v1271
        %v1274 = vadd.f32 %v1264, %v1272
        %s1275 = sld [smem:[#allocation3 + $0x47]]
        %v1276 = vstv %s1275
        %v1277 = vmul.f32 %v1276, %v1188
        %1279 = vrot.lane.b32.xlu0 %v1277, 80
        %v1280 = vpop.permute.xlu0 %1279
        %v1281 = vrot.slane %v1280, 1
        %v1282 = vsel %vm405, %v1280, %v1281
        %v1284 = vadd.f32 %v1274, %v1282
        %s1285 = sld [smem:[#allocation3 + $0x4e]]
        %v1286 = vstv %s1285
        %v1287 = vmul.f32 %v1286, %v1188
        %1289 = vrot.lane.b32.xlu0 %v1287, 64
        %v1290 = vpop.permute.xlu0 %1289
        %v1291 = vrot.slane %v1290, 1
        %v1292 = vsel %vm416, %v1290, %v1291
        %v1294 = vadd.f32 %v1284, %v1292
        %s1295 = sld [smem:[#allocation3 + $0x55]]
        %v1296 = vstv %s1295
        %v1297 = vmul.f32 %v1296, %v1188
        %1299 = vrot.lane.b32.xlu0 %v1297, 48
        %v1300 = vpop.permute.xlu0 %1299
        %v1301 = vrot.slane %v1300, 1
        %v1302 = vsel %vm427, %v1300, %v1301
        %v1304 = vadd.f32 %v1294, %v1302
        %s1305 = sld [smem:[#allocation3 + $0x5c]]
        %v1306 = vstv %s1305
        %v1307 = vmul.f32 %v1306, %v1188
        %1309 = vrot.lane.b32.xlu0 %v1307, 32
        %v1310 = vpop.permute.xlu0 %1309
        %v1311 = vrot.slane %v1310, 1
        %v1312 = vsel %vm438, %v1310, %v1311
        %v1314 = vadd.f32 %v1304, %v1312
        %v1315 = vld [vmem:[%s509] ss:$8 sm:$0x3]
        %1317 = vrot.lane.b32.xlu0 %v1315, 1
        %v1318 = vpop.permute.xlu0 %1317
        %v1319 = vrot.slane %v1318, 7
        %v1320 = vsel %vm515, %v1319, %v1318
        %v1322 = vmul.f32 %v1314, %v1320
        %1324 = vrot.lane.b32.xlu0 %v1322, 127
        %v1325 = vpop.permute.xlu0 %1324
        %v1326 = vrot.slane %v1325, 1
        %v1327 = vsel %vm523, %v1325, %v1326
        %v1329 = vadd.f32 %v1250, %v1327
        %s1330 = sld [smem:[#allocation3 + $0x33]]
        %v1331 = vstv %s1330
        %v1332 = vmul.f32 %v1331, %v1188
        %v1333 = vadd.f32 %v1332, 0.0
        %s1334 = sld [smem:[#allocation3 + $0x3a]]
        %v1335 = vstv %s1334
        %v1336 = vmul.f32 %v1335, %v1188
        %1338 = vrot.lane.b32.xlu0 %v1336, 112
        %v1339 = vpop.permute.xlu0 %1338
        %v1340 = vrot.slane %v1339, 1
        %v1341 = vsel %vm383, %v1339, %v1340
        %v1343 = vadd.f32 %v1333, %v1341
        %s1344 = sld [smem:[#allocation3 + $0x41]]
        %v1345 = vstv %s1344
        %v1346 = vmul.f32 %v1345, %v1188
        %1348 = vrot.lane.b32.xlu0 %v1346, 96
        %v1349 = vpop.permute.xlu0 %1348
        %v1350 = vrot.slane %v1349, 1
        %v1351 = vsel %vm394, %v1349, %v1350
        %v1353 = vadd.f32 %v1343, %v1351
        %s1354 = sld [smem:[#allocation3 + $0x48]]
        %v1355 = vstv %s1354
        %v1356 = vmul.f32 %v1355, %v1188
        %1358 = vrot.lane.b32.xlu0 %v1356, 80
        %v1359 = vpop.permute.xlu0 %1358
        %v1360 = vrot.slane %v1359, 1
        %v1361 = vsel %vm405, %v1359, %v1360
        %v1363 = vadd.f32 %v1353, %v1361
        %s1364 = sld [smem:[#allocation3 + $0x4f]]
        %v1365 = vstv %s1364
        %v1366 = vmul.f32 %v1365, %v1188
        %1368 = vrot.lane.b32.xlu0 %v1366, 64
        %v1369 = vpop.permute.xlu0 %1368
        %v1370 = vrot.slane %v1369, 1
        %v1371 = vsel %vm416, %v1369, %v1370
        %v1373 = vadd.f32 %v1363, %v1371
        %s1374 = sld [smem:[#allocation3 + $0x56]]
        %v1375 = vstv %s1374
        %v1376 = vmul.f32 %v1375, %v1188
        %1378 = vrot.lane.b32.xlu0 %v1376, 48
        %v1379 = vpop.permute.xlu0 %1378
        %v1380 = vrot.slane %v1379, 1
        %v1381 = vsel %vm427, %v1379, %v1380
        %v1383 = vadd.f32 %v1373, %v1381
        %s1384 = sld [smem:[#allocation3 + $0x5d]]
        %v1385 = vstv %s1384
        %v1386 = vmul.f32 %v1385, %v1188
        %1388 = vrot.lane.b32.xlu0 %v1386, 32
        %v1389 = vpop.permute.xlu0 %1388
        %v1390 = vrot.slane %v1389, 1
        %v1391 = vsel %vm438, %v1389, %v1390
        %v1393 = vadd.f32 %v1383, %v1391
        %v1394 = vld [vmem:[%s591] ss:$8 sm:$0x3]
        %1396 = vrot.lane.b32.xlu0 %v1394, 2
        %v1397 = vpop.permute.xlu0 %1396
        %v1398 = vrot.slane %v1397, 7
        %v1399 = vsel %vm597, %v1398, %v1397
        %v1401 = vmul.f32 %v1393, %v1399
        %1403 = vrot.lane.b32.xlu0 %v1401, 126
        %v1404 = vpop.permute.xlu0 %1403
        %v1405 = vrot.slane %v1404, 1
        %v1406 = vsel %vm605, %v1404, %v1405
        %v1408 = vadd.f32 %v1329, %v1406
        %s1409 = sld [smem:[#allocation3 + $0x34]]
        %v1410 = vstv %s1409
        %v1411 = vmul.f32 %v1410, %v1188
        %v1412 = vadd.f32 %v1411, 0.0
        %s1413 = sld [smem:[#allocation3 + $0x3b]]
        %v1414 = vstv %s1413
        %v1415 = vmul.f32 %v1414, %v1188
        %1417 = vrot.lane.b32.xlu0 %v1415, 112
        %v1418 = vpop.permute.xlu0 %1417
        %v1419 = vrot.slane %v1418, 1
        %v1420 = vsel %vm383, %v1418, %v1419
        %v1422 = vadd.f32 %v1412, %v1420
        %s1423 = sld [smem:[#allocation3 + $0x42]]
        %v1424 = vstv %s1423
        %v1425 = vmul.f32 %v1424, %v1188
        %1427 = vrot.lane.b32.xlu0 %v1425, 96
        %v1428 = vpop.permute.xlu0 %1427
        %v1429 = vrot.slane %v1428, 1
        %v1430 = vsel %vm394, %v1428, %v1429
        %v1432 = vadd.f32 %v1422, %v1430
        %s1433 = sld [smem:[#allocation3 + $0x49]]
        %v1434 = vstv %s1433
        %v1435 = vmul.f32 %v1434, %v1188
        %1437 = vrot.lane.b32.xlu0 %v1435, 80
        %v1438 = vpop.permute.xlu0 %1437
        %v1439 = vrot.slane %v1438, 1
        %v1440 = vsel %vm405, %v1438, %v1439
        %v1442 = vadd.f32 %v1432, %v1440
        %s1443 = sld [smem:[#allocation3 + $0x50]]
        %v1444 = vstv %s1443
        %v1445 = vmul.f32 %v1444, %v1188
        %1447 = vrot.lane.b32.xlu0 %v1445, 64
        %v1448 = vpop.permute.xlu0 %1447
        %v1449 = vrot.slane %v1448, 1
        %v1450 = vsel %vm416, %v1448, %v1449
        %v1452 = vadd.f32 %v1442, %v1450
        %s1453 = sld [smem:[#allocation3 + $0x57]]
        %v1454 = vstv %s1453
        %v1455 = vmul.f32 %v1454, %v1188
        %1457 = vrot.lane.b32.xlu0 %v1455, 48
        %v1458 = vpop.permute.xlu0 %1457
        %v1459 = vrot.slane %v1458, 1
        %v1460 = vsel %vm427, %v1458, %v1459
        %v1462 = vadd.f32 %v1452, %v1460
        %s1463 = sld [smem:[#allocation3 + $0x5e]]
        %v1464 = vstv %s1463
        %v1465 = vmul.f32 %v1464, %v1188
        %1467 = vrot.lane.b32.xlu0 %v1465, 32
        %v1468 = vpop.permute.xlu0 %1467
        %v1469 = vrot.slane %v1468, 1
        %v1470 = vsel %vm438, %v1468, %v1469
        %v1472 = vadd.f32 %v1462, %v1470
        %v1473 = vld [vmem:[%s673] ss:$8 sm:$0x3]
        %1475 = vrot.lane.b32.xlu0 %v1473, 3
        %v1476 = vpop.permute.xlu0 %1475
        %v1477 = vrot.slane %v1476, 7
        %v1478 = vsel %vm679, %v1477, %v1476
        %v1480 = vmul.f32 %v1472, %v1478
        %1482 = vrot.lane.b32.xlu0 %v1480, 125
        %v1483 = vpop.permute.xlu0 %1482
        %v1484 = vrot.slane %v1483, 1
        %v1485 = vsel %vm687, %v1483, %v1484
        %v1487 = vadd.f32 %v1408, %v1485
        %s1488 = sld [smem:[#allocation3 + $0x35]]
        %v1489 = vstv %s1488
        %v1490 = vmul.f32 %v1489, %v1188
        %v1491 = vadd.f32 %v1490, 0.0
        %s1492 = sld [smem:[#allocation3 + $0x3c]]
        %v1493 = vstv %s1492
        %v1494 = vmul.f32 %v1493, %v1188
        %1496 = vrot.lane.b32.xlu0 %v1494, 112
        %v1497 = vpop.permute.xlu0 %1496
        %v1498 = vrot.slane %v1497, 1
        %v1499 = vsel %vm383, %v1497, %v1498
        %v1501 = vadd.f32 %v1491, %v1499
        %s1502 = sld [smem:[#allocation3 + $0x43]]
        %v1503 = vstv %s1502
        %v1504 = vmul.f32 %v1503, %v1188
        %1506 = vrot.lane.b32.xlu0 %v1504, 96
        %v1507 = vpop.permute.xlu0 %1506
        %v1508 = vrot.slane %v1507, 1
        %v1509 = vsel %vm394, %v1507, %v1508
        %v1511 = vadd.f32 %v1501, %v1509
        %s1512 = sld [smem:[#allocation3 + $0x4a]]
        %v1513 = vstv %s1512
        %v1514 = vmul.f32 %v1513, %v1188
        %1516 = vrot.lane.b32.xlu0 %v1514, 80
        %v1517 = vpop.permute.xlu0 %1516
        %v1518 = vrot.slane %v1517, 1
        %v1519 = vsel %vm405, %v1517, %v1518
        %v1521 = vadd.f32 %v1511, %v1519
        %s1522 = sld [smem:[#allocation3 + $0x51]]
        %v1523 = vstv %s1522
        %v1524 = vmul.f32 %v1523, %v1188
        %1526 = vrot.lane.b32.xlu0 %v1524, 64
        %v1527 = vpop.permute.xlu0 %1526
        %v1528 = vrot.slane %v1527, 1
        %v1529 = vsel %vm416, %v1527, %v1528
        %v1531 = vadd.f32 %v1521, %v1529
        %s1532 = sld [smem:[#allocation3 + $0x58]]
        %v1533 = vstv %s1532
        %v1534 = vmul.f32 %v1533, %v1188
        %1536 = vrot.lane.b32.xlu0 %v1534, 48
        %v1537 = vpop.permute.xlu0 %1536
        %v1538 = vrot.slane %v1537, 1
        %v1539 = vsel %vm427, %v1537, %v1538
        %v1541 = vadd.f32 %v1531, %v1539
        %s1542 = sld [smem:[#allocation3 + $0x5f]]
        %v1543 = vstv %s1542
        %v1544 = vmul.f32 %v1543, %v1188
        %1546 = vrot.lane.b32.xlu0 %v1544, 32
        %v1547 = vpop.permute.xlu0 %1546
        %v1548 = vrot.slane %v1547, 1
        %v1549 = vsel %vm438, %v1547, %v1548
        %v1551 = vadd.f32 %v1541, %v1549
        %v1552 = vld [vmem:[%s755] ss:$8 sm:$0x3]
        %1554 = vrot.lane.b32.xlu0 %v1552, 4
        %v1555 = vpop.permute.xlu0 %1554
        %v1556 = vrot.slane %v1555, 7
        %v1557 = vsel %vm761, %v1556, %v1555
        %v1559 = vmul.f32 %v1551, %v1557
        %1561 = vrot.lane.b32.xlu0 %v1559, 124
        %v1562 = vpop.permute.xlu0 %1561
        %v1563 = vrot.slane %v1562, 1
        %v1564 = vsel %vm769, %v1562, %v1563
        %v1566 = vadd.f32 %v1487, %v1564
        %s1567 = sld [smem:[#allocation3 + $0x36]]
        %v1568 = vstv %s1567
        %v1569 = vmul.f32 %v1568, %v1188
        %v1570 = vadd.f32 %v1569, 0.0
        %s1571 = sld [smem:[#allocation3 + $0x3d]]
        %v1572 = vstv %s1571
        %v1573 = vmul.f32 %v1572, %v1188
        %1575 = vrot.lane.b32.xlu0 %v1573, 112
        %v1576 = vpop.permute.xlu0 %1575
        %v1577 = vrot.slane %v1576, 1
        %v1578 = vsel %vm383, %v1576, %v1577
        %v1580 = vadd.f32 %v1570, %v1578
        %s1581 = sld [smem:[#allocation3 + $0x44]]
        %v1582 = vstv %s1581
        %v1583 = vmul.f32 %v1582, %v1188
        %1585 = vrot.lane.b32.xlu0 %v1583, 96
        %v1586 = vpop.permute.xlu0 %1585
        %v1587 = vrot.slane %v1586, 1
        %v1588 = vsel %vm394, %v1586, %v1587
        %v1590 = vadd.f32 %v1580, %v1588
        %s1591 = sld [smem:[#allocation3 + $0x4b]]
        %v1592 = vstv %s1591
        %v1593 = vmul.f32 %v1592, %v1188
        %1595 = vrot.lane.b32.xlu0 %v1593, 80
        %v1596 = vpop.permute.xlu0 %1595
        %v1597 = vrot.slane %v1596, 1
        %v1598 = vsel %vm405, %v1596, %v1597
        %v1600 = vadd.f32 %v1590, %v1598
        %s1601 = sld [smem:[#allocation3 + $0x52]]
        %v1602 = vstv %s1601
        %v1603 = vmul.f32 %v1602, %v1188
        %1605 = vrot.lane.b32.xlu0 %v1603, 64
        %v1606 = vpop.permute.xlu0 %1605
        %v1607 = vrot.slane %v1606, 1
        %v1608 = vsel %vm416, %v1606, %v1607
        %v1610 = vadd.f32 %v1600, %v1608
        %s1611 = sld [smem:[#allocation3 + $0x59]]
        %v1612 = vstv %s1611
        %v1613 = vmul.f32 %v1612, %v1188
        %1615 = vrot.lane.b32.xlu0 %v1613, 48
        %v1616 = vpop.permute.xlu0 %1615
        %v1617 = vrot.slane %v1616, 1
        %v1618 = vsel %vm427, %v1616, %v1617
        %v1620 = vadd.f32 %v1610, %v1618
        %s1621 = sld [smem:[#allocation3 + $0x60]]
        %v1622 = vstv %s1621
        %v1623 = vmul.f32 %v1622, %v1188
        %1625 = vrot.lane.b32.xlu0 %v1623, 32
        %v1626 = vpop.permute.xlu0 %1625
        %v1627 = vrot.slane %v1626, 1
        %v1628 = vsel %vm438, %v1626, %v1627
        %v1630 = vadd.f32 %v1620, %v1628
        %v1631 = vld [vmem:[%s837] ss:$8 sm:$0x3]
        %1633 = vrot.lane.b32.xlu0 %v1631, 5
        %v1634 = vpop.permute.xlu0 %1633
        %v1635 = vrot.slane %v1634, 7
        %v1636 = vsel %vm843, %v1635, %v1634
        %v1638 = vmul.f32 %v1630, %v1636
        %1640 = vrot.lane.b32.xlu0 %v1638, 123
        %v1641 = vpop.permute.xlu0 %1640
        %v1642 = vrot.slane %v1641, 1
        %v1643 = vsel %vm851, %v1641, %v1642
        %v1645 = vadd.f32 %v1566, %v1643
        %s1646 = sld [smem:[#allocation3 + $0x37]]
        %v1647 = vstv %s1646
        %v1648 = vmul.f32 %v1647, %v1188
        %v1649 = vadd.f32 %v1648, 0.0
        %s1650 = sld [smem:[#allocation3 + $0x3e]]
        %v1651 = vstv %s1650
        %v1652 = vmul.f32 %v1651, %v1188
        %1654 = vrot.lane.b32.xlu0 %v1652, 112
        %v1655 = vpop.permute.xlu0 %1654
        %v1656 = vrot.slane %v1655, 1
        %v1657 = vsel %vm383, %v1655, %v1656
        %v1659 = vadd.f32 %v1649, %v1657
        %s1660 = sld [smem:[#allocation3 + $0x45]]
        %v1661 = vstv %s1660
        %v1662 = vmul.f32 %v1661, %v1188
        %1664 = vrot.lane.b32.xlu0 %v1662, 96
        %v1665 = vpop.permute.xlu0 %1664
        %v1666 = vrot.slane %v1665, 1
        %v1667 = vsel %vm394, %v1665, %v1666
        %v1669 = vadd.f32 %v1659, %v1667
        %s1670 = sld [smem:[#allocation3 + $0x4c]]
        %v1671 = vstv %s1670
        %v1672 = vmul.f32 %v1671, %v1188
        %1674 = vrot.lane.b32.xlu0 %v1672, 80
        %v1675 = vpop.permute.xlu0 %1674
        %v1676 = vrot.slane %v1675, 1
        %v1677 = vsel %vm405, %v1675, %v1676
        %v1679 = vadd.f32 %v1669, %v1677
        %s1680 = sld [smem:[#allocation3 + $0x53]]
        %v1681 = vstv %s1680
        %v1682 = vmul.f32 %v1681, %v1188
        %1684 = vrot.lane.b32.xlu0 %v1682, 64
        %v1685 = vpop.permute.xlu0 %1684
        %v1686 = vrot.slane %v1685, 1
        %v1687 = vsel %vm416, %v1685, %v1686
        %v1689 = vadd.f32 %v1679, %v1687
        %s1690 = sld [smem:[#allocation3 + $0x5a]]
        %v1691 = vstv %s1690
        %v1692 = vmul.f32 %v1691, %v1188
        %1694 = vrot.lane.b32.xlu0 %v1692, 48
        %v1695 = vpop.permute.xlu0 %1694
        %v1696 = vrot.slane %v1695, 1
        %v1697 = vsel %vm427, %v1695, %v1696
        %v1699 = vadd.f32 %v1689, %v1697
        %s1700 = sld [smem:[#allocation3 + $0x61]]
        %v1701 = vstv %s1700
        %v1702 = vmul.f32 %v1701, %v1188
        %1704 = vrot.lane.b32.xlu0 %v1702, 32
        %v1705 = vpop.permute.xlu0 %1704
        %v1706 = vrot.slane %v1705, 1
        %v1707 = vsel %vm438, %v1705, %v1706
        %v1709 = vadd.f32 %v1699, %v1707
        %v1710 = vld [vmem:[%s919] ss:$8 sm:$0x3]
        %1712 = vrot.lane.b32.xlu0 %v1710, 6
        %v1713 = vpop.permute.xlu0 %1712
        %v1714 = vrot.slane %v1713, 7
        %v1715 = vsel %vm925, %v1714, %v1713
        %v1717 = vmul.f32 %v1709, %v1715
        %1719 = vrot.lane.b32.xlu0 %v1717, 122
        %v1720 = vpop.permute.xlu0 %1719
        %v1721 = vrot.slane %v1720, 1
        %v1722 = vsel %vm933, %v1720, %v1721
        %v1724 = vadd.f32 %v1645, %v1722
        %v1725 = vsub.f32 0.0, %v1724
        %v1726 = vmul.f32 %v1725, 1.442695
        %v1727 = vpow.pop %v1726
        %v1728 = vadd.f32 %v1727, 1.0
        %v1729 = vrcp.pop %v1728
        %v1730 = vmul.f32 %v1121, %v1729
        %v1732 = vlaneseq
        %v1733 = vshrl.u32 %v1732, 7
        %v1734 = vsub.s32 0, %v1733
        %v1735 = vrot.slane %v1730, %v1734
        %v1736 = vlaneseq
        %v1737 = vshrl.u32 %v1736, 7
        %v1738 = vsub.s32 1, %v1737
        %v1739 = vrot.slane %v1730, %v1738
        %v1742 = vmul.f32 %v289, %v1735
        %v1743 = vmul.f32 %v290, %v1739
        %v1744 = vmul.f32 %v291, %v1735
        %v1745 = vmul.f32 %v292, %v1739
        %v1746 = vmul.f32 %v293, %v1735
        %v1747 = vmul.f32 %v294, %v1739
        %v1748 = vmul.f32 %v295, %v1735
        %v1749 = vmul.f32 %v296, %v1739
        %v1750 = vmax.f32 %v1742, %v1743
        %1751 = vmax.xlane.f32.xlu0 %v1750
        %v1752 = vpop.xlane.xlu0 %1751
        %v1753 = vmax.f32 %v1744, %v1745
        %1754 = vmax.xlane.f32.xlu0 %v1753
        %v1755 = vpop.xlane.xlu0 %1754
        %v1756 = vmax.f32 %v1746, %v1747
        %1757 = vmax.xlane.f32.xlu0 %v1756
        %v1758 = vpop.xlane.xlu0 %1757
        %v1759 = vmax.f32 %v1748, %v1749
        %1760 = vmax.xlane.f32.xlu0 %v1759
        %v1761 = vpop.xlane.xlu0 %1760
        %s1762 = scalar_lea.vmem %s4, 64
        %v1763 = vld [vmem:[%s1762] sm:$0xff]
        %v1764 = vld [vmem:[%s1762 + $0x8] sm:$0xff]
        %v1765 = vld [vmem:[%s1762 + $0x10] sm:$0xff]
        %v1766 = vld [vmem:[%s1762 + $0x18] sm:$0xff]
        %v1767 = vmul.f32 %v1763, %v1752
        %v1768 = vmul.f32 %v1764, %v1755
        %v1769 = vmul.f32 %v1765, %v1758
        %v1770 = vmul.f32 %v1766, %v1761
        %v1771 = vsel %vm515, %v1767, 0.0
        %v1772 = vsel %vm515, %v1768, 0.0
        %v1773 = vadd.f32 %v1771, %v1772
        %v1774 = vsel %vm515, %v1769, 0.0
        %v1775 = vadd.f32 %v1773, %v1774
        %v1776 = vsel %vm515, %v1770, 0.0
        %v1777 = vadd.f32 %v1775, %v1776
        %1778 = vadd.xlane.f32.xlu0 %v1777
        %v1779 = vpop.xlane.xlu0 %1778
        %v1780 = vrot.slane %v1779, 4
        %v1781 = vadd.f32 %v1779, %v1780
        %v1782 = vrot.slane %v1781, 2
        %v1783 = vadd.f32 %v1781, %v1782
        %v1784 = vrot.slane %v1783, 1
        %v1785 = vadd.f32 %v1783, %v1784
        %s1786 = vtos %v1785
        %v1787 = vstv %s1786
        %v1788 = vmax.f32 %v1787, 0.0
        %s1789 = scalar_lea.vmem %s4, 96
        %v1790 = vld [vmem:[%s1789] sm:$0xff]
        %v1791 = vld [vmem:[%s1789 + $0x8] sm:$0xff]
        %v1792 = vld [vmem:[%s1789 + $0x10] sm:$0xff]
        %v1793 = vld [vmem:[%s1789 + $0x18] sm:$0xff]
        %v1794 = vmul.f32 %v1790, %v1752
        %v1795 = vmul.f32 %v1791, %v1755
        %v1796 = vmul.f32 %v1792, %v1758
        %v1797 = vmul.f32 %v1793, %v1761
        %v1798 = vsel %vm515, %v1794, 0.0
        %v1799 = vsel %vm515, %v1795, 0.0
        %v1800 = vadd.f32 %v1798, %v1799
        %v1801 = vsel %vm515, %v1796, 0.0
        %v1802 = vadd.f32 %v1800, %v1801
        %v1803 = vsel %vm515, %v1797, 0.0
        %v1804 = vadd.f32 %v1802, %v1803
        %1805 = vadd.xlane.f32.xlu0 %v1804
        %v1806 = vpop.xlane.xlu0 %1805
        %v1807 = vrot.slane %v1806, 4
        %v1808 = vadd.f32 %v1806, %v1807
        %v1809 = vrot.slane %v1808, 2
        %v1810 = vadd.f32 %v1808, %v1809
        %v1811 = vrot.slane %v1810, 1
        %v1812 = vadd.f32 %v1810, %v1811
        %s1813 = vtos %v1812
        %v1814 = vstv %s1813
        %v1815 = vmax.f32 %v1814, 0.0
        %s1816 = scalar_lea.vmem %s5, 64
        %v1817 = vld [vmem:[%s1816] sm:$0xff]
        %v1818 = vld [vmem:[%s1816 + $0x8] sm:$0xff]
        %v1819 = vld [vmem:[%s1816 + $0x10] sm:$0xff]
        %v1820 = vld [vmem:[%s1816 + $0x18] sm:$0xff]
        %v1821 = vmul.f32 %v1817, %v1788
        %v1822 = vmul.f32 %v1818, %v1788
        %v1823 = vmul.f32 %v1819, %v1788
        %v1824 = vmul.f32 %v1820, %v1788
        %s1825 = scalar_lea.vmem %s5, 96
        %v1826 = vld [vmem:[%s1825] sm:$0xff]
        %v1827 = vld [vmem:[%s1825 + $0x8] sm:$0xff]
        %v1828 = vld [vmem:[%s1825 + $0x10] sm:$0xff]
        %v1829 = vld [vmem:[%s1825 + $0x18] sm:$0xff]
        %v1830 = vmul.f32 %v1826, %v1815
        %v1831 = vmul.f32 %v1827, %v1815
        %v1832 = vmul.f32 %v1828, %v1815
        %v1833 = vmul.f32 %v1829, %v1815
        %v1834 = vadd.f32 %v1821, %v1830
        %v1835 = vadd.f32 %v1822, %v1831
        %v1836 = vadd.f32 %v1823, %v1832
        %v1837 = vadd.f32 %v1824, %v1833
        %v1838 = vsub.f32 0.0, %v1834
        %v1839 = vsub.f32 0.0, %v1835
        %v1840 = vsub.f32 0.0, %v1836
        %v1841 = vsub.f32 0.0, %v1837
        %v1842 = vmul.f32 %v1838, 1.442695
        %v1843 = vpow.pop %v1842
        %v1844 = vmul.f32 %v1839, 1.442695
        %v1845 = vpow.pop %v1844
        %v1846 = vmul.f32 %v1840, 1.442695
        %v1847 = vpow.pop %v1846
        %v1848 = vmul.f32 %v1841, 1.442695
        %v1849 = vpow.pop %v1848
        %v1850 = vadd.f32 %v1843, 1.0
        %v1851 = vadd.f32 %v1845, 1.0
        %v1852 = vadd.f32 %v1847, 1.0
        %v1853 = vadd.f32 %v1849, 1.0
        %v1854 = vrcp.pop %v1850
        %v1855 = vrcp.pop %v1851
        %v1856 = vrcp.pop %v1852
        %v1857 = vrcp.pop %v1853
        %v1858 = vld [vmem:[%s273] sm:$0xff]
        %v1859 = vld [vmem:[%s273 + $0x8] sm:$0xff]
        %v1860 = vld [vmem:[%s273 + $0x10] sm:$0xff]
        %v1861 = vld [vmem:[%s273 + $0x18] sm:$0xff]
        %v1862 = vld [vmem:[%s273 + $0x20] sm:$0xff]
        %v1863 = vld [vmem:[%s273 + $0x28] sm:$0xff]
        %v1864 = vld [vmem:[%s273 + $0x30] sm:$0xff]
        %v1865 = vld [vmem:[%s273 + $0x38] sm:$0xff]
        %1867 = vset.pattern.permute.xlu0 0
        %1868 = vperm.xlu0 %1867, %v1854
        %v1869 = vpop.permute.xlu0 %1868
        %1872 = vset.pattern.permute.xlu0 0
        %1873 = vperm.xlu0 %1872, %v1855
        %v1874 = vpop.permute.xlu0 %1873
        %1877 = vset.pattern.permute.xlu0 0
        %1878 = vperm.xlu0 %1877, %v1856
        %v1879 = vpop.permute.xlu0 %1878
        %1882 = vset.pattern.permute.xlu0 0
        %1883 = vperm.xlu0 %1882, %v1857
        %v1884 = vpop.permute.xlu0 %1883
        %v1886 = vmul.f32 %v1742, %v1869
        %v1887 = vmul.f32 %v1743, %v1869
        %v1888 = vmul.f32 %v1744, %v1874
        %v1889 = vmul.f32 %v1745, %v1874
        %v1890 = vmul.f32 %v1746, %v1879
        %v1891 = vmul.f32 %v1747, %v1879
        %v1892 = vmul.f32 %v1748, %v1884
        %v1893 = vmul.f32 %v1749, %v1884
        %v1894 = vadd.f32 %v1858, %v1886
        %v1895 = vadd.f32 %v1859, %v1887
        %v1896 = vadd.f32 %v1860, %v1888
        %v1897 = vadd.f32 %v1861, %v1889
        %v1898 = vadd.f32 %v1862, %v1890
        %v1899 = vadd.f32 %v1863, %v1891
        %v1900 = vadd.f32 %v1864, %v1892
        %v1901 = vadd.f32 %v1865, %v1893
        %1902 = vst [vmem:[%s273] sm:$0xff] %v1894
        %1903 = vst [vmem:[%s273 + $0x8] sm:$0xff] %v1895
        %1904 = vst [vmem:[%s273 + $0x10] sm:$0xff] %v1896
        %1905 = vst [vmem:[%s273 + $0x18] sm:$0xff] %v1897
        %1906 = vst [vmem:[%s273 + $0x20] sm:$0xff] %v1898
        %1907 = vst [vmem:[%s273 + $0x28] sm:$0xff] %v1899
        %1908 = vst [vmem:[%s273 + $0x30] sm:$0xff] %v1900
        %1909 = vst [vmem:[%s273 + $0x38] sm:$0xff] %v1901
        %s1910 = scalar_lea.vmem %s283, 2
        %v1911 = vld [vmem:[%s1910] ss:$4 sm:$0x3]
        %v1913 = vlaneseq
        %v1914 = vshrl.u32 %v1913, 7
        %v1915 = vsub.s32 0, %v1914
        %v1916 = vrot.slane %v1911, %v1915
        %v1917 = vlaneseq
        %v1918 = vshrl.u32 %v1917, 7
        %v1919 = vsub.s32 1, %v1918
        %v1920 = vrot.slane %v1911, %v1919
        %v1923 = vmul.f32 %v289, %v1916
        %v1924 = vmul.f32 %v290, %v1920
        %v1925 = vmul.f32 %v291, %v1916
        %v1926 = vmul.f32 %v292, %v1920
        %v1927 = vmul.f32 %v293, %v1916
        %v1928 = vmul.f32 %v294, %v1920
        %v1929 = vmul.f32 %v295, %v1916
        %v1930 = vmul.f32 %v296, %v1920
        %v1931 = vmax.f32 %v1923, %v1927
        %v1932 = vmax.f32 %v1925, %v1929
        %v1933 = vmax.f32 %v1931, %v1932
        %v1934 = vrot.slane %v1933, 4
        %v1935 = vmax.f32 %v1933, %v1934
        %v1936 = vrot.slane %v1935, 2
        %v1937 = vmax.f32 %v1935, %v1936
        %v1938 = vrot.slane %v1937, 1
        %v1939 = vmax.f32 %v1937, %v1938
        %v1940 = vmax.f32 %v1924, %v1928
        %v1941 = vmax.f32 %v1926, %v1930
        %v1942 = vmax.f32 %v1940, %v1941
        %v1943 = vrot.slane %v1942, 4
        %v1944 = vmax.f32 %v1942, %v1943
        %v1945 = vrot.slane %v1944, 2
        %v1946 = vmax.f32 %v1944, %v1945
        %v1947 = vrot.slane %v1946, 1
        %v1948 = vmax.f32 %v1946, %v1947
        %v1951 = vcombine.low %v1939, %v1948
        %v1953 = vunpack.c.l.s4 1966171168
        %v1954 = vunpack.c.0.s8 %v1953
        %v1955 = vlaneseq
        %v1956 = vshrl.u32 %v1955, 7
        %v1957 = vsub.s32 %v1954, %v1956
        %v1958 = vrot.slane %v1951, %v1957
        %v1960 = vunpack.c.l.s4 1966171168
        %v1961 = vunpack.c.0.s8 %v1960
        %v1962 = vlaneseq
        %v1963 = vshrl.u32 %v1962, 7
        %v1964 = vsub.s32 %v1961, %v1963
        %v1965 = vrot.slane %v1958, %v1964
        %1966 = vrot.lane.b32.xlu0 %v1965, 51
        %v1967 = vpop.permute.xlu0 %1966
        %v1968 = vrot.slane %v1967, 7
        %v1969 = vsel %vm363, %v1968, %v1967
        %1971 = vst.msk [vmem:[#allocation2] sm:$0x7] %vm368, %v1969
        %s1972 = sld [smem:[#allocation3 + $0x62]]
        %v1973 = vld [vmem:[#allocation2] sm:$0x3]
        %v1974 = vstv %s1972
        %v1975 = vmul.f32 %v1974, %v1973
        %v1976 = vadd.f32 %v1975, 0.0
        %s1977 = sld [smem:[#allocation3 + $0x69]]
        %v1978 = vld [vmem:[#allocation2] sm:$0x7]
        %v1979 = vstv %s1977
        %v1980 = vmul.f32 %v1979, %v1978
        %1982 = vrot.lane.b32.xlu0 %v1980, 112
        %v1983 = vpop.permute.xlu0 %1982
        %v1984 = vrot.slane %v1983, 1
        %v1985 = vsel %vm383, %v1983, %v1984
        %v1987 = vadd.f32 %v1976, %v1985
        %s1988 = sld [smem:[#allocation3 + $0x70]]
        %v1989 = vstv %s1988
        %v1990 = vmul.f32 %v1989, %v1978
        %1992 = vrot.lane.b32.xlu0 %v1990, 96
        %v1993 = vpop.permute.xlu0 %1992
        %v1994 = vrot.slane %v1993, 1
        %v1995 = vsel %vm394, %v1993, %v1994
        %v1997 = vadd.f32 %v1987, %v1995
        %s1998 = sld [smem:[#allocation3 + $0x77]]
        %v1999 = vstv %s1998
        %v2000 = vmul.f32 %v1999, %v1978
        %2002 = vrot.lane.b32.xlu0 %v2000, 80
        %v2003 = vpop.permute.xlu0 %2002
        %v2004 = vrot.slane %v2003, 1
        %v2005 = vsel %vm405, %v2003, %v2004
        %v2007 = vadd.f32 %v1997, %v2005
        %s2008 = sld [smem:[#allocation3 + $0x7e]]
        %v2009 = vstv %s2008
        %v2010 = vmul.f32 %v2009, %v1978
        %2012 = vrot.lane.b32.xlu0 %v2010, 64
        %v2013 = vpop.permute.xlu0 %2012
        %v2014 = vrot.slane %v2013, 1
        %v2015 = vsel %vm416, %v2013, %v2014
        %v2017 = vadd.f32 %v2007, %v2015
        %s2018 = sld [smem:[#allocation3 + $0x85]]
        %v2019 = vstv %s2018
        %v2020 = vmul.f32 %v2019, %v1978
        %2022 = vrot.lane.b32.xlu0 %v2020, 48
        %v2023 = vpop.permute.xlu0 %2022
        %v2024 = vrot.slane %v2023, 1
        %v2025 = vsel %vm427, %v2023, %v2024
        %v2027 = vadd.f32 %v2017, %v2025
        %s2028 = sld [smem:[#allocation3 + $0x8c]]
        %v2029 = vstv %s2028
        %v2030 = vmul.f32 %v2029, %v1978
        %2032 = vrot.lane.b32.xlu0 %v2030, 32
        %v2033 = vpop.permute.xlu0 %2032
        %v2034 = vrot.slane %v2033, 1
        %v2035 = vsel %vm438, %v2033, %v2034
        %v2037 = vadd.f32 %v2027, %v2035
        %v2038 = vld [vmem:[%s3] ss:$8 sm:$0x3]
        %v2039 = vmul.f32 %v2037, %v2038
        %v2040 = vadd.f32 %v2039, 0.0
        %s2041 = sld [smem:[#allocation3 + $0x63]]
        %v2042 = vstv %s2041
        %v2043 = vmul.f32 %v2042, %v1978
        %v2044 = vadd.f32 %v2043, 0.0
        %s2045 = sld [smem:[#allocation3 + $0x6a]]
        %v2046 = vstv %s2045
        %v2047 = vmul.f32 %v2046, %v1978
        %2049 = vrot.lane.b32.xlu0 %v2047, 112
        %v2050 = vpop.permute.xlu0 %2049
        %v2051 = vrot.slane %v2050, 1
        %v2052 = vsel %vm383, %v2050, %v2051
        %v2054 = vadd.f32 %v2044, %v2052
        %s2055 = sld [smem:[#allocation3 + $0x71]]
        %v2056 = vstv %s2055
        %v2057 = vmul.f32 %v2056, %v1978
        %2059 = vrot.lane.b32.xlu0 %v2057, 96
        %v2060 = vpop.permute.xlu0 %2059
        %v2061 = vrot.slane %v2060, 1
        %v2062 = vsel %vm394, %v2060, %v2061
        %v2064 = vadd.f32 %v2054, %v2062
        %s2065 = sld [smem:[#allocation3 + $0x78]]
        %v2066 = vstv %s2065
        %v2067 = vmul.f32 %v2066, %v1978
        %2069 = vrot.lane.b32.xlu0 %v2067, 80
        %v2070 = vpop.permute.xlu0 %2069
        %v2071 = vrot.slane %v2070, 1
        %v2072 = vsel %vm405, %v2070, %v2071
        %v2074 = vadd.f32 %v2064, %v2072
        %s2075 = sld [smem:[#allocation3 + $0x7f]]
        %v2076 = vstv %s2075
        %v2077 = vmul.f32 %v2076, %v1978
        %2079 = vrot.lane.b32.xlu0 %v2077, 64
        %v2080 = vpop.permute.xlu0 %2079
        %v2081 = vrot.slane %v2080, 1
        %v2082 = vsel %vm416, %v2080, %v2081
        %v2084 = vadd.f32 %v2074, %v2082
        %s2085 = sld [smem:[#allocation3 + $0x86]]
        %v2086 = vstv %s2085
        %v2087 = vmul.f32 %v2086, %v1978
        %2089 = vrot.lane.b32.xlu0 %v2087, 48
        %v2090 = vpop.permute.xlu0 %2089
        %v2091 = vrot.slane %v2090, 1
        %v2092 = vsel %vm427, %v2090, %v2091
        %v2094 = vadd.f32 %v2084, %v2092
        %s2095 = sld [smem:[#allocation3 + $0x8d]]
        %v2096 = vstv %s2095
        %v2097 = vmul.f32 %v2096, %v1978
        %2099 = vrot.lane.b32.xlu0 %v2097, 32
        %v2100 = vpop.permute.xlu0 %2099
        %v2101 = vrot.slane %v2100, 1
        %v2102 = vsel %vm438, %v2100, %v2101
        %v2104 = vadd.f32 %v2094, %v2102
        %v2105 = vld [vmem:[%s509] ss:$8 sm:$0x3]
        %2107 = vrot.lane.b32.xlu0 %v2105, 1
        %v2108 = vpop.permute.xlu0 %2107
        %v2109 = vrot.slane %v2108, 7
        %v2110 = vsel %vm515, %v2109, %v2108
        %v2112 = vmul.f32 %v2104, %v2110
        %2114 = vrot.lane.b32.xlu0 %v2112, 127
        %v2115 = vpop.permute.xlu0 %2114
        %v2116 = vrot.slane %v2115, 1
        %v2117 = vsel %vm523, %v2115, %v2116
        %v2119 = vadd.f32 %v2040, %v2117
        %s2120 = sld [smem:[#allocation3 + $0x64]]
        %v2121 = vstv %s2120
        %v2122 = vmul.f32 %v2121, %v1978
        %v2123 = vadd.f32 %v2122, 0.0
        %s2124 = sld [smem:[#allocation3 + $0x6b]]
        %v2125 = vstv %s2124
        %v2126 = vmul.f32 %v2125, %v1978
        %2128 = vrot.lane.b32.xlu0 %v2126, 112
        %v2129 = vpop.permute.xlu0 %2128
        %v2130 = vrot.slane %v2129, 1
        %v2131 = vsel %vm383, %v2129, %v2130
        %v2133 = vadd.f32 %v2123, %v2131
        %s2134 = sld [smem:[#allocation3 + $0x72]]
        %v2135 = vstv %s2134
        %v2136 = vmul.f32 %v2135, %v1978
        %2138 = vrot.lane.b32.xlu0 %v2136, 96
        %v2139 = vpop.permute.xlu0 %2138
        %v2140 = vrot.slane %v2139, 1
        %v2141 = vsel %vm394, %v2139, %v2140
        %v2143 = vadd.f32 %v2133, %v2141
        %s2144 = sld [smem:[#allocation3 + $0x79]]
        %v2145 = vstv %s2144
        %v2146 = vmul.f32 %v2145, %v1978
        %2148 = vrot.lane.b32.xlu0 %v2146, 80
        %v2149 = vpop.permute.xlu0 %2148
        %v2150 = vrot.slane %v2149, 1
        %v2151 = vsel %vm405, %v2149, %v2150
        %v2153 = vadd.f32 %v2143, %v2151
        %s2154 = sld [smem:[#allocation3 + $0x80]]
        %v2155 = vstv %s2154
        %v2156 = vmul.f32 %v2155, %v1978
        %2158 = vrot.lane.b32.xlu0 %v2156, 64
        %v2159 = vpop.permute.xlu0 %2158
        %v2160 = vrot.slane %v2159, 1
        %v2161 = vsel %vm416, %v2159, %v2160
        %v2163 = vadd.f32 %v2153, %v2161
        %s2164 = sld [smem:[#allocation3 + $0x87]]
        %v2165 = vstv %s2164
        %v2166 = vmul.f32 %v2165, %v1978
        %2168 = vrot.lane.b32.xlu0 %v2166, 48
        %v2169 = vpop.permute.xlu0 %2168
        %v2170 = vrot.slane %v2169, 1
        %v2171 = vsel %vm427, %v2169, %v2170
        %v2173 = vadd.f32 %v2163, %v2171
        %s2174 = sld [smem:[#allocation3 + $0x8e]]
        %v2175 = vstv %s2174
        %v2176 = vmul.f32 %v2175, %v1978
        %2178 = vrot.lane.b32.xlu0 %v2176, 32
        %v2179 = vpop.permute.xlu0 %2178
        %v2180 = vrot.slane %v2179, 1
        %v2181 = vsel %vm438, %v2179, %v2180
        %v2183 = vadd.f32 %v2173, %v2181
        %v2184 = vld [vmem:[%s591] ss:$8 sm:$0x3]
        %2186 = vrot.lane.b32.xlu0 %v2184, 2
        %v2187 = vpop.permute.xlu0 %2186
        %v2188 = vrot.slane %v2187, 7
        %v2189 = vsel %vm597, %v2188, %v2187
        %v2191 = vmul.f32 %v2183, %v2189
        %2193 = vrot.lane.b32.xlu0 %v2191, 126
        %v2194 = vpop.permute.xlu0 %2193
        %v2195 = vrot.slane %v2194, 1
        %v2196 = vsel %vm605, %v2194, %v2195
        %v2198 = vadd.f32 %v2119, %v2196
        %s2199 = sld [smem:[#allocation3 + $0x65]]
        %v2200 = vstv %s2199
        %v2201 = vmul.f32 %v2200, %v1978
        %v2202 = vadd.f32 %v2201, 0.0
        %s2203 = sld [smem:[#allocation3 + $0x6c]]
        %v2204 = vstv %s2203
        %v2205 = vmul.f32 %v2204, %v1978
        %2207 = vrot.lane.b32.xlu0 %v2205, 112
        %v2208 = vpop.permute.xlu0 %2207
        %v2209 = vrot.slane %v2208, 1
        %v2210 = vsel %vm383, %v2208, %v2209
        %v2212 = vadd.f32 %v2202, %v2210
        %s2213 = sld [smem:[#allocation3 + $0x73]]
        %v2214 = vstv %s2213
        %v2215 = vmul.f32 %v2214, %v1978
        %2217 = vrot.lane.b32.xlu0 %v2215, 96
        %v2218 = vpop.permute.xlu0 %2217
        %v2219 = vrot.slane %v2218, 1
        %v2220 = vsel %vm394, %v2218, %v2219
        %v2222 = vadd.f32 %v2212, %v2220
        %s2223 = sld [smem:[#allocation3 + $0x7a]]
        %v2224 = vstv %s2223
        %v2225 = vmul.f32 %v2224, %v1978
        %2227 = vrot.lane.b32.xlu0 %v2225, 80
        %v2228 = vpop.permute.xlu0 %2227
        %v2229 = vrot.slane %v2228, 1
        %v2230 = vsel %vm405, %v2228, %v2229
        %v2232 = vadd.f32 %v2222, %v2230
        %s2233 = sld [smem:[#allocation3 + $0x81]]
        %v2234 = vstv %s2233
        %v2235 = vmul.f32 %v2234, %v1978
        %2237 = vrot.lane.b32.xlu0 %v2235, 64
        %v2238 = vpop.permute.xlu0 %2237
        %v2239 = vrot.slane %v2238, 1
        %v2240 = vsel %vm416, %v2238, %v2239
        %v2242 = vadd.f32 %v2232, %v2240
        %s2243 = sld [smem:[#allocation3 + $0x88]]
        %v2244 = vstv %s2243
        %v2245 = vmul.f32 %v2244, %v1978
        %2247 = vrot.lane.b32.xlu0 %v2245, 48
        %v2248 = vpop.permute.xlu0 %2247
        %v2249 = vrot.slane %v2248, 1
        %v2250 = vsel %vm427, %v2248, %v2249
        %v2252 = vadd.f32 %v2242, %v2250
        %s2253 = sld [smem:[#allocation3 + $0x8f]]
        %v2254 = vstv %s2253
        %v2255 = vmul.f32 %v2254, %v1978
        %2257 = vrot.lane.b32.xlu0 %v2255, 32
        %v2258 = vpop.permute.xlu0 %2257
        %v2259 = vrot.slane %v2258, 1
        %v2260 = vsel %vm438, %v2258, %v2259
        %v2262 = vadd.f32 %v2252, %v2260
        %v2263 = vld [vmem:[%s673] ss:$8 sm:$0x3]
        %2265 = vrot.lane.b32.xlu0 %v2263, 3
        %v2266 = vpop.permute.xlu0 %2265
        %v2267 = vrot.slane %v2266, 7
        %v2268 = vsel %vm679, %v2267, %v2266
        %v2270 = vmul.f32 %v2262, %v2268
        %2272 = vrot.lane.b32.xlu0 %v2270, 125
        %v2273 = vpop.permute.xlu0 %2272
        %v2274 = vrot.slane %v2273, 1
        %v2275 = vsel %vm687, %v2273, %v2274
        %v2277 = vadd.f32 %v2198, %v2275
        %s2278 = sld [smem:[#allocation3 + $0x66]]
        %v2279 = vstv %s2278
        %v2280 = vmul.f32 %v2279, %v1978
        %v2281 = vadd.f32 %v2280, 0.0
        %s2282 = sld [smem:[#allocation3 + $0x6d]]
        %v2283 = vstv %s2282
        %v2284 = vmul.f32 %v2283, %v1978
        %2286 = vrot.lane.b32.xlu0 %v2284, 112
        %v2287 = vpop.permute.xlu0 %2286
        %v2288 = vrot.slane %v2287, 1
        %v2289 = vsel %vm383, %v2287, %v2288
        %v2291 = vadd.f32 %v2281, %v2289
        %s2292 = sld [smem:[#allocation3 + $0x74]]
        %v2293 = vstv %s2292
        %v2294 = vmul.f32 %v2293, %v1978
        %2296 = vrot.lane.b32.xlu0 %v2294, 96
        %v2297 = vpop.permute.xlu0 %2296
        %v2298 = vrot.slane %v2297, 1
        %v2299 = vsel %vm394, %v2297, %v2298
        %v2301 = vadd.f32 %v2291, %v2299
        %s2302 = sld [smem:[#allocation3 + $0x7b]]
        %v2303 = vstv %s2302
        %v2304 = vmul.f32 %v2303, %v1978
        %2306 = vrot.lane.b32.xlu0 %v2304, 80
        %v2307 = vpop.permute.xlu0 %2306
        %v2308 = vrot.slane %v2307, 1
        %v2309 = vsel %vm405, %v2307, %v2308
        %v2311 = vadd.f32 %v2301, %v2309
        %s2312 = sld [smem:[#allocation3 + $0x82]]
        %v2313 = vstv %s2312
        %v2314 = vmul.f32 %v2313, %v1978
        %2316 = vrot.lane.b32.xlu0 %v2314, 64
        %v2317 = vpop.permute.xlu0 %2316
        %v2318 = vrot.slane %v2317, 1
        %v2319 = vsel %vm416, %v2317, %v2318
        %v2321 = vadd.f32 %v2311, %v2319
        %s2322 = sld [smem:[#allocation3 + $0x89]]
        %v2323 = vstv %s2322
        %v2324 = vmul.f32 %v2323, %v1978
        %2326 = vrot.lane.b32.xlu0 %v2324, 48
        %v2327 = vpop.permute.xlu0 %2326
        %v2328 = vrot.slane %v2327, 1
        %v2329 = vsel %vm427, %v2327, %v2328
        %v2331 = vadd.f32 %v2321, %v2329
        %s2332 = sld [smem:[#allocation3 + $0x90]]
        %v2333 = vstv %s2332
        %v2334 = vmul.f32 %v2333, %v1978
        %2336 = vrot.lane.b32.xlu0 %v2334, 32
        %v2337 = vpop.permute.xlu0 %2336
        %v2338 = vrot.slane %v2337, 1
        %v2339 = vsel %vm438, %v2337, %v2338
        %v2341 = vadd.f32 %v2331, %v2339
        %v2342 = vld [vmem:[%s755] ss:$8 sm:$0x3]
        %2344 = vrot.lane.b32.xlu0 %v2342, 4
        %v2345 = vpop.permute.xlu0 %2344
        %v2346 = vrot.slane %v2345, 7
        %v2347 = vsel %vm761, %v2346, %v2345
        %v2349 = vmul.f32 %v2341, %v2347
        %2351 = vrot.lane.b32.xlu0 %v2349, 124
        %v2352 = vpop.permute.xlu0 %2351
        %v2353 = vrot.slane %v2352, 1
        %v2354 = vsel %vm769, %v2352, %v2353
        %v2356 = vadd.f32 %v2277, %v2354
        %s2357 = sld [smem:[#allocation3 + $0x67]]
        %v2358 = vstv %s2357
        %v2359 = vmul.f32 %v2358, %v1978
        %v2360 = vadd.f32 %v2359, 0.0
        %s2361 = sld [smem:[#allocation3 + $0x6e]]
        %v2362 = vstv %s2361
        %v2363 = vmul.f32 %v2362, %v1978
        %2365 = vrot.lane.b32.xlu0 %v2363, 112
        %v2366 = vpop.permute.xlu0 %2365
        %v2367 = vrot.slane %v2366, 1
        %v2368 = vsel %vm383, %v2366, %v2367
        %v2370 = vadd.f32 %v2360, %v2368
        %s2371 = sld [smem:[#allocation3 + $0x75]]
        %v2372 = vstv %s2371
        %v2373 = vmul.f32 %v2372, %v1978
        %2375 = vrot.lane.b32.xlu0 %v2373, 96
        %v2376 = vpop.permute.xlu0 %2375
        %v2377 = vrot.slane %v2376, 1
        %v2378 = vsel %vm394, %v2376, %v2377
        %v2380 = vadd.f32 %v2370, %v2378
        %s2381 = sld [smem:[#allocation3 + $0x7c]]
        %v2382 = vstv %s2381
        %v2383 = vmul.f32 %v2382, %v1978
        %2385 = vrot.lane.b32.xlu0 %v2383, 80
        %v2386 = vpop.permute.xlu0 %2385
        %v2387 = vrot.slane %v2386, 1
        %v2388 = vsel %vm405, %v2386, %v2387
        %v2390 = vadd.f32 %v2380, %v2388
        %s2391 = sld [smem:[#allocation3 + $0x83]]
        %v2392 = vstv %s2391
        %v2393 = vmul.f32 %v2392, %v1978
        %2395 = vrot.lane.b32.xlu0 %v2393, 64
        %v2396 = vpop.permute.xlu0 %2395
        %v2397 = vrot.slane %v2396, 1
        %v2398 = vsel %vm416, %v2396, %v2397
        %v2400 = vadd.f32 %v2390, %v2398
        %s2401 = sld [smem:[#allocation3 + $0x8a]]
        %v2402 = vstv %s2401
        %v2403 = vmul.f32 %v2402, %v1978
        %2405 = vrot.lane.b32.xlu0 %v2403, 48
        %v2406 = vpop.permute.xlu0 %2405
        %v2407 = vrot.slane %v2406, 1
        %v2408 = vsel %vm427, %v2406, %v2407
        %v2410 = vadd.f32 %v2400, %v2408
        %s2411 = sld [smem:[#allocation3 + $0x91]]
        %v2412 = vstv %s2411
        %v2413 = vmul.f32 %v2412, %v1978
        %2415 = vrot.lane.b32.xlu0 %v2413, 32
        %v2416 = vpop.permute.xlu0 %2415
        %v2417 = vrot.slane %v2416, 1
        %v2418 = vsel %vm438, %v2416, %v2417
        %v2420 = vadd.f32 %v2410, %v2418
        %v2421 = vld [vmem:[%s837] ss:$8 sm:$0x3]
        %2423 = vrot.lane.b32.xlu0 %v2421, 5
        %v2424 = vpop.permute.xlu0 %2423
        %v2425 = vrot.slane %v2424, 7
        %v2426 = vsel %vm843, %v2425, %v2424
        %v2428 = vmul.f32 %v2420, %v2426
        %2430 = vrot.lane.b32.xlu0 %v2428, 123
        %v2431 = vpop.permute.xlu0 %2430
        %v2432 = vrot.slane %v2431, 1
        %v2433 = vsel %vm851, %v2431, %v2432
        %v2435 = vadd.f32 %v2356, %v2433
        %s2436 = sld [smem:[#allocation3 + $0x68]]
        %v2437 = vstv %s2436
        %v2438 = vmul.f32 %v2437, %v1978
        %v2439 = vadd.f32 %v2438, 0.0
        %s2440 = sld [smem:[#allocation3 + $0x6f]]
        %v2441 = vstv %s2440
        %v2442 = vmul.f32 %v2441, %v1978
        %2444 = vrot.lane.b32.xlu0 %v2442, 112
        %v2445 = vpop.permute.xlu0 %2444
        %v2446 = vrot.slane %v2445, 1
        %v2447 = vsel %vm383, %v2445, %v2446
        %v2449 = vadd.f32 %v2439, %v2447
        %s2450 = sld [smem:[#allocation3 + $0x76]]
        %v2451 = vstv %s2450
        %v2452 = vmul.f32 %v2451, %v1978
        %2454 = vrot.lane.b32.xlu0 %v2452, 96
        %v2455 = vpop.permute.xlu0 %2454
        %v2456 = vrot.slane %v2455, 1
        %v2457 = vsel %vm394, %v2455, %v2456
        %v2459 = vadd.f32 %v2449, %v2457
        %s2460 = sld [smem:[#allocation3 + $0x7d]]
        %v2461 = vstv %s2460
        %v2462 = vmul.f32 %v2461, %v1978
        %2464 = vrot.lane.b32.xlu0 %v2462, 80
        %v2465 = vpop.permute.xlu0 %2464
        %v2466 = vrot.slane %v2465, 1
        %v2467 = vsel %vm405, %v2465, %v2466
        %v2469 = vadd.f32 %v2459, %v2467
        %s2470 = sld [smem:[#allocation3 + $0x84]]
        %v2471 = vstv %s2470
        %v2472 = vmul.f32 %v2471, %v1978
        %2474 = vrot.lane.b32.xlu0 %v2472, 64
        %v2475 = vpop.permute.xlu0 %2474
        %v2476 = vrot.slane %v2475, 1
        %v2477 = vsel %vm416, %v2475, %v2476
        %v2479 = vadd.f32 %v2469, %v2477
        %s2480 = sld [smem:[#allocation3 + $0x8b]]
        %v2481 = vstv %s2480
        %v2482 = vmul.f32 %v2481, %v1978
        %2484 = vrot.lane.b32.xlu0 %v2482, 48
        %v2485 = vpop.permute.xlu0 %2484
        %v2486 = vrot.slane %v2485, 1
        %v2487 = vsel %vm427, %v2485, %v2486
        %v2489 = vadd.f32 %v2479, %v2487
        %s2490 = sld [smem:[#allocation3 + $0x92]]
        %v2491 = vstv %s2490
        %v2492 = vmul.f32 %v2491, %v1978
        %2494 = vrot.lane.b32.xlu0 %v2492, 32
        %v2495 = vpop.permute.xlu0 %2494
        %v2496 = vrot.slane %v2495, 1
        %v2497 = vsel %vm438, %v2495, %v2496
        %v2499 = vadd.f32 %v2489, %v2497
        %v2500 = vld [vmem:[%s919] ss:$8 sm:$0x3]
        %2502 = vrot.lane.b32.xlu0 %v2500, 6
        %v2503 = vpop.permute.xlu0 %2502
        %v2504 = vrot.slane %v2503, 7
        %v2505 = vsel %vm925, %v2504, %v2503
        %v2507 = vmul.f32 %v2499, %v2505
        %2509 = vrot.lane.b32.xlu0 %v2507, 122
        %v2510 = vpop.permute.xlu0 %2509
        %v2511 = vrot.slane %v2510, 1
        %v2512 = vsel %vm933, %v2510, %v2511
        %v2514 = vadd.f32 %v2435, %v2512
        %v2515 = vsub.f32 0.0, %v2514
        %v2516 = vmul.f32 %v2515, 1.442695
        %v2517 = vpow.pop %v2516
        %v2518 = vadd.f32 %v2517, 1.0
        %v2519 = vrcp.pop %v2518
        %v2520 = vmul.f32 %v1911, %v2519
        %v2522 = vlaneseq
        %v2523 = vshrl.u32 %v2522, 7
        %v2524 = vsub.s32 0, %v2523
        %v2525 = vrot.slane %v2520, %v2524
        %v2526 = vlaneseq
        %v2527 = vshrl.u32 %v2526, 7
        %v2528 = vsub.s32 1, %v2527
        %v2529 = vrot.slane %v2520, %v2528
        %v2532 = vmul.f32 %v289, %v2525
        %v2533 = vmul.f32 %v290, %v2529
        %v2534 = vmul.f32 %v291, %v2525
        %v2535 = vmul.f32 %v292, %v2529
        %v2536 = vmul.f32 %v293, %v2525
        %v2537 = vmul.f32 %v294, %v2529
        %v2538 = vmul.f32 %v295, %v2525
        %v2539 = vmul.f32 %v296, %v2529
        %v2540 = vmax.f32 %v2532, %v2533
        %2541 = vmax.xlane.f32.xlu0 %v2540
        %v2542 = vpop.xlane.xlu0 %2541
        %v2543 = vmax.f32 %v2534, %v2535
        %2544 = vmax.xlane.f32.xlu0 %v2543
        %v2545 = vpop.xlane.xlu0 %2544
        %v2546 = vmax.f32 %v2536, %v2537
        %2547 = vmax.xlane.f32.xlu0 %v2546
        %v2548 = vpop.xlane.xlu0 %2547
        %v2549 = vmax.f32 %v2538, %v2539
        %2550 = vmax.xlane.f32.xlu0 %v2549
        %v2551 = vpop.xlane.xlu0 %2550
        %s2552 = scalar_lea.vmem %s4, 128
        %v2553 = vld [vmem:[%s2552] sm:$0xff]
        %v2554 = vld [vmem:[%s2552 + $0x8] sm:$0xff]
        %v2555 = vld [vmem:[%s2552 + $0x10] sm:$0xff]
        %v2556 = vld [vmem:[%s2552 + $0x18] sm:$0xff]
        %v2557 = vmul.f32 %v2553, %v2542
        %v2558 = vmul.f32 %v2554, %v2545
        %v2559 = vmul.f32 %v2555, %v2548
        %v2560 = vmul.f32 %v2556, %v2551
        %v2561 = vsel %vm515, %v2557, 0.0
        %v2562 = vsel %vm515, %v2558, 0.0
        %v2563 = vadd.f32 %v2561, %v2562
        %v2564 = vsel %vm515, %v2559, 0.0
        %v2565 = vadd.f32 %v2563, %v2564
        %v2566 = vsel %vm515, %v2560, 0.0
        %v2567 = vadd.f32 %v2565, %v2566
        %2568 = vadd.xlane.f32.xlu0 %v2567
        %v2569 = vpop.xlane.xlu0 %2568
        %v2570 = vrot.slane %v2569, 4
        %v2571 = vadd.f32 %v2569, %v2570
        %v2572 = vrot.slane %v2571, 2
        %v2573 = vadd.f32 %v2571, %v2572
        %v2574 = vrot.slane %v2573, 1
        %v2575 = vadd.f32 %v2573, %v2574
        %s2576 = vtos %v2575
        %v2577 = vstv %s2576
        %v2578 = vmax.f32 %v2577, 0.0
        %s2579 = scalar_lea.vmem %s4, 160
        %v2580 = vld [vmem:[%s2579] sm:$0xff]
        %v2581 = vld [vmem:[%s2579 + $0x8] sm:$0xff]
        %v2582 = vld [vmem:[%s2579 + $0x10] sm:$0xff]
        %v2583 = vld [vmem:[%s2579 + $0x18] sm:$0xff]
        %v2584 = vmul.f32 %v2580, %v2542
        %v2585 = vmul.f32 %v2581, %v2545
        %v2586 = vmul.f32 %v2582, %v2548
        %v2587 = vmul.f32 %v2583, %v2551
        %v2588 = vsel %vm515, %v2584, 0.0
        %v2589 = vsel %vm515, %v2585, 0.0
        %v2590 = vadd.f32 %v2588, %v2589
        %v2591 = vsel %vm515, %v2586, 0.0
        %v2592 = vadd.f32 %v2590, %v2591
        %v2593 = vsel %vm515, %v2587, 0.0
        %v2594 = vadd.f32 %v2592, %v2593
        %2595 = vadd.xlane.f32.xlu0 %v2594
        %v2596 = vpop.xlane.xlu0 %2595
        %v2597 = vrot.slane %v2596, 4
        %v2598 = vadd.f32 %v2596, %v2597
        %v2599 = vrot.slane %v2598, 2
        %v2600 = vadd.f32 %v2598, %v2599
        %v2601 = vrot.slane %v2600, 1
        %v2602 = vadd.f32 %v2600, %v2601
        %s2603 = vtos %v2602
        %v2604 = vstv %s2603
        %v2605 = vmax.f32 %v2604, 0.0
        %s2606 = scalar_lea.vmem %s5, 128
        %v2607 = vld [vmem:[%s2606] sm:$0xff]
        %v2608 = vld [vmem:[%s2606 + $0x8] sm:$0xff]
        %v2609 = vld [vmem:[%s2606 + $0x10] sm:$0xff]
        %v2610 = vld [vmem:[%s2606 + $0x18] sm:$0xff]
        %v2611 = vmul.f32 %v2607, %v2578
        %v2612 = vmul.f32 %v2608, %v2578
        %v2613 = vmul.f32 %v2609, %v2578
        %v2614 = vmul.f32 %v2610, %v2578
        %s2615 = scalar_lea.vmem %s5, 160
        %v2616 = vld [vmem:[%s2615] sm:$0xff]
        %v2617 = vld [vmem:[%s2615 + $0x8] sm:$0xff]
        %v2618 = vld [vmem:[%s2615 + $0x10] sm:$0xff]
        %v2619 = vld [vmem:[%s2615 + $0x18] sm:$0xff]
        %v2620 = vmul.f32 %v2616, %v2605
        %v2621 = vmul.f32 %v2617, %v2605
        %v2622 = vmul.f32 %v2618, %v2605
        %v2623 = vmul.f32 %v2619, %v2605
        %v2624 = vadd.f32 %v2611, %v2620
        %v2625 = vadd.f32 %v2612, %v2621
        %v2626 = vadd.f32 %v2613, %v2622
        %v2627 = vadd.f32 %v2614, %v2623
        %v2628 = vsub.f32 0.0, %v2624
        %v2629 = vsub.f32 0.0, %v2625
        %v2630 = vsub.f32 0.0, %v2626
        %v2631 = vsub.f32 0.0, %v2627
        %v2632 = vmul.f32 %v2628, 1.442695
        %v2633 = vpow.pop %v2632
        %v2634 = vmul.f32 %v2629, 1.442695
        %v2635 = vpow.pop %v2634
        %v2636 = vmul.f32 %v2630, 1.442695
        %v2637 = vpow.pop %v2636
        %v2638 = vmul.f32 %v2631, 1.442695
        %v2639 = vpow.pop %v2638
        %v2640 = vadd.f32 %v2633, 1.0
        %v2641 = vadd.f32 %v2635, 1.0
        %v2642 = vadd.f32 %v2637, 1.0
        %v2643 = vadd.f32 %v2639, 1.0
        %v2644 = vrcp.pop %v2640
        %v2645 = vrcp.pop %v2641
        %v2646 = vrcp.pop %v2642
        %v2647 = vrcp.pop %v2643
        %v2648 = vld [vmem:[%s273] sm:$0xff]
        %v2649 = vld [vmem:[%s273 + $0x8] sm:$0xff]
        %v2650 = vld [vmem:[%s273 + $0x10] sm:$0xff]
        %v2651 = vld [vmem:[%s273 + $0x18] sm:$0xff]
        %v2652 = vld [vmem:[%s273 + $0x20] sm:$0xff]
        %v2653 = vld [vmem:[%s273 + $0x28] sm:$0xff]
        %v2654 = vld [vmem:[%s273 + $0x30] sm:$0xff]
        %v2655 = vld [vmem:[%s273 + $0x38] sm:$0xff]
        %2657 = vset.pattern.permute.xlu0 0
        %2658 = vperm.xlu0 %2657, %v2644
        %v2659 = vpop.permute.xlu0 %2658
        %2662 = vset.pattern.permute.xlu0 0
        %2663 = vperm.xlu0 %2662, %v2645
        %v2664 = vpop.permute.xlu0 %2663
        %2667 = vset.pattern.permute.xlu0 0
        %2668 = vperm.xlu0 %2667, %v2646
        %v2669 = vpop.permute.xlu0 %2668
        %2672 = vset.pattern.permute.xlu0 0
        %2673 = vperm.xlu0 %2672, %v2647
        %v2674 = vpop.permute.xlu0 %2673
        %v2676 = vmul.f32 %v2532, %v2659
        %v2677 = vmul.f32 %v2533, %v2659
        %v2678 = vmul.f32 %v2534, %v2664
        %v2679 = vmul.f32 %v2535, %v2664
        %v2680 = vmul.f32 %v2536, %v2669
        %v2681 = vmul.f32 %v2537, %v2669
        %v2682 = vmul.f32 %v2538, %v2674
        %v2683 = vmul.f32 %v2539, %v2674
        %v2684 = vadd.f32 %v2648, %v2676
        %v2685 = vadd.f32 %v2649, %v2677
        %v2686 = vadd.f32 %v2650, %v2678
        %v2687 = vadd.f32 %v2651, %v2679
        %v2688 = vadd.f32 %v2652, %v2680
        %v2689 = vadd.f32 %v2653, %v2681
        %v2690 = vadd.f32 %v2654, %v2682
        %v2691 = vadd.f32 %v2655, %v2683
        %2692 = vst [vmem:[%s273] sm:$0xff] %v2684
        %2693 = vst [vmem:[%s273 + $0x8] sm:$0xff] %v2685
        %2694 = vst [vmem:[%s273 + $0x10] sm:$0xff] %v2686
        %2695 = vst [vmem:[%s273 + $0x18] sm:$0xff] %v2687
        %2696 = vst [vmem:[%s273 + $0x20] sm:$0xff] %v2688
        %2697 = vst [vmem:[%s273 + $0x28] sm:$0xff] %v2689
        %2698 = vst [vmem:[%s273 + $0x30] sm:$0xff] %v2690
        %2699 = vst [vmem:[%s273 + $0x38] sm:$0xff] %v2691
        %s2700 = sand.u32 %s165, 1
        %s2701 = scalar_lea.sflag [#allocation4], %s2700
        %s2702 = sand.u32 %s165, 1
        %s2703 = smul.addr %s2702, 64
        %s2704 = scalar_lea.vmem [#allocation6], %s2703
        // Predicated region
        $region49: #{tpu_custom_call.1} parent=43 // pred_check
          %p2705 = pneg %p175
        $region50: #{tpu_custom_call.1} parent=43 // pred_check_branch
          %2707 = sbr.rel (%p2705) target = $region52
        $region51: #{tpu_custom_call.1} parent=43 // pred_region
          %s2709 = ssub.s32 1024, 1024
          %2710 = vsyncadd %s2701, %s2709
          %s2711 = smul.addr %s21, 8
          %s2712 = smul.addr %s2711, 128
          %s2713 = scalar_lea.hbm %s6, %s2712
          %s2714 = sshll.u32 %s2704, 4
          %s2715 = int_to_ptr.vmem [resolvable:$true] %s2714
          %2720 = dma.vmem_to_hbm [thread:$0]  %s2715, 1024, %s2713, %s2701, 256, 256, 16
        $region52: #{tpu_custom_call.1} parent=43 // pred_fallthru
          _
      $region44: #{tpu_custom_call.1} parent=5 // pred_fallthru
        _
      %p2721 = scmp.le.s32.totalorder 2, %s16
      // Predicated region
      $region53: #{tpu_custom_call.1} parent=5 // pred_check
        %p2722 = pneg %p2721
      $region54: #{tpu_custom_call.1} parent=5 // pred_check_branch
        %2724 = sbr.rel (%p2722) target = $region56
      $region55: #{tpu_custom_call.1} parent=5 // pred_region
        %s2725 = ssub.s32 %s16, 2
        // Predicated region
        $region57: #{tpu_custom_call.1} parent=55 // pred_check
          %p2726 = pneg %p181
        $region58: #{tpu_custom_call.1} parent=55 // pred_check_branch
          %2728 = sbr.rel (%p2726) target = $region60
        $region59: #{tpu_custom_call.1} parent=55 // pred_region
          %s2729 = sand.u32 %s166, 1
          %s2730 = scalar_lea.sflag [#allocation4], %s2729
          %s2731 = sand.u32 %s166, 1
          %s2732 = smul.addr %s2731, 64
          %s2733 = scalar_lea.vmem [#allocation6], %s2732
          %2734 = dma.done %s2730, 1024
        $region60: #{tpu_custom_call.1} parent=55 // pred_fallthru
          _
      $region56: #{tpu_custom_call.1} parent=5 // pred_fallthru
        _
    $region6: #{tpu_custom_call.1} parent=1 // loop_footer
      %s20 = sadd.s32 1, %s16
    $region7: #{tpu_custom_call.1} parent=1 // loop_footer_branch
      %15 = sbr.rel target = $region3
    $region8: #{tpu_custom_call.1} parent=1 // loop_exit
      _
    %2735 = vsyncpa [#allocation4], 1
    %s2736 = scalar_lea.sflag [#allocation4], 1
    %2737 = vsyncpa %s2736, 1
    %2738 = vsyncpa [#allocation5], 1
    %s2739 = scalar_lea.sflag [#allocation5], 1
    %2740 = vsyncpa %s2739, 1

</llo_original>
